<compile_context>
chip_gen: v7x
topology: tpu7x:2x2x1
jax: 0.10.0
libtpu: 0.0.40
codegen_flags: <defaults>
</compile_context>

<pallas_src>
import functools

import jax
import jax.numpy as jnp
from jax.experimental import pallas as pl
from jax.experimental.pallas import tpu as pltpu


def _round_up(x, m):
  return (x + m - 1) // m * m


def _ssh_context_kernel(
    x_ref, w1_ref, b1_ref, w2_ref, b2_ref, w21_ref, b21_ref,
    w22_ref, b22_ref, w221_ref, b221_ref,
    o_ref,
    xbuf_ref, x2buf_ref, x22buf_ref, slab_s_ref, slab_b_ref,
    *, H, W, images, gap, cin, xc, xc2, mxu_dtype):
  """Fused SSHContext forward for one block of `images` batch elements.

  Activations are (rows, B*HW) slabs (lane dim = B*HW, batch folded into
  lanes).  Source buffers have `gap` guard lanes on each side so a 3x3 tap is
  a static lane-offset slice; out-of-image reads (top/bottom/left/right halos
  and image-to-image bleed) are zeroed with hoisted (1, B*HW) masks.
  """
  HW = H * W
  L = images * HW

  # ---- hoisted per-lane row/col indices + the 8 halo masks (review item 1) -
  lane = jax.lax.broadcasted_iota(jnp.int32, (1, L), 1)
  if HW & (HW - 1) == 0:
    pos = jnp.bitwise_and(lane, HW - 1)            # position within its image
  else:
    pos = lane % HW
  if W & (W - 1) == 0:
    col = jnp.bitwise_and(pos, W - 1)
    row = jnp.right_shift(pos, W.bit_length() - 1)
  else:
    col = pos % W
    row = pos // W

  base_masks = {
      d: dict(top=row >= d, bot=row < (H - d),
              left=col >= d, right=col < (W - d))
      for d in (1, 2)
  }

  def _tap_mask(d, ky, kx):
    bm = base_masks[d]
    m = None
    if ky == 0:
      m = bm["top"]
    elif ky == 2:
      m = bm["bot"]
    if kx == 0:
      m = bm["left"] if m is None else jnp.logical_and(m, bm["left"])
    elif kx == 2:
      m = bm["right"] if m is None else jnp.logical_and(m, bm["right"])
    return m

  tap_masks = {d: {(ky, kx): _tap_mask(d, ky, kx)
                   for ky in range(3) for kx in range(3)}
               for d in (1, 2)}

  def stage(dst_ref, val, c_real):
    """Write activation `val` (c_real, L) into the buffer interior; zero the
    sublane-alignment rows (c_real..row_stride) so taps stage exact zeros."""
    rs = dst_ref.shape[0]
    dst_ref[0:c_real, gap:gap + L] = val
    if rs > c_real:
      dst_ref[c_real:rs, gap:gap + L] = jnp.zeros((rs - c_real, L), jnp.float32)

  def conv3x3_relu(src_ref, d, slab_ref, w_ref, b_ref):
    """3x3 conv (stride 1, dilation d, 'same') + bias + ReLU -> (Cout, L)."""
    rs = src_ref.shape[0]                     # 8-aligned row stride per tap
    for ky in range(3):
      for kx in range(3):
        start = gap + ((ky - 1) * W + (kx - 1)) * d
        win = src_ref[:, start:start + L]
        m = tap_masks[d][(ky, kx)]
        if m is not None:                     # halo lanes -> 0 (also kills any
          win = jnp.where(m, win, 0.0)        # garbage read from the gaps)
        r0 = (ky * 3 + kx) * rs
        slab_ref[r0:r0 + rs, :] = win.astype(mxu_dtype)   # cast fused w/ mask
    acc = jax.lax.dot_general(
        w_ref[...], slab_ref[...],
        dimension_numbers=(((1,), (0,)), ((), ())),
        preferred_element_type=jnp.float32)
    return jnp.maximum(acc + b_ref[...], 0.0)             # f32 epilogue

  # Stage the input block (the only HBM->compute staging copy).
  stage(xbuf_ref, x_ref[...], cin)

  # conv1 (dil 1): x -> x1 -> output channels [0, xc).
  x1 = conv3x3_relu(xbuf_ref, 1, slab_s_ref, w1_ref, b1_ref)
  o_ref[0:xc, :] = x1.astype(o_ref.dtype)

  # conv2 (dil 2): x -> x2 (kept resident in VMEM).
  x2 = conv3x3_relu(xbuf_ref, 2, slab_s_ref, w2_ref, b2_ref)
  stage(x2buf_ref, x2, xc2)

  # conv2_1 (dil 1): x2 -> output channels [xc, xc + xc2).
  x21 = conv3x3_relu(x2buf_ref, 1, slab_b_ref, w21_ref, b21_ref)
  o_ref[xc:xc + xc2, :] = x21.astype(o_ref.dtype)

  # conv2_2 (dil 2): x2 -> x2_2 (kept resident in VMEM).
  x22 = conv3x3_relu(x2buf_ref, 2, slab_b_ref, w22_ref, b22_ref)
  stage(x22buf_ref, x22, xc2)

  # conv2_2_1 (dil 1): x2_2 -> output channels [xc + xc2, xc + 2*xc2).
  x221 = conv3x3_relu(x22buf_ref, 1, slab_b_ref, w221_ref, b221_ref)
  o_ref[xc + xc2:xc + 2 * xc2, :] = x221.astype(o_ref.dtype)


def _prep_conv(w_oihw, b, mxu_dtype, row_stride):
  """OIHW weights -> (Cout, 9*row_stride) matmul weights (zero-padded columns
  for the 8-aligned tap rows); bias -> (Cout, 1) f32."""
  cout, cin_, kh, kw = w_oihw.shape
  assert (kh, kw) == (3, 3)
  w_t = jnp.transpose(w_oihw, (0, 2, 3, 1)).reshape(cout, 9, cin_)
  w_t = jnp.pad(w_t, ((0, 0), (0, 0), (0, row_stride - cin_)))
  return (w_t.reshape(cout, 9 * row_stride).astype(mxu_dtype),
          b.reshape(cout, 1).astype(jnp.float32))


def ssh_context_forward(x_nchw, params, *, mxu_dtype=jnp.bfloat16,
                        images_per_step=None):
  """SSHContext.forward; x is NCHW (PyTorch layout), output is NCHW f32."""
  N, C, H, W = x_nchw.shape
  HW = H * W
  xc = params["conv1"][0].shape[0]
  xc2 = params["conv2"][0].shape[0]
  n_out = xc + 2 * xc2

  if images_per_step is None:
    # Default: keep >= 2 grid steps when N > 1 so v7x megacore can shard the
    # ("parallel") batch axis over its two TensorCores.  Single-TC chips
    # (v5e/v6e) can pass images_per_step=N for maximal per-step amortization.
    images_per_step = 1
    for cand in range(max(1, N // 2), 0, -1):
      if N % cand == 0:
        images_per_step = cand
        break
  assert N % images_per_step == 0, (N, images_per_step)
  grid_n = N // images_per_step
  L = images_per_step * HW
  gap = _round_up(2 * W + 2, 128)         # guard lanes; covers dilation <= 2
  buf_cols = gap + L + gap

  rs_small = _round_up(C, 8)              # 8-aligned tap rows (review item 3)
  rs_big = _round_up(xc2, 8)

  w1, b1 = _prep_conv(*params["conv1"], mxu_dtype, rs_small)
  w2, b2 = _prep_conv(*params["conv2"], mxu_dtype, rs_small)
  w21, b21 = _prep_conv(*params["conv2_1"], mxu_dtype, rs_big)
  w22, b22 = _prep_conv(*params["conv2_2"], mxu_dtype, rs_big)
  w221, b221 = _prep_conv(*params["conv2_2_1"], mxu_dtype, rs_big)

  # Channels-first slab with batch folded into the lane dim: (C, N*HW).
  x_slab = jnp.transpose(x_nchw, (1, 0, 2, 3)).reshape(C, N * HW)

  kernel = functools.partial(
      _ssh_context_kernel, H=H, W=W, images=images_per_step, gap=gap,
      cin=C, xc=xc, xc2=xc2, mxu_dtype=mxu_dtype)

  def full(arr):  # whole-array block, same for every grid step
    return pl.BlockSpec(arr.shape, lambda n: (0,) * arr.ndim)

  # VMEM budget derived from actual buffer sizes (review item 6).
  mxu_bytes = jnp.dtype(mxu_dtype).itemsize

  def tile_bytes(rows, cols, itemsize):
    sub = 32 // itemsize
    return _round_up(rows, sub) * _round_up(cols, 128) * itemsize

  scratch_bytes = (tile_bytes(rs_small, buf_cols, 4)
                   + 2 * tile_bytes(rs_big, buf_cols, 4)
                   + tile_bytes(9 * rs_small, L, mxu_bytes)
                   + tile_bytes(9 * rs_big, L, mxu_bytes))
  io_bytes = 2 * (tile_bytes(C, L, 4) + tile_bytes(n_out, L, 4))
  w_bytes = 2 * sum(tile_bytes(w.shape[0], w.shape[1], mxu_bytes)
                    + tile_bytes(b.shape[0], b.shape[1], 4)
                    for (w, b) in ((w1, b1), (w2, b2), (w21, b21),
                                   (w22, b22), (w221, b221)))
  vmem_limit = scratch_bytes + io_bytes + w_bytes + (4 << 20)   # + headroom
  vmem_limit = int(max(8 << 20, min(vmem_limit, 100 << 20)))

  out_slab = pl.pallas_call(
      kernel,
      out_shape=jax.ShapeDtypeStruct((n_out, N * HW), jnp.float32),
      grid_spec=pltpu.PrefetchScalarGridSpec(
          num_scalar_prefetch=0,
          grid=(grid_n,),
          in_specs=[
              pl.BlockSpec((C, L), lambda n: (0, n)),
              full(w1), full(b1), full(w2), full(b2),
              full(w21), full(b21), full(w22), full(b22),
              full(w221), full(b221),
          ],
          out_specs=pl.BlockSpec((n_out, L), lambda n: (0, n)),
          scratch_shapes=[
              pltpu.VMEM((rs_small, buf_cols), jnp.float32),   # x  (+guards)
              pltpu.VMEM((rs_big, buf_cols), jnp.float32),     # x2
              pltpu.VMEM((rs_big, buf_cols), jnp.float32),     # x2_2
              pltpu.VMEM((9 * rs_small, L), mxu_dtype),        # im2col (cin=C)
              pltpu.VMEM((9 * rs_big, L), mxu_dtype),          # im2col (cin=xc2)
          ],
      ),
      compiler_params=pltpu.CompilerParams(
          dimension_semantics=("parallel",),
          vmem_limit_bytes=vmem_limit,
      ),
  )(x_slab, w1, b1, w2, b2, w21, b21, w22, b22, w221, b221)

  # (n_out, N*HW) -> (N, n_out, H, W): wrapper-side layout plumbing only.
  return jnp.transpose(out_slab.reshape(n_out, N, H, W), (1, 0, 2, 3))


def init_ssh_context_params(key, channels, xchannels):
  """Deterministic init matching the PyTorch module's shapes (OIHW weights)."""
  xc2 = xchannels // 2

  def conv_params(k, cin, cout):
    kw, kb = jax.random.split(k)
    fan_in = cin * 9
    bound = 1.0 / jnp.sqrt(fan_in)
    w = jax.random.uniform(kw, (cout, cin, 3, 3), jnp.float32, -bound, bound)
    b = jax.random.uniform(kb, (cout,), jnp.float32, -bound, bound)
    return w, b

  keys = jax.random.split(key, 5)
  return {
      "conv1":     conv_params(keys[0], channels, xchannels),
      "conv2":     conv_params(keys[1], channels, xc2),
      "conv2_1":   conv_params(keys[2], xc2, xc2),
      "conv2_2":   conv_params(keys[3], xc2, xc2),
      "conv2_2_1": conv_params(keys[4], xc2, xc2),
  }


def _reference_forward(x_nchw, params):
  """Plain-JAX (XLA conv) reference, NCHW, for correctness checking."""

  def conv_relu(x, w, b, d):
    y = jax.lax.conv_general_dilated(
        x, w, window_strides=(1, 1), padding=((d, d), (d, d)),
        rhs_dilation=(d, d),
        dimension_numbers=("NCHW", "OIHW", "NCHW"),
        precision=jax.lax.Precision.HIGHEST)
    return jnp.maximum(y + b[None, :, None, None], 0.0)

  w1, b1 = params["conv1"]
  w2, b2 = params["conv2"]
  w21, b21 = params["conv2_1"]
  w22, b22 = params["conv2_2"]
  w221, b221 = params["conv2_2_1"]
  x1 = conv_relu(x_nchw, w1, b1, 1)
  x2 = conv_relu(x_nchw, w2, b2, 2)
  x2_1 = conv_relu(x2, w21, b21, 1)
  x2_2 = conv_relu(x2, w22, b22, 2)
  x2_2 = conv_relu(x2_2, w221, b221, 1)
  return jnp.concatenate([x1, x2_1, x2_2], axis=1)


if __name__ == "__main__":
  # Small shapes consistent with the module: batch=2, channels=4, 16x16
  # spatial, xchannels=32 (output has xchannels*2 = 64 channels).
  N, C, H, W = 2, 4, 16, 16
  XC = 32

  key = jax.random.PRNGKey(0)
  k_x, k_p = jax.random.split(key)

  x = jax.random.normal(k_x, (N, C, H, W), jnp.float32)   # NCHW, like PyTorch
  params = init_ssh_context_params(k_p, C, XC)

  ref = jax.block_until_ready(_reference_forward(x, params))

  # f32 MXU operands, whole batch in one matmul (max per-step amortization).
  fwd_f32 = jax.jit(functools.partial(
      ssh_context_forward, mxu_dtype=jnp.float32, images_per_step=2))
  out_f32 = jax.block_until_ready(fwd_f32(x, params))
  assert out_f32.shape == (N, 2 * XC, H, W), out_f32.shape
  err_f32 = float(jnp.max(jnp.abs(out_f32 - ref)))
  assert jnp.allclose(out_f32, ref, atol=1e-3, rtol=1e-3), err_f32

  # bf16 MXU operands (default; also the right default for v5e), two grid
  # steps so v7x megacore has work on both TensorCores.
  fwd_bf16_g2 = jax.jit(functools.partial(ssh_context_forward,
                                          images_per_step=1))
  out_b1 = jax.block_until_ready(fwd_bf16_g2(x, params))
  err_b1 = float(jnp.max(jnp.abs(out_b1 - ref)))
  assert jnp.allclose(out_b1, ref, atol=1.5e-1, rtol=1.5e-1), err_b1

  # bf16, batch fully folded into the matmul lane dimension.
  fwd_bf16_g1 = jax.jit(functools.partial(ssh_context_forward,
                                          images_per_step=2))
  out_b2 = jax.block_until_ready(fwd_bf16_g1(x, params))
  err_b2 = float(jnp.max(jnp.abs(out_b2 - ref)))
  assert jnp.allclose(out_b2, ref, atol=1.5e-1, rtol=1.5e-1), err_b2

  print("KERNEL_OK")
</pallas_src>

<mosaic_0001>
module attributes {stable_mosaic.version = 11 : i64} {
  func.func @_ssh_context_kernel(%arg0: i32, %arg1: memref<4x512xf32, #tpu.memory_space<vmem>>, %arg2: memref<32x72xf32, #tpu.memory_space<vmem>>, %arg3: memref<32x1xf32, #tpu.memory_space<vmem>>, %arg4: memref<16x72xf32, #tpu.memory_space<vmem>>, %arg5: memref<16x1xf32, #tpu.memory_space<vmem>>, %arg6: memref<16x144xf32, #tpu.memory_space<vmem>>, %arg7: memref<16x1xf32, #tpu.memory_space<vmem>>, %arg8: memref<16x144xf32, #tpu.memory_space<vmem>>, %arg9: memref<16x1xf32, #tpu.memory_space<vmem>>, %arg10: memref<16x144xf32, #tpu.memory_space<vmem>>, %arg11: memref<16x1xf32, #tpu.memory_space<vmem>>, %arg12: memref<64x512xf32, #tpu.memory_space<vmem>>, %arg13: memref<8x768xf32, #tpu.memory_space<vmem>>, %arg14: memref<16x768xf32, #tpu.memory_space<vmem>>, %arg15: memref<16x768xf32, #tpu.memory_space<vmem>>, %arg16: memref<72x512xf32, #tpu.memory_space<vmem>>, %arg17: memref<144x512xf32, #tpu.memory_space<vmem>>) attributes {dimension_semantics = [#tpu.dimension_semantics<parallel>], iteration_bounds = array<i64: 1>, scalar_prefetch = 0 : i64, scratch_operands = 5 : i64, tpu.core_type = #tpu.core_type<tc>, window_params = [{transform_indices = @transform_0, window_bounds = array<i64: 4, 512>}, {pipeline_mode = #tpu.pipeline_mode<synchronous>, transform_indices = @transform_1, window_bounds = array<i64: 32, 72>}, {pipeline_mode = #tpu.pipeline_mode<synchronous>, transform_indices = @transform_2, window_bounds = array<i64: 32, 1>}, {pipeline_mode = #tpu.pipeline_mode<synchronous>, transform_indices = @transform_3, window_bounds = array<i64: 16, 72>}, {pipeline_mode = #tpu.pipeline_mode<synchronous>, transform_indices = @transform_4, window_bounds = array<i64: 16, 1>}, {pipeline_mode = #tpu.pipeline_mode<synchronous>, transform_indices = @transform_5, window_bounds = array<i64: 16, 144>}, {pipeline_mode = #tpu.pipeline_mode<synchronous>, transform_indices = @transform_6, window_bounds = array<i64: 16, 1>}, {pipeline_mode = #tpu.pipeline_mode<synchronous>, transform_indices = @transform_7, window_bounds = array<i64: 16, 144>}, {pipeline_mode = #tpu.pipeline_mode<synchronous>, transform_indices = @transform_8, window_bounds = array<i64: 16, 1>}, {pipeline_mode = #tpu.pipeline_mode<synchronous>, transform_indices = @transform_9, window_bounds = array<i64: 16, 144>}, {pipeline_mode = #tpu.pipeline_mode<synchronous>, transform_indices = @transform_10, window_bounds = array<i64: 16, 1>}, {transform_indices = @transform_11, window_bounds = array<i64: 64, 512>}]} {
    %0 = tpu.iota {dimensions = array<i32: 1>} : vector<1x512xi32>
    %c255_i32 = arith.constant 255 : i32
    %1 = vector.broadcast %c255_i32 : i32 to vector<1x512xi32>
    %2 = arith.andi %0, %1 : vector<1x512xi32>
    %c15_i32 = arith.constant 15 : i32
    %3 = vector.broadcast %c15_i32 : i32 to vector<1x512xi32>
    %4 = arith.andi %2, %3 : vector<1x512xi32>
    %c4_i32 = arith.constant 4 : i32
    %5 = vector.broadcast %c4_i32 : i32 to vector<1x512xi32>
    %6 = arith.shrsi %2, %5 : vector<1x512xi32>
    %c1_i32 = arith.constant 1 : i32
    %7 = vector.broadcast %c1_i32 : i32 to vector<1x512xi32>
    %8 = arith.cmpi sge, %6, %7 : vector<1x512xi32>
    %c15_i32_0 = arith.constant 15 : i32
    %9 = vector.broadcast %c15_i32_0 : i32 to vector<1x512xi32>
    %10 = arith.cmpi slt, %6, %9 : vector<1x512xi32>
    %c1_i32_1 = arith.constant 1 : i32
    %11 = vector.broadcast %c1_i32_1 : i32 to vector<1x512xi32>
    %12 = arith.cmpi sge, %4, %11 : vector<1x512xi32>
    %c15_i32_2 = arith.constant 15 : i32
    %13 = vector.broadcast %c15_i32_2 : i32 to vector<1x512xi32>
    %14 = arith.cmpi slt, %4, %13 : vector<1x512xi32>
    %c2_i32 = arith.constant 2 : i32
    %15 = vector.broadcast %c2_i32 : i32 to vector<1x512xi32>
    %16 = arith.cmpi sge, %6, %15 : vector<1x512xi32>
    %c14_i32 = arith.constant 14 : i32
    %17 = vector.broadcast %c14_i32 : i32 to vector<1x512xi32>
    %18 = arith.cmpi slt, %6, %17 : vector<1x512xi32>
    %c2_i32_3 = arith.constant 2 : i32
    %19 = vector.broadcast %c2_i32_3 : i32 to vector<1x512xi32>
    %20 = arith.cmpi sge, %4, %19 : vector<1x512xi32>
    %c14_i32_4 = arith.constant 14 : i32
    %21 = vector.broadcast %c14_i32_4 : i32 to vector<1x512xi32>
    %22 = arith.cmpi slt, %4, %21 : vector<1x512xi32>
    %23 = arith.andi %8, %12 : vector<1x512xi1>
    %24 = arith.andi %8, %14 : vector<1x512xi1>
    %25 = arith.andi %10, %12 : vector<1x512xi1>
    %26 = arith.andi %10, %14 : vector<1x512xi1>
    %27 = arith.andi %16, %20 : vector<1x512xi1>
    %28 = arith.andi %16, %22 : vector<1x512xi1>
    %29 = arith.andi %18, %20 : vector<1x512xi1>
    %30 = arith.andi %18, %22 : vector<1x512xi1>
    %c0 = arith.constant 0 : index
    %c0_5 = arith.constant 0 : index
    %31 = vector.load %arg1[%c0, %c0_5] : memref<4x512xf32, #tpu.memory_space<vmem>>, vector<4x512xf32>
    %c0_6 = arith.constant 0 : index
    %c128 = arith.constant 128 : index
    %32 = vector.load %arg13[%c0_6, %c128] : memref<8x768xf32, #tpu.memory_space<vmem>>, vector<4x512xf32>
    tpu.vector_store %arg13[%c0_6, %c128], %31 {strides = array<i32>} : memref<8x768xf32, #tpu.memory_space<vmem>>, vector<4x512xf32>,
    %cst = arith.constant 0.000000e+00 : f32
    %33 = vector.broadcast %cst : f32 to vector<4x512xf32>
    %c4 = arith.constant 4 : index
    %c128_7 = arith.constant 128 : index
    %34 = vector.load %arg13[%c4, %c128_7] : memref<8x768xf32, #tpu.memory_space<vmem>>, vector<4x512xf32>
    tpu.vector_store %arg13[%c4, %c128_7], %33 {strides = array<i32>} : memref<8x768xf32, #tpu.memory_space<vmem>>, vector<4x512xf32>,
    %c0_8 = arith.constant 0 : index
    %c111 = arith.constant 111 : index
    %35 = vector.load %arg13[%c0_8, %c111] : memref<8x768xf32, #tpu.memory_space<vmem>>, vector<8x512xf32>
    %cst_9 = arith.constant 0.000000e+00 : f32
    %36 = vector.shape_cast %23 : vector<1x512xi1> to vector<1x512xi1>
    %37 = vector.broadcast %36 : vector<1x512xi1> to vector<8x512xi1>
    %38 = vector.broadcast %cst_9 : f32 to vector<8x512xf32>
    %39 = arith.select %37, %35, %38 : vector<8x512xi1>, vector<8x512xf32>
    %c0_10 = arith.constant 0 : index
    %c0_11 = arith.constant 0 : index
    %40 = vector.load %arg16[%c0_10, %c0_11] : memref<72x512xf32, #tpu.memory_space<vmem>>, vector<8x512xf32>
    tpu.vector_store %arg16[%c0_10, %c0_11], %39 {strides = array<i32>} : memref<72x512xf32, #tpu.memory_space<vmem>>, vector<8x512xf32>,
    %c0_12 = arith.constant 0 : index
    %c112 = arith.constant 112 : index
    %41 = vector.load %arg13[%c0_12, %c112] : memref<8x768xf32, #tpu.memory_space<vmem>>, vector<8x512xf32>
    %cst_13 = arith.constant 0.000000e+00 : f32
    %42 = vector.shape_cast %8 : vector<1x512xi1> to vector<1x512xi1>
    %43 = vector.broadcast %42 : vector<1x512xi1> to vector<8x512xi1>
    %44 = vector.broadcast %cst_13 : f32 to vector<8x512xf32>
    %45 = arith.select %43, %41, %44 : vector<8x512xi1>, vector<8x512xf32>
    %c8 = arith.constant 8 : index
    %c0_14 = arith.constant 0 : index
    %46 = vector.load %arg16[%c8, %c0_14] : memref<72x512xf32, #tpu.memory_space<vmem>>, vector<8x512xf32>
    tpu.vector_store %arg16[%c8, %c0_14], %45 {strides = array<i32>} : memref<72x512xf32, #tpu.memory_space<vmem>>, vector<8x512xf32>,
    %c0_15 = arith.constant 0 : index
    %c113 = arith.constant 113 : index
    %47 = vector.load %arg13[%c0_15, %c113] : memref<8x768xf32, #tpu.memory_space<vmem>>, vector<8x512xf32>
    %cst_16 = arith.constant 0.000000e+00 : f32
    %48 = vector.shape_cast %24 : vector<1x512xi1> to vector<1x512xi1>
    %49 = vector.broadcast %48 : vector<1x512xi1> to vector<8x512xi1>
    %50 = vector.broadcast %cst_16 : f32 to vector<8x512xf32>
    %51 = arith.select %49, %47, %50 : vector<8x512xi1>, vector<8x512xf32>
    %c16 = arith.constant 16 : index
    %c0_17 = arith.constant 0 : index
    %52 = vector.load %arg16[%c16, %c0_17] : memref<72x512xf32, #tpu.memory_space<vmem>>, vector<8x512xf32>
    tpu.vector_store %arg16[%c16, %c0_17], %51 {strides = array<i32>} : memref<72x512xf32, #tpu.memory_space<vmem>>, vector<8x512xf32>,
    %c0_18 = arith.constant 0 : index
    %c127 = arith.constant 127 : index
    %53 = vector.load %arg13[%c0_18, %c127] : memref<8x768xf32, #tpu.memory_space<vmem>>, vector<8x512xf32>
    %cst_19 = arith.constant 0.000000e+00 : f32
    %54 = vector.shape_cast %12 : vector<1x512xi1> to vector<1x512xi1>
    %55 = vector.broadcast %54 : vector<1x512xi1> to vector<8x512xi1>
    %56 = vector.broadcast %cst_19 : f32 to vector<8x512xf32>
    %57 = arith.select %55, %53, %56 : vector<8x512xi1>, vector<8x512xf32>
    %c24 = arith.constant 24 : index
    %c0_20 = arith.constant 0 : index
    %58 = vector.load %arg16[%c24, %c0_20] : memref<72x512xf32, #tpu.memory_space<vmem>>, vector<8x512xf32>
    tpu.vector_store %arg16[%c24, %c0_20], %57 {strides = array<i32>} : memref<72x512xf32, #tpu.memory_space<vmem>>, vector<8x512xf32>,
    %c0_21 = arith.constant 0 : index
    %c128_22 = arith.constant 128 : index
    %59 = vector.load %arg13[%c0_21, %c128_22] : memref<8x768xf32, #tpu.memory_space<vmem>>, vector<8x512xf32>
    %c32 = arith.constant 32 : index
    %c0_23 = arith.constant 0 : index
    %60 = vector.load %arg16[%c32, %c0_23] : memref<72x512xf32, #tpu.memory_space<vmem>>, vector<8x512xf32>
    tpu.vector_store %arg16[%c32, %c0_23], %59 {strides = array<i32>} : memref<72x512xf32, #tpu.memory_space<vmem>>, vector<8x512xf32>,
    %c0_24 = arith.constant 0 : index
    %c129 = arith.constant 129 : index
    %61 = vector.load %arg13[%c0_24, %c129] : memref<8x768xf32, #tpu.memory_space<vmem>>, vector<8x512xf32>
    %cst_25 = arith.constant 0.000000e+00 : f32
    %62 = vector.shape_cast %14 : vector<1x512xi1> to vector<1x512xi1>
    %63 = vector.broadcast %62 : vector<1x512xi1> to vector<8x512xi1>
    %64 = vector.broadcast %cst_25 : f32 to vector<8x512xf32>
    %65 = arith.select %63, %61, %64 : vector<8x512xi1>, vector<8x512xf32>
    %c40 = arith.constant 40 : index
    %c0_26 = arith.constant 0 : index
    %66 = vector.load %arg16[%c40, %c0_26] : memref<72x512xf32, #tpu.memory_space<vmem>>, vector<8x512xf32>
    tpu.vector_store %arg16[%c40, %c0_26], %65 {strides = array<i32>} : memref<72x512xf32, #tpu.memory_space<vmem>>, vector<8x512xf32>,
    %c0_27 = arith.constant 0 : index
    %c143 = arith.constant 143 : index
    %67 = vector.load %arg13[%c0_27, %c143] : memref<8x768xf32, #tpu.memory_space<vmem>>, vector<8x512xf32>
    %cst_28 = arith.constant 0.000000e+00 : f32
    %68 = vector.shape_cast %25 : vector<1x512xi1> to vector<1x512xi1>
    %69 = vector.broadcast %68 : vector<1x512xi1> to vector<8x512xi1>
    %70 = vector.broadcast %cst_28 : f32 to vector<8x512xf32>
    %71 = arith.select %69, %67, %70 : vector<8x512xi1>, vector<8x512xf32>
    %c48 = arith.constant 48 : index
    %c0_29 = arith.constant 0 : index
    %72 = vector.load %arg16[%c48, %c0_29] : memref<72x512xf32, #tpu.memory_space<vmem>>, vector<8x512xf32>
    tpu.vector_store %arg16[%c48, %c0_29], %71 {strides = array<i32>} : memref<72x512xf32, #tpu.memory_space<vmem>>, vector<8x512xf32>,
    %c0_30 = arith.constant 0 : index
    %c144 = arith.constant 144 : index
    %73 = vector.load %arg13[%c0_30, %c144] : memref<8x768xf32, #tpu.memory_space<vmem>>, vector<8x512xf32>
    %cst_31 = arith.constant 0.000000e+00 : f32
    %74 = vector.shape_cast %10 : vector<1x512xi1> to vector<1x512xi1>
    %75 = vector.broadcast %74 : vector<1x512xi1> to vector<8x512xi1>
    %76 = vector.broadcast %cst_31 : f32 to vector<8x512xf32>
    %77 = arith.select %75, %73, %76 : vector<8x512xi1>, vector<8x512xf32>
    %c56 = arith.constant 56 : index
    %c0_32 = arith.constant 0 : index
    %78 = vector.load %arg16[%c56, %c0_32] : memref<72x512xf32, #tpu.memory_space<vmem>>, vector<8x512xf32>
    tpu.vector_store %arg16[%c56, %c0_32], %77 {strides = array<i32>} : memref<72x512xf32, #tpu.memory_space<vmem>>, vector<8x512xf32>,
    %c0_33 = arith.constant 0 : index
    %c145 = arith.constant 145 : index
    %79 = vector.load %arg13[%c0_33, %c145] : memref<8x768xf32, #tpu.memory_space<vmem>>, vector<8x512xf32>
    %cst_34 = arith.constant 0.000000e+00 : f32
    %80 = vector.shape_cast %26 : vector<1x512xi1> to vector<1x512xi1>
    %81 = vector.broadcast %80 : vector<1x512xi1> to vector<8x512xi1>
    %82 = vector.broadcast %cst_34 : f32 to vector<8x512xf32>
    %83 = arith.select %81, %79, %82 : vector<8x512xi1>, vector<8x512xf32>
    %c64 = arith.constant 64 : index
    %c0_35 = arith.constant 0 : index
    %84 = vector.load %arg16[%c64, %c0_35] : memref<72x512xf32, #tpu.memory_space<vmem>>, vector<8x512xf32>
    tpu.vector_store %arg16[%c64, %c0_35], %83 {strides = array<i32>} : memref<72x512xf32, #tpu.memory_space<vmem>>, vector<8x512xf32>,
    %c0_36 = arith.constant 0 : index
    %c0_37 = arith.constant 0 : index
    %85 = vector.load %arg2[%c0_36, %c0_37] : memref<32x72xf32, #tpu.memory_space<vmem>>, vector<32x72xf32>
    %c0_38 = arith.constant 0 : index
    %c0_39 = arith.constant 0 : index
    %86 = vector.load %arg16[%c0_38, %c0_39] : memref<72x512xf32, #tpu.memory_space<vmem>>, vector<72x512xf32>
    %cst_40 = arith.constant dense<0.000000e+00> : vector<32x512xf32>
    %87 = tpu.matmul %85, %86, %cst_40 {dimension_numbers = #tpu.dot_dimension_numbers<[1], [0], [0], [1], [0, 0, 1, 1], [], []>} : vector<32x72xf32>, vector<72x512xf32>, vector<32x512xf32> -> vector<32x512xf32>
    %c0_41 = arith.constant 0 : index
    %c0_42 = arith.constant 0 : index
    %88 = vector.load %arg3[%c0_41, %c0_42] : memref<32x1xf32, #tpu.memory_space<vmem>>, vector<32x1xf32>
    %89 = vector.broadcast %88 : vector<32x1xf32> to vector<32x512xf32>
    %90 = arith.addf %87, %89 : vector<32x512xf32>
    %cst_43 = arith.constant 0.000000e+00 : f32
    %91 = vector.broadcast %cst_43 : f32 to vector<32x512xf32>
    %92 = arith.maximumf %90, %91 : vector<32x512xf32>
    %c0_44 = arith.constant 0 : index
    %c0_45 = arith.constant 0 : index
    %93 = vector.load %arg12[%c0_44, %c0_45] : memref<64x512xf32, #tpu.memory_space<vmem>>, vector<32x512xf32>
    tpu.vector_store %arg12[%c0_44, %c0_45], %92 {strides = array<i32>} : memref<64x512xf32, #tpu.memory_space<vmem>>, vector<32x512xf32>,
    %c0_46 = arith.constant 0 : index
    %c94 = arith.constant 94 : index
    %94 = vector.load %arg13[%c0_46, %c94] : memref<8x768xf32, #tpu.memory_space<vmem>>, vector<8x512xf32>
    %cst_47 = arith.constant 0.000000e+00 : f32
    %95 = vector.shape_cast %27 : vector<1x512xi1> to vector<1x512xi1>
    %96 = vector.broadcast %95 : vector<1x512xi1> to vector<8x512xi1>
    %97 = vector.broadcast %cst_47 : f32 to vector<8x512xf32>
    %98 = arith.select %96, %94, %97 : vector<8x512xi1>, vector<8x512xf32>
    %c0_48 = arith.constant 0 : index
    %c0_49 = arith.constant 0 : index
    %99 = vector.load %arg16[%c0_48, %c0_49] : memref<72x512xf32, #tpu.memory_space<vmem>>, vector<8x512xf32>
    tpu.vector_store %arg16[%c0_48, %c0_49], %98 {strides = array<i32>} : memref<72x512xf32, #tpu.memory_space<vmem>>, vector<8x512xf32>,
    %c0_50 = arith.constant 0 : index
    %c96 = arith.constant 96 : index
    %100 = vector.load %arg13[%c0_50, %c96] : memref<8x768xf32, #tpu.memory_space<vmem>>, vector<8x512xf32>
    %cst_51 = arith.constant 0.000000e+00 : f32
    %101 = vector.shape_cast %16 : vector<1x512xi1> to vector<1x512xi1>
    %102 = vector.broadcast %101 : vector<1x512xi1> to vector<8x512xi1>
    %103 = vector.broadcast %cst_51 : f32 to vector<8x512xf32>
    %104 = arith.select %102, %100, %103 : vector<8x512xi1>, vector<8x512xf32>
    %c8_52 = arith.constant 8 : index
    %c0_53 = arith.constant 0 : index
    %105 = vector.load %arg16[%c8_52, %c0_53] : memref<72x512xf32, #tpu.memory_space<vmem>>, vector<8x512xf32>
    tpu.vector_store %arg16[%c8_52, %c0_53], %104 {strides = array<i32>} : memref<72x512xf32, #tpu.memory_space<vmem>>, vector<8x512xf32>,
    %c0_54 = arith.constant 0 : index
    %c98 = arith.constant 98 : index
    %106 = vector.load %arg13[%c0_54, %c98] : memref<8x768xf32, #tpu.memory_space<vmem>>, vector<8x512xf32>
    %cst_55 = arith.constant 0.000000e+00 : f32
    %107 = vector.shape_cast %28 : vector<1x512xi1> to vector<1x512xi1>
    %108 = vector.broadcast %107 : vector<1x512xi1> to vector<8x512xi1>
    %109 = vector.broadcast %cst_55 : f32 to vector<8x512xf32>
    %110 = arith.select %108, %106, %109 : vector<8x512xi1>, vector<8x512xf32>
    %c16_56 = arith.constant 16 : index
    %c0_57 = arith.constant 0 : index
    %111 = vector.load %arg16[%c16_56, %c0_57] : memref<72x512xf32, #tpu.memory_space<vmem>>, vector<8x512xf32>
    tpu.vector_store %arg16[%c16_56, %c0_57], %110 {strides = array<i32>} : memref<72x512xf32, #tpu.memory_space<vmem>>, vector<8x512xf32>,
    %c0_58 = arith.constant 0 : index
    %c126 = arith.constant 126 : index
    %112 = vector.load %arg13[%c0_58, %c126] : memref<8x768xf32, #tpu.memory_space<vmem>>, vector<8x512xf32>
    %cst_59 = arith.constant 0.000000e+00 : f32
    %113 = vector.shape_cast %20 : vector<1x512xi1> to vector<1x512xi1>
    %114 = vector.broadcast %113 : vector<1x512xi1> to vector<8x512xi1>
    %115 = vector.broadcast %cst_59 : f32 to vector<8x512xf32>
    %116 = arith.select %114, %112, %115 : vector<8x512xi1>, vector<8x512xf32>
    %c24_60 = arith.constant 24 : index
    %c0_61 = arith.constant 0 : index
    %117 = vector.load %arg16[%c24_60, %c0_61] : memref<72x512xf32, #tpu.memory_space<vmem>>, vector<8x512xf32>
    tpu.vector_store %arg16[%c24_60, %c0_61], %116 {strides = array<i32>} : memref<72x512xf32, #tpu.memory_space<vmem>>, vector<8x512xf32>,
    %c0_62 = arith.constant 0 : index
    %c128_63 = arith.constant 128 : index
    %118 = vector.load %arg13[%c0_62, %c128_63] : memref<8x768xf32, #tpu.memory_space<vmem>>, vector<8x512xf32>
    %c32_64 = arith.constant 32 : index
    %c0_65 = arith.constant 0 : index
    %119 = vector.load %arg16[%c32_64, %c0_65] : memref<72x512xf32, #tpu.memory_space<vmem>>, vector<8x512xf32>
    tpu.vector_store %arg16[%c32_64, %c0_65], %118 {strides = array<i32>} : memref<72x512xf32, #tpu.memory_space<vmem>>, vector<8x512xf32>,
    %c0_66 = arith.constant 0 : index
    %c130 = arith.constant 130 : index
    %120 = vector.load %arg13[%c0_66, %c130] : memref<8x768xf32, #tpu.memory_space<vmem>>, vector<8x512xf32>
    %cst_67 = arith.constant 0.000000e+00 : f32
    %121 = vector.shape_cast %22 : vector<1x512xi1> to vector<1x512xi1>
    %122 = vector.broadcast %121 : vector<1x512xi1> to vector<8x512xi1>
    %123 = vector.broadcast %cst_67 : f32 to vector<8x512xf32>
    %124 = arith.select %122, %120, %123 : vector<8x512xi1>, vector<8x512xf32>
    %c40_68 = arith.constant 40 : index
    %c0_69 = arith.constant 0 : index
    %125 = vector.load %arg16[%c40_68, %c0_69] : memref<72x512xf32, #tpu.memory_space<vmem>>, vector<8x512xf32>
    tpu.vector_store %arg16[%c40_68, %c0_69], %124 {strides = array<i32>} : memref<72x512xf32, #tpu.memory_space<vmem>>, vector<8x512xf32>,
    %c0_70 = arith.constant 0 : index
    %c158 = arith.constant 158 : index
    %126 = vector.load %arg13[%c0_70, %c158] : memref<8x768xf32, #tpu.memory_space<vmem>>, vector<8x512xf32>
    %cst_71 = arith.constant 0.000000e+00 : f32
    %127 = vector.shape_cast %29 : vector<1x512xi1> to vector<1x512xi1>
    %128 = vector.broadcast %127 : vector<1x512xi1> to vector<8x512xi1>
    %129 = vector.broadcast %cst_71 : f32 to vector<8x512xf32>
    %130 = arith.select %128, %126, %129 : vector<8x512xi1>, vector<8x512xf32>
    %c48_72 = arith.constant 48 : index
    %c0_73 = arith.constant 0 : index
    %131 = vector.load %arg16[%c48_72, %c0_73] : memref<72x512xf32, #tpu.memory_space<vmem>>, vector<8x512xf32>
    tpu.vector_store %arg16[%c48_72, %c0_73], %130 {strides = array<i32>} : memref<72x512xf32, #tpu.memory_space<vmem>>, vector<8x512xf32>,
    %c0_74 = arith.constant 0 : index
    %c160 = arith.constant 160 : index
    %132 = vector.load %arg13[%c0_74, %c160] : memref<8x768xf32, #tpu.memory_space<vmem>>, vector<8x512xf32>
    %cst_75 = arith.constant 0.000000e+00 : f32
    %133 = vector.shape_cast %18 : vector<1x512xi1> to vector<1x512xi1>
    %134 = vector.broadcast %133 : vector<1x512xi1> to vector<8x512xi1>
    %135 = vector.broadcast %cst_75 : f32 to vector<8x512xf32>
    %136 = arith.select %134, %132, %135 : vector<8x512xi1>, vector<8x512xf32>
    %c56_76 = arith.constant 56 : index
    %c0_77 = arith.constant 0 : index
    %137 = vector.load %arg16[%c56_76, %c0_77] : memref<72x512xf32, #tpu.memory_space<vmem>>, vector<8x512xf32>
    tpu.vector_store %arg16[%c56_76, %c0_77], %136 {strides = array<i32>} : memref<72x512xf32, #tpu.memory_space<vmem>>, vector<8x512xf32>,
    %c0_78 = arith.constant 0 : index
    %c162 = arith.constant 162 : index
    %138 = vector.load %arg13[%c0_78, %c162] : memref<8x768xf32, #tpu.memory_space<vmem>>, vector<8x512xf32>
    %cst_79 = arith.constant 0.000000e+00 : f32
    %139 = vector.shape_cast %30 : vector<1x512xi1> to vector<1x512xi1>
    %140 = vector.broadcast %139 : vector<1x512xi1> to vector<8x512xi1>
    %141 = vector.broadcast %cst_79 : f32 to vector<8x512xf32>
    %142 = arith.select %140, %138, %141 : vector<8x512xi1>, vector<8x512xf32>
    %c64_80 = arith.constant 64 : index
    %c0_81 = arith.constant 0 : index
    %143 = vector.load %arg16[%c64_80, %c0_81] : memref<72x512xf32, #tpu.memory_space<vmem>>, vector<8x512xf32>
    tpu.vector_store %arg16[%c64_80, %c0_81], %142 {strides = array<i32>} : memref<72x512xf32, #tpu.memory_space<vmem>>, vector<8x512xf32>,
    %c0_82 = arith.constant 0 : index
    %c0_83 = arith.constant 0 : index
    %144 = vector.load %arg4[%c0_82, %c0_83] : memref<16x72xf32, #tpu.memory_space<vmem>>, vector<16x72xf32>
    %c0_84 = arith.constant 0 : index
    %c0_85 = arith.constant 0 : index
    %145 = vector.load %arg16[%c0_84, %c0_85] : memref<72x512xf32, #tpu.memory_space<vmem>>, vector<72x512xf32>
    %cst_86 = arith.constant dense<0.000000e+00> : vector<16x512xf32>
    %146 = tpu.matmul %144, %145, %cst_86 {dimension_numbers = #tpu.dot_dimension_numbers<[1], [0], [0], [1], [0, 0, 1, 1], [], []>} : vector<16x72xf32>, vector<72x512xf32>, vector<16x512xf32> -> vector<16x512xf32>
    %c0_87 = arith.constant 0 : index
    %c0_88 = arith.constant 0 : index
    %147 = vector.load %arg5[%c0_87, %c0_88] : memref<16x1xf32, #tpu.memory_space<vmem>>, vector<16x1xf32>
    %148 = vector.broadcast %147 : vector<16x1xf32> to vector<16x512xf32>
    %149 = arith.addf %146, %148 : vector<16x512xf32>
    %cst_89 = arith.constant 0.000000e+00 : f32
    %150 = vector.broadcast %cst_89 : f32 to vector<16x512xf32>
    %151 = arith.maximumf %149, %150 : vector<16x512xf32>
    %c0_90 = arith.constant 0 : index
    %c128_91 = arith.constant 128 : index
    %152 = vector.load %arg14[%c0_90, %c128_91] : memref<16x768xf32, #tpu.memory_space<vmem>>, vector<16x512xf32>
    tpu.vector_store %arg14[%c0_90, %c128_91], %151 {strides = array<i32>} : memref<16x768xf32, #tpu.memory_space<vmem>>, vector<16x512xf32>,
    %c0_92 = arith.constant 0 : index
    %c111_93 = arith.constant 111 : index
    %153 = vector.load %arg14[%c0_92, %c111_93] : memref<16x768xf32, #tpu.memory_space<vmem>>, vector<16x512xf32>
    %cst_94 = arith.constant 0.000000e+00 : f32
    %154 = vector.shape_cast %23 : vector<1x512xi1> to vector<1x512xi1>
    %155 = vector.broadcast %154 : vector<1x512xi1> to vector<16x512xi1>
    %156 = vector.broadcast %cst_94 : f32 to vector<16x512xf32>
    %157 = arith.select %155, %153, %156 : vector<16x512xi1>, vector<16x512xf32>
    %c0_95 = arith.constant 0 : index
    %c0_96 = arith.constant 0 : index
    %158 = vector.load %arg17[%c0_95, %c0_96] : memref<144x512xf32, #tpu.memory_space<vmem>>, vector<16x512xf32>
    tpu.vector_store %arg17[%c0_95, %c0_96], %157 {strides = array<i32>} : memref<144x512xf32, #tpu.memory_space<vmem>>, vector<16x512xf32>,
    %c0_97 = arith.constant 0 : index
    %c112_98 = arith.constant 112 : index
    %159 = vector.load %arg14[%c0_97, %c112_98] : memref<16x768xf32, #tpu.memory_space<vmem>>, vector<16x512xf32>
    %cst_99 = arith.constant 0.000000e+00 : f32
    %160 = vector.shape_cast %8 : vector<1x512xi1> to vector<1x512xi1>
    %161 = vector.broadcast %160 : vector<1x512xi1> to vector<16x512xi1>
    %162 = vector.broadcast %cst_99 : f32 to vector<16x512xf32>
    %163 = arith.select %161, %159, %162 : vector<16x512xi1>, vector<16x512xf32>
    %c16_100 = arith.constant 16 : index
    %c0_101 = arith.constant 0 : index
    %164 = vector.load %arg17[%c16_100, %c0_101] : memref<144x512xf32, #tpu.memory_space<vmem>>, vector<16x512xf32>
    tpu.vector_store %arg17[%c16_100, %c0_101], %163 {strides = array<i32>} : memref<144x512xf32, #tpu.memory_space<vmem>>, vector<16x512xf32>,
    %c0_102 = arith.constant 0 : index
    %c113_103 = arith.constant 113 : index
    %165 = vector.load %arg14[%c0_102, %c113_103] : memref<16x768xf32, #tpu.memory_space<vmem>>, vector<16x512xf32>
    %cst_104 = arith.constant 0.000000e+00 : f32
    %166 = vector.shape_cast %24 : vector<1x512xi1> to vector<1x512xi1>
    %167 = vector.broadcast %166 : vector<1x512xi1> to vector<16x512xi1>
    %168 = vector.broadcast %cst_104 : f32 to vector<16x512xf32>
    %169 = arith.select %167, %165, %168 : vector<16x512xi1>, vector<16x512xf32>
    %c32_105 = arith.constant 32 : index
    %c0_106 = arith.constant 0 : index
    %170 = vector.load %arg17[%c32_105, %c0_106] : memref<144x512xf32, #tpu.memory_space<vmem>>, vector<16x512xf32>
    tpu.vector_store %arg17[%c32_105, %c0_106], %169 {strides = array<i32>} : memref<144x512xf32, #tpu.memory_space<vmem>>, vector<16x512xf32>,
    %c0_107 = arith.constant 0 : index
    %c127_108 = arith.constant 127 : index
    %171 = vector.load %arg14[%c0_107, %c127_108] : memref<16x768xf32, #tpu.memory_space<vmem>>, vector<16x512xf32>
    %cst_109 = arith.constant 0.000000e+00 : f32
    %172 = vector.shape_cast %12 : vector<1x512xi1> to vector<1x512xi1>
    %173 = vector.broadcast %172 : vector<1x512xi1> to vector<16x512xi1>
    %174 = vector.broadcast %cst_109 : f32 to vector<16x512xf32>
    %175 = arith.select %173, %171, %174 : vector<16x512xi1>, vector<16x512xf32>
    %c48_110 = arith.constant 48 : index
    %c0_111 = arith.constant 0 : index
    %176 = vector.load %arg17[%c48_110, %c0_111] : memref<144x512xf32, #tpu.memory_space<vmem>>, vector<16x512xf32>
    tpu.vector_store %arg17[%c48_110, %c0_111], %175 {strides = array<i32>} : memref<144x512xf32, #tpu.memory_space<vmem>>, vector<16x512xf32>,
    %c0_112 = arith.constant 0 : index
    %c128_113 = arith.constant 128 : index
    %177 = vector.load %arg14[%c0_112, %c128_113] : memref<16x768xf32, #tpu.memory_space<vmem>>, vector<16x512xf32>
    %c64_114 = arith.constant 64 : index
    %c0_115 = arith.constant 0 : index
    %178 = vector.load %arg17[%c64_114, %c0_115] : memref<144x512xf32, #tpu.memory_space<vmem>>, vector<16x512xf32>
    tpu.vector_store %arg17[%c64_114, %c0_115], %177 {strides = array<i32>} : memref<144x512xf32, #tpu.memory_space<vmem>>, vector<16x512xf32>,
    %c0_116 = arith.constant 0 : index
    %c129_117 = arith.constant 129 : index
    %179 = vector.load %arg14[%c0_116, %c129_117] : memref<16x768xf32, #tpu.memory_space<vmem>>, vector<16x512xf32>
    %cst_118 = arith.constant 0.000000e+00 : f32
    %180 = vector.shape_cast %14 : vector<1x512xi1> to vector<1x512xi1>
    %181 = vector.broadcast %180 : vector<1x512xi1> to vector<16x512xi1>
    %182 = vector.broadcast %cst_118 : f32 to vector<16x512xf32>
    %183 = arith.select %181, %179, %182 : vector<16x512xi1>, vector<16x512xf32>
    %c80 = arith.constant 80 : index
    %c0_119 = arith.constant 0 : index
    %184 = vector.load %arg17[%c80, %c0_119] : memref<144x512xf32, #tpu.memory_space<vmem>>, vector<16x512xf32>
    tpu.vector_store %arg17[%c80, %c0_119], %183 {strides = array<i32>} : memref<144x512xf32, #tpu.memory_space<vmem>>, vector<16x512xf32>,
    %c0_120 = arith.constant 0 : index
    %c143_121 = arith.constant 143 : index
    %185 = vector.load %arg14[%c0_120, %c143_121] : memref<16x768xf32, #tpu.memory_space<vmem>>, vector<16x512xf32>
    %cst_122 = arith.constant 0.000000e+00 : f32
    %186 = vector.shape_cast %25 : vector<1x512xi1> to vector<1x512xi1>
    %187 = vector.broadcast %186 : vector<1x512xi1> to vector<16x512xi1>
    %188 = vector.broadcast %cst_122 : f32 to vector<16x512xf32>
    %189 = arith.select %187, %185, %188 : vector<16x512xi1>, vector<16x512xf32>
    %c96_123 = arith.constant 96 : index
    %c0_124 = arith.constant 0 : index
    %190 = vector.load %arg17[%c96_123, %c0_124] : memref<144x512xf32, #tpu.memory_space<vmem>>, vector<16x512xf32>
    tpu.vector_store %arg17[%c96_123, %c0_124], %189 {strides = array<i32>} : memref<144x512xf32, #tpu.memory_space<vmem>>, vector<16x512xf32>,
    %c0_125 = arith.constant 0 : index
    %c144_126 = arith.constant 144 : index
    %191 = vector.load %arg14[%c0_125, %c144_126] : memref<16x768xf32, #tpu.memory_space<vmem>>, vector<16x512xf32>
    %cst_127 = arith.constant 0.000000e+00 : f32
    %192 = vector.shape_cast %10 : vector<1x512xi1> to vector<1x512xi1>
    %193 = vector.broadcast %192 : vector<1x512xi1> to vector<16x512xi1>
    %194 = vector.broadcast %cst_127 : f32 to vector<16x512xf32>
    %195 = arith.select %193, %191, %194 : vector<16x512xi1>, vector<16x512xf32>
    %c112_128 = arith.constant 112 : index
    %c0_129 = arith.constant 0 : index
    %196 = vector.load %arg17[%c112_128, %c0_129] : memref<144x512xf32, #tpu.memory_space<vmem>>, vector<16x512xf32>
    tpu.vector_store %arg17[%c112_128, %c0_129], %195 {strides = array<i32>} : memref<144x512xf32, #tpu.memory_space<vmem>>, vector<16x512xf32>,
    %c0_130 = arith.constant 0 : index
    %c145_131 = arith.constant 145 : index
    %197 = vector.load %arg14[%c0_130, %c145_131] : memref<16x768xf32, #tpu.memory_space<vmem>>, vector<16x512xf32>
    %cst_132 = arith.constant 0.000000e+00 : f32
    %198 = vector.shape_cast %26 : vector<1x512xi1> to vector<1x512xi1>
    %199 = vector.broadcast %198 : vector<1x512xi1> to vector<16x512xi1>
    %200 = vector.broadcast %cst_132 : f32 to vector<16x512xf32>
    %201 = arith.select %199, %197, %200 : vector<16x512xi1>, vector<16x512xf32>
    %c128_133 = arith.constant 128 : index
    %c0_134 = arith.constant 0 : index
    %202 = vector.load %arg17[%c128_133, %c0_134] : memref<144x512xf32, #tpu.memory_space<vmem>>, vector<16x512xf32>
    tpu.vector_store %arg17[%c128_133, %c0_134], %201 {strides = array<i32>} : memref<144x512xf32, #tpu.memory_space<vmem>>, vector<16x512xf32>,
    %c0_135 = arith.constant 0 : index
    %c0_136 = arith.constant 0 : index
    %203 = vector.load %arg6[%c0_135, %c0_136] : memref<16x144xf32, #tpu.memory_space<vmem>>, vector<16x144xf32>
    %c0_137 = arith.constant 0 : index
    %c0_138 = arith.constant 0 : index
    %204 = vector.load %arg17[%c0_137, %c0_138] : memref<144x512xf32, #tpu.memory_space<vmem>>, vector<144x512xf32>
    %cst_139 = arith.constant dense<0.000000e+00> : vector<16x512xf32>
    %205 = tpu.matmul %203, %204, %cst_139 {dimension_numbers = #tpu.dot_dimension_numbers<[1], [0], [0], [1], [0, 0, 1, 1], [], []>} : vector<16x144xf32>, vector<144x512xf32>, vector<16x512xf32> -> vector<16x512xf32>
    %c0_140 = arith.constant 0 : index
    %c0_141 = arith.constant 0 : index
    %206 = vector.load %arg7[%c0_140, %c0_141] : memref<16x1xf32, #tpu.memory_space<vmem>>, vector<16x1xf32>
    %207 = vector.broadcast %206 : vector<16x1xf32> to vector<16x512xf32>
    %208 = arith.addf %205, %207 : vector<16x512xf32>
    %cst_142 = arith.constant 0.000000e+00 : f32
    %209 = vector.broadcast %cst_142 : f32 to vector<16x512xf32>
    %210 = arith.maximumf %208, %209 : vector<16x512xf32>
    %c32_143 = arith.constant 32 : index
    %c0_144 = arith.constant 0 : index
    %211 = vector.load %arg12[%c32_143, %c0_144] : memref<64x512xf32, #tpu.memory_space<vmem>>, vector<16x512xf32>
    tpu.vector_store %arg12[%c32_143, %c0_144], %210 {strides = array<i32>} : memref<64x512xf32, #tpu.memory_space<vmem>>, vector<16x512xf32>,
    %c0_145 = arith.constant 0 : index
    %c94_146 = arith.constant 94 : index
    %212 = vector.load %arg14[%c0_145, %c94_146] : memref<16x768xf32, #tpu.memory_space<vmem>>, vector<16x512xf32>
    %cst_147 = arith.constant 0.000000e+00 : f32
    %213 = vector.shape_cast %27 : vector<1x512xi1> to vector<1x512xi1>
    %214 = vector.broadcast %213 : vector<1x512xi1> to vector<16x512xi1>
    %215 = vector.broadcast %cst_147 : f32 to vector<16x512xf32>
    %216 = arith.select %214, %212, %215 : vector<16x512xi1>, vector<16x512xf32>
    %c0_148 = arith.constant 0 : index
    %c0_149 = arith.constant 0 : index
    %217 = vector.load %arg17[%c0_148, %c0_149] : memref<144x512xf32, #tpu.memory_space<vmem>>, vector<16x512xf32>
    tpu.vector_store %arg17[%c0_148, %c0_149], %216 {strides = array<i32>} : memref<144x512xf32, #tpu.memory_space<vmem>>, vector<16x512xf32>,
    %c0_150 = arith.constant 0 : index
    %c96_151 = arith.constant 96 : index
    %218 = vector.load %arg14[%c0_150, %c96_151] : memref<16x768xf32, #tpu.memory_space<vmem>>, vector<16x512xf32>
    %cst_152 = arith.constant 0.000000e+00 : f32
    %219 = vector.shape_cast %16 : vector<1x512xi1> to vector<1x512xi1>
    %220 = vector.broadcast %219 : vector<1x512xi1> to vector<16x512xi1>
    %221 = vector.broadcast %cst_152 : f32 to vector<16x512xf32>
    %222 = arith.select %220, %218, %221 : vector<16x512xi1>, vector<16x512xf32>
    %c16_153 = arith.constant 16 : index
    %c0_154 = arith.constant 0 : index
    %223 = vector.load %arg17[%c16_153, %c0_154] : memref<144x512xf32, #tpu.memory_space<vmem>>, vector<16x512xf32>
    tpu.vector_store %arg17[%c16_153, %c0_154], %222 {strides = array<i32>} : memref<144x512xf32, #tpu.memory_space<vmem>>, vector<16x512xf32>,
    %c0_155 = arith.constant 0 : index
    %c98_156 = arith.constant 98 : index
    %224 = vector.load %arg14[%c0_155, %c98_156] : memref<16x768xf32, #tpu.memory_space<vmem>>, vector<16x512xf32>
    %cst_157 = arith.constant 0.000000e+00 : f32
    %225 = vector.shape_cast %28 : vector<1x512xi1> to vector<1x512xi1>
    %226 = vector.broadcast %225 : vector<1x512xi1> to vector<16x512xi1>
    %227 = vector.broadcast %cst_157 : f32 to vector<16x512xf32>
    %228 = arith.select %226, %224, %227 : vector<16x512xi1>, vector<16x512xf32>
    %c32_158 = arith.constant 32 : index
    %c0_159 = arith.constant 0 : index
    %229 = vector.load %arg17[%c32_158, %c0_159] : memref<144x512xf32, #tpu.memory_space<vmem>>, vector<16x512xf32>
    tpu.vector_store %arg17[%c32_158, %c0_159], %228 {strides = array<i32>} : memref<144x512xf32, #tpu.memory_space<vmem>>, vector<16x512xf32>,
    %c0_160 = arith.constant 0 : index
    %c126_161 = arith.constant 126 : index
    %230 = vector.load %arg14[%c0_160, %c126_161] : memref<16x768xf32, #tpu.memory_space<vmem>>, vector<16x512xf32>
    %cst_162 = arith.constant 0.000000e+00 : f32
    %231 = vector.shape_cast %20 : vector<1x512xi1> to vector<1x512xi1>
    %232 = vector.broadcast %231 : vector<1x512xi1> to vector<16x512xi1>
    %233 = vector.broadcast %cst_162 : f32 to vector<16x512xf32>
    %234 = arith.select %232, %230, %233 : vector<16x512xi1>, vector<16x512xf32>
    %c48_163 = arith.constant 48 : index
    %c0_164 = arith.constant 0 : index
    %235 = vector.load %arg17[%c48_163, %c0_164] : memref<144x512xf32, #tpu.memory_space<vmem>>, vector<16x512xf32>
    tpu.vector_store %arg17[%c48_163, %c0_164], %234 {strides = array<i32>} : memref<144x512xf32, #tpu.memory_space<vmem>>, vector<16x512xf32>,
    %c0_165 = arith.constant 0 : index
    %c128_166 = arith.constant 128 : index
    %236 = vector.load %arg14[%c0_165, %c128_166] : memref<16x768xf32, #tpu.memory_space<vmem>>, vector<16x512xf32>
    %c64_167 = arith.constant 64 : index
    %c0_168 = arith.constant 0 : index
    %237 = vector.load %arg17[%c64_167, %c0_168] : memref<144x512xf32, #tpu.memory_space<vmem>>, vector<16x512xf32>
    tpu.vector_store %arg17[%c64_167, %c0_168], %236 {strides = array<i32>} : memref<144x512xf32, #tpu.memory_space<vmem>>, vector<16x512xf32>,
    %c0_169 = arith.constant 0 : index
    %c130_170 = arith.constant 130 : index
    %238 = vector.load %arg14[%c0_169, %c130_170] : memref<16x768xf32, #tpu.memory_space<vmem>>, vector<16x512xf32>
    %cst_171 = arith.constant 0.000000e+00 : f32
    %239 = vector.shape_cast %22 : vector<1x512xi1> to vector<1x512xi1>
    %240 = vector.broadcast %239 : vector<1x512xi1> to vector<16x512xi1>
    %241 = vector.broadcast %cst_171 : f32 to vector<16x512xf32>
    %242 = arith.select %240, %238, %241 : vector<16x512xi1>, vector<16x512xf32>
    %c80_172 = arith.constant 80 : index
    %c0_173 = arith.constant 0 : index
    %243 = vector.load %arg17[%c80_172, %c0_173] : memref<144x512xf32, #tpu.memory_space<vmem>>, vector<16x512xf32>
    tpu.vector_store %arg17[%c80_172, %c0_173], %242 {strides = array<i32>} : memref<144x512xf32, #tpu.memory_space<vmem>>, vector<16x512xf32>,
    %c0_174 = arith.constant 0 : index
    %c158_175 = arith.constant 158 : index
    %244 = vector.load %arg14[%c0_174, %c158_175] : memref<16x768xf32, #tpu.memory_space<vmem>>, vector<16x512xf32>
    %cst_176 = arith.constant 0.000000e+00 : f32
    %245 = vector.shape_cast %29 : vector<1x512xi1> to vector<1x512xi1>
    %246 = vector.broadcast %245 : vector<1x512xi1> to vector<16x512xi1>
    %247 = vector.broadcast %cst_176 : f32 to vector<16x512xf32>
    %248 = arith.select %246, %244, %247 : vector<16x512xi1>, vector<16x512xf32>
    %c96_177 = arith.constant 96 : index
    %c0_178 = arith.constant 0 : index
    %249 = vector.load %arg17[%c96_177, %c0_178] : memref<144x512xf32, #tpu.memory_space<vmem>>, vector<16x512xf32>
    tpu.vector_store %arg17[%c96_177, %c0_178], %248 {strides = array<i32>} : memref<144x512xf32, #tpu.memory_space<vmem>>, vector<16x512xf32>,
    %c0_179 = arith.constant 0 : index
    %c160_180 = arith.constant 160 : index
    %250 = vector.load %arg14[%c0_179, %c160_180] : memref<16x768xf32, #tpu.memory_space<vmem>>, vector<16x512xf32>
    %cst_181 = arith.constant 0.000000e+00 : f32
    %251 = vector.shape_cast %18 : vector<1x512xi1> to vector<1x512xi1>
    %252 = vector.broadcast %251 : vector<1x512xi1> to vector<16x512xi1>
    %253 = vector.broadcast %cst_181 : f32 to vector<16x512xf32>
    %254 = arith.select %252, %250, %253 : vector<16x512xi1>, vector<16x512xf32>
    %c112_182 = arith.constant 112 : index
    %c0_183 = arith.constant 0 : index
    %255 = vector.load %arg17[%c112_182, %c0_183] : memref<144x512xf32, #tpu.memory_space<vmem>>, vector<16x512xf32>
    tpu.vector_store %arg17[%c112_182, %c0_183], %254 {strides = array<i32>} : memref<144x512xf32, #tpu.memory_space<vmem>>, vector<16x512xf32>,
    %c0_184 = arith.constant 0 : index
    %c162_185 = arith.constant 162 : index
    %256 = vector.load %arg14[%c0_184, %c162_185] : memref<16x768xf32, #tpu.memory_space<vmem>>, vector<16x512xf32>
    %cst_186 = arith.constant 0.000000e+00 : f32
    %257 = vector.shape_cast %30 : vector<1x512xi1> to vector<1x512xi1>
    %258 = vector.broadcast %257 : vector<1x512xi1> to vector<16x512xi1>
    %259 = vector.broadcast %cst_186 : f32 to vector<16x512xf32>
    %260 = arith.select %258, %256, %259 : vector<16x512xi1>, vector<16x512xf32>
    %c128_187 = arith.constant 128 : index
    %c0_188 = arith.constant 0 : index
    %261 = vector.load %arg17[%c128_187, %c0_188] : memref<144x512xf32, #tpu.memory_space<vmem>>, vector<16x512xf32>
    tpu.vector_store %arg17[%c128_187, %c0_188], %260 {strides = array<i32>} : memref<144x512xf32, #tpu.memory_space<vmem>>, vector<16x512xf32>,
    %c0_189 = arith.constant 0 : index
    %c0_190 = arith.constant 0 : index
    %262 = vector.load %arg8[%c0_189, %c0_190] : memref<16x144xf32, #tpu.memory_space<vmem>>, vector<16x144xf32>
    %c0_191 = arith.constant 0 : index
    %c0_192 = arith.constant 0 : index
    %263 = vector.load %arg17[%c0_191, %c0_192] : memref<144x512xf32, #tpu.memory_space<vmem>>, vector<144x512xf32>
    %cst_193 = arith.constant dense<0.000000e+00> : vector<16x512xf32>
    %264 = tpu.matmul %262, %263, %cst_193 {dimension_numbers = #tpu.dot_dimension_numbers<[1], [0], [0], [1], [0, 0, 1, 1], [], []>} : vector<16x144xf32>, vector<144x512xf32>, vector<16x512xf32> -> vector<16x512xf32>
    %c0_194 = arith.constant 0 : index
    %c0_195 = arith.constant 0 : index
    %265 = vector.load %arg9[%c0_194, %c0_195] : memref<16x1xf32, #tpu.memory_space<vmem>>, vector<16x1xf32>
    %266 = vector.broadcast %265 : vector<16x1xf32> to vector<16x512xf32>
    %267 = arith.addf %264, %266 : vector<16x512xf32>
    %cst_196 = arith.constant 0.000000e+00 : f32
    %268 = vector.broadcast %cst_196 : f32 to vector<16x512xf32>
    %269 = arith.maximumf %267, %268 : vector<16x512xf32>
    %c0_197 = arith.constant 0 : index
    %c128_198 = arith.constant 128 : index
    %270 = vector.load %arg15[%c0_197, %c128_198] : memref<16x768xf32, #tpu.memory_space<vmem>>, vector<16x512xf32>
    tpu.vector_store %arg15[%c0_197, %c128_198], %269 {strides = array<i32>} : memref<16x768xf32, #tpu.memory_space<vmem>>, vector<16x512xf32>,
    %c0_199 = arith.constant 0 : index
    %c111_200 = arith.constant 111 : index
    %271 = vector.load %arg15[%c0_199, %c111_200] : memref<16x768xf32, #tpu.memory_space<vmem>>, vector<16x512xf32>
    %cst_201 = arith.constant 0.000000e+00 : f32
    %272 = vector.shape_cast %23 : vector<1x512xi1> to vector<1x512xi1>
    %273 = vector.broadcast %272 : vector<1x512xi1> to vector<16x512xi1>
    %274 = vector.broadcast %cst_201 : f32 to vector<16x512xf32>
    %275 = arith.select %273, %271, %274 : vector<16x512xi1>, vector<16x512xf32>
    %c0_202 = arith.constant 0 : index
    %c0_203 = arith.constant 0 : index
    %276 = vector.load %arg17[%c0_202, %c0_203] : memref<144x512xf32, #tpu.memory_space<vmem>>, vector<16x512xf32>
    tpu.vector_store %arg17[%c0_202, %c0_203], %275 {strides = array<i32>} : memref<144x512xf32, #tpu.memory_space<vmem>>, vector<16x512xf32>,
    %c0_204 = arith.constant 0 : index
    %c112_205 = arith.constant 112 : index
    %277 = vector.load %arg15[%c0_204, %c112_205] : memref<16x768xf32, #tpu.memory_space<vmem>>, vector<16x512xf32>
    %cst_206 = arith.constant 0.000000e+00 : f32
    %278 = vector.shape_cast %8 : vector<1x512xi1> to vector<1x512xi1>
    %279 = vector.broadcast %278 : vector<1x512xi1> to vector<16x512xi1>
    %280 = vector.broadcast %cst_206 : f32 to vector<16x512xf32>
    %281 = arith.select %279, %277, %280 : vector<16x512xi1>, vector<16x512xf32>
    %c16_207 = arith.constant 16 : index
    %c0_208 = arith.constant 0 : index
    %282 = vector.load %arg17[%c16_207, %c0_208] : memref<144x512xf32, #tpu.memory_space<vmem>>, vector<16x512xf32>
    tpu.vector_store %arg17[%c16_207, %c0_208], %281 {strides = array<i32>} : memref<144x512xf32, #tpu.memory_space<vmem>>, vector<16x512xf32>,
    %c0_209 = arith.constant 0 : index
    %c113_210 = arith.constant 113 : index
    %283 = vector.load %arg15[%c0_209, %c113_210] : memref<16x768xf32, #tpu.memory_space<vmem>>, vector<16x512xf32>
    %cst_211 = arith.constant 0.000000e+00 : f32
    %284 = vector.shape_cast %24 : vector<1x512xi1> to vector<1x512xi1>
    %285 = vector.broadcast %284 : vector<1x512xi1> to vector<16x512xi1>
    %286 = vector.broadcast %cst_211 : f32 to vector<16x512xf32>
    %287 = arith.select %285, %283, %286 : vector<16x512xi1>, vector<16x512xf32>
    %c32_212 = arith.constant 32 : index
    %c0_213 = arith.constant 0 : index
    %288 = vector.load %arg17[%c32_212, %c0_213] : memref<144x512xf32, #tpu.memory_space<vmem>>, vector<16x512xf32>
    tpu.vector_store %arg17[%c32_212, %c0_213], %287 {strides = array<i32>} : memref<144x512xf32, #tpu.memory_space<vmem>>, vector<16x512xf32>,
    %c0_214 = arith.constant 0 : index
    %c127_215 = arith.constant 127 : index
    %289 = vector.load %arg15[%c0_214, %c127_215] : memref<16x768xf32, #tpu.memory_space<vmem>>, vector<16x512xf32>
    %cst_216 = arith.constant 0.000000e+00 : f32
    %290 = vector.shape_cast %12 : vector<1x512xi1> to vector<1x512xi1>
    %291 = vector.broadcast %290 : vector<1x512xi1> to vector<16x512xi1>
    %292 = vector.broadcast %cst_216 : f32 to vector<16x512xf32>
    %293 = arith.select %291, %289, %292 : vector<16x512xi1>, vector<16x512xf32>
    %c48_217 = arith.constant 48 : index
    %c0_218 = arith.constant 0 : index
    %294 = vector.load %arg17[%c48_217, %c0_218] : memref<144x512xf32, #tpu.memory_space<vmem>>, vector<16x512xf32>
    tpu.vector_store %arg17[%c48_217, %c0_218], %293 {strides = array<i32>} : memref<144x512xf32, #tpu.memory_space<vmem>>, vector<16x512xf32>,
    %c0_219 = arith.constant 0 : index
    %c128_220 = arith.constant 128 : index
    %295 = vector.load %arg15[%c0_219, %c128_220] : memref<16x768xf32, #tpu.memory_space<vmem>>, vector<16x512xf32>
    %c64_221 = arith.constant 64 : index
    %c0_222 = arith.constant 0 : index
    %296 = vector.load %arg17[%c64_221, %c0_222] : memref<144x512xf32, #tpu.memory_space<vmem>>, vector<16x512xf32>
    tpu.vector_store %arg17[%c64_221, %c0_222], %295 {strides = array<i32>} : memref<144x512xf32, #tpu.memory_space<vmem>>, vector<16x512xf32>,
    %c0_223 = arith.constant 0 : index
    %c129_224 = arith.constant 129 : index
    %297 = vector.load %arg15[%c0_223, %c129_224] : memref<16x768xf32, #tpu.memory_space<vmem>>, vector<16x512xf32>
    %cst_225 = arith.constant 0.000000e+00 : f32
    %298 = vector.shape_cast %14 : vector<1x512xi1> to vector<1x512xi1>
    %299 = vector.broadcast %298 : vector<1x512xi1> to vector<16x512xi1>
    %300 = vector.broadcast %cst_225 : f32 to vector<16x512xf32>
    %301 = arith.select %299, %297, %300 : vector<16x512xi1>, vector<16x512xf32>
    %c80_226 = arith.constant 80 : index
    %c0_227 = arith.constant 0 : index
    %302 = vector.load %arg17[%c80_226, %c0_227] : memref<144x512xf32, #tpu.memory_space<vmem>>, vector<16x512xf32>
    tpu.vector_store %arg17[%c80_226, %c0_227], %301 {strides = array<i32>} : memref<144x512xf32, #tpu.memory_space<vmem>>, vector<16x512xf32>,
    %c0_228 = arith.constant 0 : index
    %c143_229 = arith.constant 143 : index
    %303 = vector.load %arg15[%c0_228, %c143_229] : memref<16x768xf32, #tpu.memory_space<vmem>>, vector<16x512xf32>
    %cst_230 = arith.constant 0.000000e+00 : f32
    %304 = vector.shape_cast %25 : vector<1x512xi1> to vector<1x512xi1>
    %305 = vector.broadcast %304 : vector<1x512xi1> to vector<16x512xi1>
    %306 = vector.broadcast %cst_230 : f32 to vector<16x512xf32>
    %307 = arith.select %305, %303, %306 : vector<16x512xi1>, vector<16x512xf32>
    %c96_231 = arith.constant 96 : index
    %c0_232 = arith.constant 0 : index
    %308 = vector.load %arg17[%c96_231, %c0_232] : memref<144x512xf32, #tpu.memory_space<vmem>>, vector<16x512xf32>
    tpu.vector_store %arg17[%c96_231, %c0_232], %307 {strides = array<i32>} : memref<144x512xf32, #tpu.memory_space<vmem>>, vector<16x512xf32>,
    %c0_233 = arith.constant 0 : index
    %c144_234 = arith.constant 144 : index
    %309 = vector.load %arg15[%c0_233, %c144_234] : memref<16x768xf32, #tpu.memory_space<vmem>>, vector<16x512xf32>
    %cst_235 = arith.constant 0.000000e+00 : f32
    %310 = vector.shape_cast %10 : vector<1x512xi1> to vector<1x512xi1>
    %311 = vector.broadcast %310 : vector<1x512xi1> to vector<16x512xi1>
    %312 = vector.broadcast %cst_235 : f32 to vector<16x512xf32>
    %313 = arith.select %311, %309, %312 : vector<16x512xi1>, vector<16x512xf32>
    %c112_236 = arith.constant 112 : index
    %c0_237 = arith.constant 0 : index
    %314 = vector.load %arg17[%c112_236, %c0_237] : memref<144x512xf32, #tpu.memory_space<vmem>>, vector<16x512xf32>
    tpu.vector_store %arg17[%c112_236, %c0_237], %313 {strides = array<i32>} : memref<144x512xf32, #tpu.memory_space<vmem>>, vector<16x512xf32>,
    %c0_238 = arith.constant 0 : index
    %c145_239 = arith.constant 145 : index
    %315 = vector.load %arg15[%c0_238, %c145_239] : memref<16x768xf32, #tpu.memory_space<vmem>>, vector<16x512xf32>
    %cst_240 = arith.constant 0.000000e+00 : f32
    %316 = vector.shape_cast %26 : vector<1x512xi1> to vector<1x512xi1>
    %317 = vector.broadcast %316 : vector<1x512xi1> to vector<16x512xi1>
    %318 = vector.broadcast %cst_240 : f32 to vector<16x512xf32>
    %319 = arith.select %317, %315, %318 : vector<16x512xi1>, vector<16x512xf32>
    %c128_241 = arith.constant 128 : index
    %c0_242 = arith.constant 0 : index
    %320 = vector.load %arg17[%c128_241, %c0_242] : memref<144x512xf32, #tpu.memory_space<vmem>>, vector<16x512xf32>
    tpu.vector_store %arg17[%c128_241, %c0_242], %319 {strides = array<i32>} : memref<144x512xf32, #tpu.memory_space<vmem>>, vector<16x512xf32>,
    %c0_243 = arith.constant 0 : index
    %c0_244 = arith.constant 0 : index
    %321 = vector.load %arg10[%c0_243, %c0_244] : memref<16x144xf32, #tpu.memory_space<vmem>>, vector<16x144xf32>
    %c0_245 = arith.constant 0 : index
    %c0_246 = arith.constant 0 : index
    %322 = vector.load %arg17[%c0_245, %c0_246] : memref<144x512xf32, #tpu.memory_space<vmem>>, vector<144x512xf32>
    %cst_247 = arith.constant dense<0.000000e+00> : vector<16x512xf32>
    %323 = tpu.matmul %321, %322, %cst_247 {dimension_numbers = #tpu.dot_dimension_numbers<[1], [0], [0], [1], [0, 0, 1, 1], [], []>} : vector<16x144xf32>, vector<144x512xf32>, vector<16x512xf32> -> vector<16x512xf32>
    %c0_248 = arith.constant 0 : index
    %c0_249 = arith.constant 0 : index
    %324 = vector.load %arg11[%c0_248, %c0_249] : memref<16x1xf32, #tpu.memory_space<vmem>>, vector<16x1xf32>
    %325 = vector.broadcast %324 : vector<16x1xf32> to vector<16x512xf32>
    %326 = arith.addf %323, %325 : vector<16x512xf32>
    %cst_250 = arith.constant 0.000000e+00 : f32
    %327 = vector.broadcast %cst_250 : f32 to vector<16x512xf32>
    %328 = arith.maximumf %326, %327 : vector<16x512xf32>
    %c48_251 = arith.constant 48 : index
    %c0_252 = arith.constant 0 : index
    %329 = vector.load %arg12[%c48_251, %c0_252] : memref<64x512xf32, #tpu.memory_space<vmem>>, vector<16x512xf32>
    tpu.vector_store %arg12[%c48_251, %c0_252], %328 {strides = array<i32>} : memref<64x512xf32, #tpu.memory_space<vmem>>, vector<16x512xf32>,
    return
  }
  func.func @transform_0(%arg0: i32) -> (i32, i32) {
    %c0_i32 = arith.constant 0 : i32
    %c0_i32_0 = arith.constant 0 : i32
    return %c0_i32, %arg0 : i32, i32
  }
  func.func @transform_1(%arg0: i32) -> (i32, i32) {
    %c0_i32 = arith.constant 0 : i32
    %c0_i32_0 = arith.constant 0 : i32
    %c0_i32_1 = arith.constant 0 : i32
    return %c0_i32, %c0_i32_0 : i32, i32
  }
  func.func @transform_2(%arg0: i32) -> (i32, i32) {
    %c0_i32 = arith.constant 0 : i32
    %c0_i32_0 = arith.constant 0 : i32
    %c0_i32_1 = arith.constant 0 : i32
    return %c0_i32, %c0_i32_0 : i32, i32
  }
  func.func @transform_3(%arg0: i32) -> (i32, i32) {
    %c0_i32 = arith.constant 0 : i32
    %c0_i32_0 = arith.constant 0 : i32
    %c0_i32_1 = arith.constant 0 : i32
    return %c0_i32, %c0_i32_0 : i32, i32
  }
  func.func @transform_4(%arg0: i32) -> (i32, i32) {
    %c0_i32 = arith.constant 0 : i32
    %c0_i32_0 = arith.constant 0 : i32
    %c0_i32_1 = arith.constant 0 : i32
    return %c0_i32, %c0_i32_0 : i32, i32
  }
  func.func @transform_5(%arg0: i32) -> (i32, i32) {
    %c0_i32 = arith.constant 0 : i32
    %c0_i32_0 = arith.constant 0 : i32
    %c0_i32_1 = arith.constant 0 : i32
    return %c0_i32, %c0_i32_0 : i32, i32
  }
  func.func @transform_6(%arg0: i32) -> (i32, i32) {
    %c0_i32 = arith.constant 0 : i32
    %c0_i32_0 = arith.constant 0 : i32
    %c0_i32_1 = arith.constant 0 : i32
    return %c0_i32, %c0_i32_0 : i32, i32
  }
  func.func @transform_7(%arg0: i32) -> (i32, i32) {
    %c0_i32 = arith.constant 0 : i32
    %c0_i32_0 = arith.constant 0 : i32
    %c0_i32_1 = arith.constant 0 : i32
    return %c0_i32, %c0_i32_0 : i32, i32
  }
  func.func @transform_8(%arg0: i32) -> (i32, i32) {
    %c0_i32 = arith.constant 0 : i32
    %c0_i32_0 = arith.constant 0 : i32
    %c0_i32_1 = arith.constant 0 : i32
    return %c0_i32, %c0_i32_0 : i32, i32
  }
  func.func @transform_9(%arg0: i32) -> (i32, i32) {
    %c0_i32 = arith.constant 0 : i32
    %c0_i32_0 = arith.constant 0 : i32
    %c0_i32_1 = arith.constant 0 : i32
    return %c0_i32, %c0_i32_0 : i32, i32
  }
  func.func @transform_10(%arg0: i32) -> (i32, i32) {
    %c0_i32 = arith.constant 0 : i32
    %c0_i32_0 = arith.constant 0 : i32
    %c0_i32_1 = arith.constant 0 : i32
    return %c0_i32, %c0_i32_0 : i32, i32
  }
  func.func @transform_11(%arg0: i32) -> (i32, i32) {
    %c0_i32 = arith.constant 0 : i32
    %c0_i32_0 = arith.constant 0 : i32
    return %c0_i32, %arg0 : i32, i32
  }
}

</mosaic_0001>

<llo_original>
// kernel: ssh_context_forward.1
$region0: #{ssh_context_forward.1}
  #allocation0 [shape = 'u32[]', space=smem, size = 0x4, offset = 0x4, fixed_abs, tag = 'smem constant byte address 0x4 - core index']
  #allocation1 [shape = 'u32[144,128]{1,0:T(1,128)}', space=vmem, size = 0x12000, scoped, tag = 'internal scratch']
  #allocation2 [shape = 'f32[8,768]{1,0:T(8,128)}', space=vmem, size = 0x6000, scoped, tag = 'scratch operand']
  #allocation3 [shape = 'f32[16,768]{1,0:T(8,128)}', space=vmem, size = 0xc000, scoped, tag = 'scratch operand']
  #allocation4 [shape = 'f32[16,768]{1,0:T(8,128)}', space=vmem, size = 0xc000, scoped, tag = 'scratch operand']
  #allocation5 [shape = 'f32[72,512]{1,0:T(8,128)}', space=vmem, size = 0x24000, scoped, tag = 'scratch operand']
  #allocation6 [shape = 'f32[144,512]{1,0:T(8,128)}', space=vmem, size = 0x48000, scoped, tag = 'scratch operand']
  %s0 = inlined_call_operand.vmem [shape: f32[4,512], index: 0, kind: input, shape index: {}]
  %s1 = inlined_call_operand.vmem [shape: f32[32,72], index: 1, kind: input, shape index: {}]
  %s2 = inlined_call_operand.vmem [shape: f32[32,1], index: 2, kind: input, shape index: {}]
  %s3 = inlined_call_operand.vmem [shape: f32[16,72], index: 3, kind: input, shape index: {}]
  %s4 = inlined_call_operand.vmem [shape: f32[16,1], index: 4, kind: input, shape index: {}]
  %s5 = inlined_call_operand.vmem [shape: f32[16,144], index: 5, kind: input, shape index: {}]
  %s6 = inlined_call_operand.vmem [shape: f32[16,1], index: 6, kind: input, shape index: {}]
  %s7 = inlined_call_operand.vmem [shape: f32[16,144], index: 7, kind: input, shape index: {}]
  %s8 = inlined_call_operand.vmem [shape: f32[16,1], index: 8, kind: input, shape index: {}]
  %s9 = inlined_call_operand.vmem [shape: f32[16,144], index: 9, kind: input, shape index: {}]
  %s10 = inlined_call_operand.vmem [shape: f32[16,1], index: 10, kind: input, shape index: {}]
  %s11 = inlined_call_operand.vmem [shape: f32[64,512], index: 11, kind: output, shape index: {}]
  %s12 = sld [smem:[#allocation0]]
  $region54: #{ssh_context_forward.1} parent=0
    _
  %s14 = ssub.s32 1, %s12
  %s15 = scalar_select 0, %s14, %s12
  // Predicated region
  $region2: #{ssh_context_forward.1} parent=0 // pred_check
    _
  $region3: #{ssh_context_forward.1} parent=0 // pred_check_branch
    %17 = sbr.rel (0) target = $region5
  $region4: #{ssh_context_forward.1} parent=0 // pred_region
    _
  $region5: #{ssh_context_forward.1} parent=0 // pred_fallthru
    _
  // Predicated region
  $region6: #{ssh_context_forward.1} parent=0 // pred_check
    _
  $region7: #{ssh_context_forward.1} parent=0 // pred_check_branch
    %19 = sbr.rel (0) target = $region9
  $region8: #{ssh_context_forward.1} parent=0 // pred_region
    _
  $region9: #{ssh_context_forward.1} parent=0 // pred_fallthru
    _
  // Predicated region
  $region10: #{ssh_context_forward.1} parent=0 // pred_check
    _
  $region11: #{ssh_context_forward.1} parent=0 // pred_check_branch
    %21 = sbr.rel (0) target = $region13
  $region12: #{ssh_context_forward.1} parent=0 // pred_region
    _
  $region13: #{ssh_context_forward.1} parent=0 // pred_fallthru
    _
  // Predicated region
  $region14: #{ssh_context_forward.1} parent=0 // pred_check
    _
  $region15: #{ssh_context_forward.1} parent=0 // pred_check_branch
    %23 = sbr.rel (0) target = $region17
  $region16: #{ssh_context_forward.1} parent=0 // pred_region
    _
  $region17: #{ssh_context_forward.1} parent=0 // pred_fallthru
    _
  // Predicated region
  $region18: #{ssh_context_forward.1} parent=0 // pred_check
    _
  $region19: #{ssh_context_forward.1} parent=0 // pred_check_branch
    %25 = sbr.rel (0) target = $region21
  $region20: #{ssh_context_forward.1} parent=0 // pred_region
    _
  $region21: #{ssh_context_forward.1} parent=0 // pred_fallthru
    _
  // Predicated region
  $region22: #{ssh_context_forward.1} parent=0 // pred_check
    _
  $region23: #{ssh_context_forward.1} parent=0 // pred_check_branch
    %27 = sbr.rel (0) target = $region25
  $region24: #{ssh_context_forward.1} parent=0 // pred_region
    _
  $region25: #{ssh_context_forward.1} parent=0 // pred_fallthru
    _
  // Predicated region
  $region26: #{ssh_context_forward.1} parent=0 // pred_check
    _
  $region27: #{ssh_context_forward.1} parent=0 // pred_check_branch
    %29 = sbr.rel (0) target = $region29
  $region28: #{ssh_context_forward.1} parent=0 // pred_region
    _
  $region29: #{ssh_context_forward.1} parent=0 // pred_fallthru
    _
  // Predicated region
  $region30: #{ssh_context_forward.1} parent=0 // pred_check
    _
  $region31: #{ssh_context_forward.1} parent=0 // pred_check_branch
    %31 = sbr.rel (0) target = $region33
  $region32: #{ssh_context_forward.1} parent=0 // pred_region
    _
  $region33: #{ssh_context_forward.1} parent=0 // pred_fallthru
    _
  // Predicated region
  $region34: #{ssh_context_forward.1} parent=0 // pred_check
    _
  $region35: #{ssh_context_forward.1} parent=0 // pred_check_branch
    %33 = sbr.rel (0) target = $region37
  $region36: #{ssh_context_forward.1} parent=0 // pred_region
    _
  $region37: #{ssh_context_forward.1} parent=0 // pred_fallthru
    _
  // Predicated region
  $region38: #{ssh_context_forward.1} parent=0 // pred_check
    _
  $region39: #{ssh_context_forward.1} parent=0 // pred_check_branch
    %35 = sbr.rel (0) target = $region41
  $region40: #{ssh_context_forward.1} parent=0 // pred_region
    _
  $region41: #{ssh_context_forward.1} parent=0 // pred_fallthru
    _
  // Predicated region
  $region42: #{ssh_context_forward.1} parent=0 // pred_check
    _
  $region43: #{ssh_context_forward.1} parent=0 // pred_check_branch
    %37 = sbr.rel (0) target = $region45
  $region44: #{ssh_context_forward.1} parent=0 // pred_region
    _
  $region45: #{ssh_context_forward.1} parent=0 // pred_fallthru
    _
  %v38 = vlaneseq
  %v39 = vand.u32 %v38, 127
  %v40 = vadd.s32 %v39, 128
  %v41 = vadd.s32 %v39, 256
  %v42 = vadd.s32 %v39, 384
  %v43 = vand.u32 %v39, 255
  %v44 = vand.u32 %v40, 255
  %v45 = vand.u32 %v41, 255
  %v46 = vand.u32 %v42, 255
  %v47 = vand.u32 %v43, 15
  %v48 = vand.u32 %v44, 15
  %v49 = vand.u32 %v45, 15
  %v50 = vand.u32 %v46, 15
  %v51 = vshra.s32 %v43, 4
  %v52 = vshra.s32 %v44, 4
  %v53 = vshra.s32 %v45, 4
  %v54 = vshra.s32 %v46, 4
  %vm55 = vcmp.ge.s32.totalorder %v51, 1
  %vm56 = vcmp.ge.s32.totalorder %v52, 1
  %vm57 = vcmp.ge.s32.totalorder %v53, 1
  %vm58 = vcmp.ge.s32.totalorder %v54, 1
  %vm59 = vcmp.lt.s32.totalorder %v51, 15
  %vm60 = vcmp.lt.s32.totalorder %v52, 15
  %vm61 = vcmp.lt.s32.totalorder %v53, 15
  %vm62 = vcmp.lt.s32.totalorder %v54, 15
  %vm63 = vcmp.ge.s32.totalorder %v47, 1
  %vm64 = vcmp.ge.s32.totalorder %v48, 1
  %vm65 = vcmp.ge.s32.totalorder %v49, 1
  %vm66 = vcmp.ge.s32.totalorder %v50, 1
  %vm67 = vcmp.lt.s32.totalorder %v47, 15
  %vm68 = vcmp.lt.s32.totalorder %v48, 15
  %vm69 = vcmp.lt.s32.totalorder %v49, 15
  %vm70 = vcmp.lt.s32.totalorder %v50, 15
  %vm71 = vcmp.ge.s32.totalorder %v51, 2
  %vm72 = vcmp.ge.s32.totalorder %v52, 2
  %vm73 = vcmp.ge.s32.totalorder %v53, 2
  %vm74 = vcmp.ge.s32.totalorder %v54, 2
  %vm75 = vcmp.lt.s32.totalorder %v51, 14
  %vm76 = vcmp.lt.s32.totalorder %v52, 14
  %vm77 = vcmp.lt.s32.totalorder %v53, 14
  %vm78 = vcmp.lt.s32.totalorder %v54, 14
  %vm79 = vcmp.ge.s32.totalorder %v47, 2
  %vm80 = vcmp.ge.s32.totalorder %v48, 2
  %vm81 = vcmp.ge.s32.totalorder %v49, 2
  %vm82 = vcmp.ge.s32.totalorder %v50, 2
  %vm83 = vcmp.lt.s32.totalorder %v47, 14
  %vm84 = vcmp.lt.s32.totalorder %v48, 14
  %vm85 = vcmp.lt.s32.totalorder %v49, 14
  %vm86 = vcmp.lt.s32.totalorder %v50, 14
  %vm87 = vmand %vm55, %vm63
  %vm88 = vmand %vm56, %vm64
  %vm89 = vmand %vm57, %vm65
  %vm90 = vmand %vm58, %vm66
  %vm91 = vmand %vm55, %vm67
  %vm92 = vmand %vm56, %vm68
  %vm93 = vmand %vm57, %vm69
  %vm94 = vmand %vm58, %vm70
  %vm95 = vmand %vm59, %vm63
  %vm96 = vmand %vm60, %vm64
  %vm97 = vmand %vm61, %vm65
  %vm98 = vmand %vm62, %vm66
  %vm99 = vmand %vm59, %vm67
  %vm100 = vmand %vm60, %vm68
  %vm101 = vmand %vm61, %vm69
  %vm102 = vmand %vm62, %vm70
  %vm103 = vmand %vm71, %vm79
  %vm104 = vmand %vm72, %vm80
  %vm105 = vmand %vm73, %vm81
  %vm106 = vmand %vm74, %vm82
  %vm107 = vmand %vm71, %vm83
  %vm108 = vmand %vm72, %vm84
  %vm109 = vmand %vm73, %vm85
  %vm110 = vmand %vm74, %vm86
  %vm111 = vmand %vm75, %vm79
  %vm112 = vmand %vm76, %vm80
  %vm113 = vmand %vm77, %vm81
  %vm114 = vmand %vm78, %vm82
  %vm115 = vmand %vm75, %vm83
  %vm116 = vmand %vm76, %vm84
  %vm117 = vmand %vm77, %vm85
  %vm118 = vmand %vm78, %vm86
  %v119 = vld [vmem:[%s0] sm:$0xff]
  %v120 = vld [vmem:[%s0 + $0x8] sm:$0xff]
  %v123 = vcombine.high %v119, %v119
  %v124 = vcombine.high %v120, %v120
  %127 = vst [vmem:[#allocation2 + $0x8] sm:$0xf] %v119
  %128 = vst [vmem:[#allocation2 + $0x10] sm:$0xf] %v123
  %129 = vst [vmem:[#allocation2 + $0x18] sm:$0xf] %v120
  %130 = vst [vmem:[#allocation2 + $0x20] sm:$0xf] %v124
  %131 = vst [vmem:[#allocation2 + $0x8] sm:$0xf0] 0.0
  %132 = vst [vmem:[#allocation2 + $0x10] sm:$0xf0] 0.0
  %133 = vst [vmem:[#allocation2 + $0x18] sm:$0xf0] 0.0
  %134 = vst [vmem:[#allocation2 + $0x20] sm:$0xf0] 0.0
  %v135 = vld [vmem:[#allocation2] sm:$0xff]
  %v136 = vld [vmem:[#allocation2 + $0x8] sm:$0xff]
  %v137 = vld [vmem:[#allocation2 + $0x10] sm:$0xff]
  %v138 = vld [vmem:[#allocation2 + $0x18] sm:$0xff]
  %v139 = vld [vmem:[#allocation2 + $0x20] sm:$0xff]
  %v140 = vsel %vm87, 1, 0
  %v141 = vsel %vm88, 1, 0
  %v142 = vsel %vm89, 1, 0
  %v143 = vsel %vm90, 1, 0
  %vm144 = vcmp.eq.s32.totalorder %v140, 1
  %vm145 = vcmp.eq.s32.totalorder %v141, 1
  %vm146 = vcmp.eq.s32.totalorder %v142, 1
  %vm147 = vcmp.eq.s32.totalorder %v143, 1
  %153 = vrot.lane.b32.xlu0 %v135, 17
  %v154 = vpop.permute.xlu0 %153
  %155 = vrot.lane.b32.xlu0 %v136, 17
  %v156 = vpop.permute.xlu0 %155
  %157 = vrot.lane.b32.xlu0 %v137, 17
  %v158 = vpop.permute.xlu0 %157
  %159 = vrot.lane.b32.xlu0 %v138, 17
  %v160 = vpop.permute.xlu0 %159
  %161 = vrot.lane.b32.xlu0 %v139, 17
  %v162 = vpop.permute.xlu0 %161
  %vm163 = vcmask 138240
  %v164 = vsel %vm163, %v154, %v156
  %v165 = vsel %vm163, %v156, %v158
  %v166 = vsel %vm163, %v158, %v160
  %v167 = vsel %vm163, %v160, %v162
  %v172 = vsel %vm144, %v164, 0.0
  %v173 = vsel %vm145, %v165, 0.0
  %v174 = vsel %vm146, %v166, 0.0
  %v175 = vsel %vm147, %v167, 0.0
  %176 = vst [vmem:[#allocation5] sm:$0xff] %v172
  %177 = vst [vmem:[#allocation5 + $0x8] sm:$0xff] %v173
  %178 = vst [vmem:[#allocation5 + $0x10] sm:$0xff] %v174
  %179 = vst [vmem:[#allocation5 + $0x18] sm:$0xff] %v175
  %v180 = vld [vmem:[#allocation2] sm:$0xff]
  %v181 = vld [vmem:[#allocation2 + $0x8] sm:$0xff]
  %v182 = vld [vmem:[#allocation2 + $0x10] sm:$0xff]
  %v183 = vld [vmem:[#allocation2 + $0x18] sm:$0xff]
  %v184 = vld [vmem:[#allocation2 + $0x20] sm:$0xff]
  %v185 = vsel %vm55, 1, 0
  %v186 = vsel %vm56, 1, 0
  %v187 = vsel %vm57, 1, 0
  %v188 = vsel %vm58, 1, 0
  %vm189 = vcmp.eq.s32.totalorder %v185, 1
  %vm190 = vcmp.eq.s32.totalorder %v186, 1
  %vm191 = vcmp.eq.s32.totalorder %v187, 1
  %vm192 = vcmp.eq.s32.totalorder %v188, 1
  %198 = vrot.lane.b32.xlu0 %v180, 16
  %v199 = vpop.permute.xlu0 %198
  %200 = vrot.lane.b32.xlu0 %v181, 16
  %v201 = vpop.permute.xlu0 %200
  %202 = vrot.lane.b32.xlu0 %v182, 16
  %v203 = vpop.permute.xlu0 %202
  %204 = vrot.lane.b32.xlu0 %v183, 16
  %v205 = vpop.permute.xlu0 %204
  %206 = vrot.lane.b32.xlu0 %v184, 16
  %v207 = vpop.permute.xlu0 %206
  %vm208 = vcmask 130048
  %v209 = vsel %vm208, %v199, %v201
  %v210 = vsel %vm208, %v201, %v203
  %v211 = vsel %vm208, %v203, %v205
  %v212 = vsel %vm208, %v205, %v207
  %v217 = vsel %vm189, %v209, 0.0
  %v218 = vsel %vm190, %v210, 0.0
  %v219 = vsel %vm191, %v211, 0.0
  %v220 = vsel %vm192, %v212, 0.0
  %221 = vst [vmem:[#allocation5 + $0x20] sm:$0xff] %v217
  %222 = vst [vmem:[#allocation5 + $0x28] sm:$0xff] %v218
  %223 = vst [vmem:[#allocation5 + $0x30] sm:$0xff] %v219
  %224 = vst [vmem:[#allocation5 + $0x38] sm:$0xff] %v220
  %v225 = vld [vmem:[#allocation2] sm:$0xff]
  %v226 = vld [vmem:[#allocation2 + $0x8] sm:$0xff]
  %v227 = vld [vmem:[#allocation2 + $0x10] sm:$0xff]
  %v228 = vld [vmem:[#allocation2 + $0x18] sm:$0xff]
  %v229 = vld [vmem:[#allocation2 + $0x20] sm:$0xff]
  %v230 = vsel %vm91, 1, 0
  %v231 = vsel %vm92, 1, 0
  %v232 = vsel %vm93, 1, 0
  %v233 = vsel %vm94, 1, 0
  %vm234 = vcmp.eq.s32.totalorder %v230, 1
  %vm235 = vcmp.eq.s32.totalorder %v231, 1
  %vm236 = vcmp.eq.s32.totalorder %v232, 1
  %vm237 = vcmp.eq.s32.totalorder %v233, 1
  %243 = vrot.lane.b32.xlu0 %v225, 15
  %v244 = vpop.permute.xlu0 %243
  %245 = vrot.lane.b32.xlu0 %v226, 15
  %v246 = vpop.permute.xlu0 %245
  %247 = vrot.lane.b32.xlu0 %v227, 15
  %v248 = vpop.permute.xlu0 %247
  %249 = vrot.lane.b32.xlu0 %v228, 15
  %v250 = vpop.permute.xlu0 %249
  %251 = vrot.lane.b32.xlu0 %v229, 15
  %v252 = vpop.permute.xlu0 %251
  %vm253 = vcmask 121856
  %v254 = vsel %vm253, %v244, %v246
  %v255 = vsel %vm253, %v246, %v248
  %v256 = vsel %vm253, %v248, %v250
  %v257 = vsel %vm253, %v250, %v252
  %v262 = vsel %vm234, %v254, 0.0
  %v263 = vsel %vm235, %v255, 0.0
  %v264 = vsel %vm236, %v256, 0.0
  %v265 = vsel %vm237, %v257, 0.0
  %266 = vst [vmem:[#allocation5 + $0x40] sm:$0xff] %v262
  %267 = vst [vmem:[#allocation5 + $0x48] sm:$0xff] %v263
  %268 = vst [vmem:[#allocation5 + $0x50] sm:$0xff] %v264
  %269 = vst [vmem:[#allocation5 + $0x58] sm:$0xff] %v265
  %v270 = vld [vmem:[#allocation2] sm:$0xff]
  %v271 = vld [vmem:[#allocation2 + $0x8] sm:$0xff]
  %v272 = vld [vmem:[#allocation2 + $0x10] sm:$0xff]
  %v273 = vld [vmem:[#allocation2 + $0x18] sm:$0xff]
  %v274 = vld [vmem:[#allocation2 + $0x20] sm:$0xff]
  %v275 = vsel %vm63, 1, 0
  %v276 = vsel %vm64, 1, 0
  %v277 = vsel %vm65, 1, 0
  %v278 = vsel %vm66, 1, 0
  %vm279 = vcmp.eq.s32.totalorder %v275, 1
  %vm280 = vcmp.eq.s32.totalorder %v276, 1
  %vm281 = vcmp.eq.s32.totalorder %v277, 1
  %vm282 = vcmp.eq.s32.totalorder %v278, 1
  %288 = vrot.lane.b32.xlu0 %v270, 1
  %v289 = vpop.permute.xlu0 %288
  %290 = vrot.lane.b32.xlu0 %v271, 1
  %v291 = vpop.permute.xlu0 %290
  %292 = vrot.lane.b32.xlu0 %v272, 1
  %v293 = vpop.permute.xlu0 %292
  %294 = vrot.lane.b32.xlu0 %v273, 1
  %v295 = vpop.permute.xlu0 %294
  %296 = vrot.lane.b32.xlu0 %v274, 1
  %v297 = vpop.permute.xlu0 %296
  %vm298 = vcmask 7168
  %v299 = vsel %vm298, %v289, %v291
  %v300 = vsel %vm298, %v291, %v293
  %v301 = vsel %vm298, %v293, %v295
  %v302 = vsel %vm298, %v295, %v297
  %v307 = vsel %vm279, %v299, 0.0
  %v308 = vsel %vm280, %v300, 0.0
  %v309 = vsel %vm281, %v301, 0.0
  %v310 = vsel %vm282, %v302, 0.0
  %311 = vst [vmem:[#allocation5 + $0x60] sm:$0xff] %v307
  %312 = vst [vmem:[#allocation5 + $0x68] sm:$0xff] %v308
  %313 = vst [vmem:[#allocation5 + $0x70] sm:$0xff] %v309
  %314 = vst [vmem:[#allocation5 + $0x78] sm:$0xff] %v310
  %v315 = vld [vmem:[#allocation2 + $0x8] sm:$0xff]
  %v316 = vld [vmem:[#allocation2 + $0x10] sm:$0xff]
  %v317 = vld [vmem:[#allocation2 + $0x18] sm:$0xff]
  %v318 = vld [vmem:[#allocation2 + $0x20] sm:$0xff]
  %319 = vst [vmem:[#allocation5 + $0x80] sm:$0xff] %v315
  %320 = vst [vmem:[#allocation5 + $0x88] sm:$0xff] %v316
  %321 = vst [vmem:[#allocation5 + $0x90] sm:$0xff] %v317
  %322 = vst [vmem:[#allocation5 + $0x98] sm:$0xff] %v318
  %v323 = vld [vmem:[#allocation2 + $0x8] sm:$0xff]
  %v324 = vld [vmem:[#allocation2 + $0x10] sm:$0xff]
  %v325 = vld [vmem:[#allocation2 + $0x18] sm:$0xff]
  %v326 = vld [vmem:[#allocation2 + $0x20] sm:$0xff]
  %v327 = vld [vmem:[#allocation2 + $0x28] sm:$0xff]
  %v328 = vsel %vm67, 1, 0
  %v329 = vsel %vm68, 1, 0
  %v330 = vsel %vm69, 1, 0
  %v331 = vsel %vm70, 1, 0
  %vm332 = vcmp.eq.s32.totalorder %v328, 1
  %vm333 = vcmp.eq.s32.totalorder %v329, 1
  %vm334 = vcmp.eq.s32.totalorder %v330, 1
  %vm335 = vcmp.eq.s32.totalorder %v331, 1
  %341 = vrot.lane.b32.xlu0 %v323, 127
  %v342 = vpop.permute.xlu0 %341
  %343 = vrot.lane.b32.xlu0 %v324, 127
  %v344 = vpop.permute.xlu0 %343
  %345 = vrot.lane.b32.xlu0 %v325, 127
  %v346 = vpop.permute.xlu0 %345
  %347 = vrot.lane.b32.xlu0 %v326, 127
  %v348 = vpop.permute.xlu0 %347
  %349 = vrot.lane.b32.xlu0 %v327, 127
  %v350 = vpop.permute.xlu0 %349
  %vm351 = vcmask 1039360
  %v352 = vsel %vm351, %v342, %v344
  %v353 = vsel %vm351, %v344, %v346
  %v354 = vsel %vm351, %v346, %v348
  %v355 = vsel %vm351, %v348, %v350
  %v360 = vsel %vm332, %v352, 0.0
  %v361 = vsel %vm333, %v353, 0.0
  %v362 = vsel %vm334, %v354, 0.0
  %v363 = vsel %vm335, %v355, 0.0
  %364 = vst [vmem:[#allocation5 + $0xa0] sm:$0xff] %v360
  %365 = vst [vmem:[#allocation5 + $0xa8] sm:$0xff] %v361
  %366 = vst [vmem:[#allocation5 + $0xb0] sm:$0xff] %v362
  %367 = vst [vmem:[#allocation5 + $0xb8] sm:$0xff] %v363
  %v368 = vld [vmem:[#allocation2 + $0x8] sm:$0xff]
  %v369 = vld [vmem:[#allocation2 + $0x10] sm:$0xff]
  %v370 = vld [vmem:[#allocation2 + $0x18] sm:$0xff]
  %v371 = vld [vmem:[#allocation2 + $0x20] sm:$0xff]
  %v372 = vld [vmem:[#allocation2 + $0x28] sm:$0xff]
  %v373 = vsel %vm95, 1, 0
  %v374 = vsel %vm96, 1, 0
  %v375 = vsel %vm97, 1, 0
  %v376 = vsel %vm98, 1, 0
  %vm377 = vcmp.eq.s32.totalorder %v373, 1
  %vm378 = vcmp.eq.s32.totalorder %v374, 1
  %vm379 = vcmp.eq.s32.totalorder %v375, 1
  %vm380 = vcmp.eq.s32.totalorder %v376, 1
  %386 = vrot.lane.b32.xlu0 %v368, 113
  %v387 = vpop.permute.xlu0 %386
  %388 = vrot.lane.b32.xlu0 %v369, 113
  %v389 = vpop.permute.xlu0 %388
  %390 = vrot.lane.b32.xlu0 %v370, 113
  %v391 = vpop.permute.xlu0 %390
  %392 = vrot.lane.b32.xlu0 %v371, 113
  %v393 = vpop.permute.xlu0 %392
  %394 = vrot.lane.b32.xlu0 %v372, 113
  %v395 = vpop.permute.xlu0 %394
  %vm396 = vcmask 924672
  %v397 = vsel %vm396, %v387, %v389
  %v398 = vsel %vm396, %v389, %v391
  %v399 = vsel %vm396, %v391, %v393
  %v400 = vsel %vm396, %v393, %v395
  %v405 = vsel %vm377, %v397, 0.0
  %v406 = vsel %vm378, %v398, 0.0
  %v407 = vsel %vm379, %v399, 0.0
  %v408 = vsel %vm380, %v400, 0.0
  %409 = vst [vmem:[#allocation5 + $0xc0] sm:$0xff] %v405
  %410 = vst [vmem:[#allocation5 + $0xc8] sm:$0xff] %v406
  %411 = vst [vmem:[#allocation5 + $0xd0] sm:$0xff] %v407
  %412 = vst [vmem:[#allocation5 + $0xd8] sm:$0xff] %v408
  %v413 = vld [vmem:[#allocation2 + $0x8] sm:$0xff]
  %v414 = vld [vmem:[#allocation2 + $0x10] sm:$0xff]
  %v415 = vld [vmem:[#allocation2 + $0x18] sm:$0xff]
  %v416 = vld [vmem:[#allocation2 + $0x20] sm:$0xff]
  %v417 = vld [vmem:[#allocation2 + $0x28] sm:$0xff]
  %v418 = vsel %vm59, 1, 0
  %v419 = vsel %vm60, 1, 0
  %v420 = vsel %vm61, 1, 0
  %v421 = vsel %vm62, 1, 0
  %vm422 = vcmp.eq.s32.totalorder %v418, 1
  %vm423 = vcmp.eq.s32.totalorder %v419, 1
  %vm424 = vcmp.eq.s32.totalorder %v420, 1
  %vm425 = vcmp.eq.s32.totalorder %v421, 1
  %431 = vrot.lane.b32.xlu0 %v413, 112
  %v432 = vpop.permute.xlu0 %431
  %433 = vrot.lane.b32.xlu0 %v414, 112
  %v434 = vpop.permute.xlu0 %433
  %435 = vrot.lane.b32.xlu0 %v415, 112
  %v436 = vpop.permute.xlu0 %435
  %437 = vrot.lane.b32.xlu0 %v416, 112
  %v438 = vpop.permute.xlu0 %437
  %439 = vrot.lane.b32.xlu0 %v417, 112
  %v440 = vpop.permute.xlu0 %439
  %vm441 = vcmask 916480
  %v442 = vsel %vm441, %v432, %v434
  %v443 = vsel %vm441, %v434, %v436
  %v444 = vsel %vm441, %v436, %v438
  %v445 = vsel %vm441, %v438, %v440
  %v450 = vsel %vm422, %v442, 0.0
  %v451 = vsel %vm423, %v443, 0.0
  %v452 = vsel %vm424, %v444, 0.0
  %v453 = vsel %vm425, %v445, 0.0
  %454 = vst [vmem:[#allocation5 + $0xe0] sm:$0xff] %v450
  %455 = vst [vmem:[#allocation5 + $0xe8] sm:$0xff] %v451
  %456 = vst [vmem:[#allocation5 + $0xf0] sm:$0xff] %v452
  %457 = vst [vmem:[#allocation5 + $0xf8] sm:$0xff] %v453
  %v458 = vld [vmem:[#allocation2 + $0x8] sm:$0xff]
  %v459 = vld [vmem:[#allocation2 + $0x10] sm:$0xff]
  %v460 = vld [vmem:[#allocation2 + $0x18] sm:$0xff]
  %v461 = vld [vmem:[#allocation2 + $0x20] sm:$0xff]
  %v462 = vld [vmem:[#allocation2 + $0x28] sm:$0xff]
  %v463 = vsel %vm99, 1, 0
  %v464 = vsel %vm100, 1, 0
  %v465 = vsel %vm101, 1, 0
  %v466 = vsel %vm102, 1, 0
  %vm467 = vcmp.eq.s32.totalorder %v463, 1
  %vm468 = vcmp.eq.s32.totalorder %v464, 1
  %vm469 = vcmp.eq.s32.totalorder %v465, 1
  %vm470 = vcmp.eq.s32.totalorder %v466, 1
  %476 = vrot.lane.b32.xlu0 %v458, 111
  %v477 = vpop.permute.xlu0 %476
  %478 = vrot.lane.b32.xlu0 %v459, 111
  %v479 = vpop.permute.xlu0 %478
  %480 = vrot.lane.b32.xlu0 %v460, 111
  %v481 = vpop.permute.xlu0 %480
  %482 = vrot.lane.b32.xlu0 %v461, 111
  %v483 = vpop.permute.xlu0 %482
  %484 = vrot.lane.b32.xlu0 %v462, 111
  %v485 = vpop.permute.xlu0 %484
  %vm486 = vcmask 908288
  %v487 = vsel %vm486, %v477, %v479
  %v488 = vsel %vm486, %v479, %v481
  %v489 = vsel %vm486, %v481, %v483
  %v490 = vsel %vm486, %v483, %v485
  %v495 = vsel %vm467, %v487, 0.0
  %v496 = vsel %vm468, %v488, 0.0
  %v497 = vsel %vm469, %v489, 0.0
  %v498 = vsel %vm470, %v490, 0.0
  %499 = vst [vmem:[#allocation5 + $0x100] sm:$0xff] %v495
  %500 = vst [vmem:[#allocation5 + $0x108] sm:$0xff] %v496
  %501 = vst [vmem:[#allocation5 + $0x110] sm:$0xff] %v497
  %502 = vst [vmem:[#allocation5 + $0x118] sm:$0xff] %v498
  %v503 = vld [vmem:[%s1] sm:$0xff]
  %v504 = vld [vmem:[%s1 + $0x8] sm:$0xff]
  %v505 = vld [vmem:[%s1 + $0x10] sm:$0xff]
  %v506 = vld [vmem:[%s1 + $0x18] sm:$0xff]
  %v507 = vld [vmem:[#allocation5] sm:$0xff]
  %v508 = vld [vmem:[#allocation5 + $0x8] sm:$0xff]
  %v509 = vld [vmem:[#allocation5 + $0x10] sm:$0xff]
  %v510 = vld [vmem:[#allocation5 + $0x18] sm:$0xff]
  %v511 = vld [vmem:[#allocation5 + $0x20] sm:$0xff]
  %v512 = vld [vmem:[#allocation5 + $0x28] sm:$0xff]
  %v513 = vld [vmem:[#allocation5 + $0x30] sm:$0xff]
  %v514 = vld [vmem:[#allocation5 + $0x38] sm:$0xff]
  %v515 = vld [vmem:[#allocation5 + $0x40] sm:$0xff]
  %v516 = vld [vmem:[#allocation5 + $0x48] sm:$0xff]
  %v517 = vld [vmem:[#allocation5 + $0x50] sm:$0xff]
  %v518 = vld [vmem:[#allocation5 + $0x58] sm:$0xff]
  %v519 = vld [vmem:[#allocation5 + $0x60] sm:$0xff]
  %v520 = vld [vmem:[#allocation5 + $0x68] sm:$0xff]
  %v521 = vld [vmem:[#allocation5 + $0x70] sm:$0xff]
  %v522 = vld [vmem:[#allocation5 + $0x78] sm:$0xff]
  %v523 = vld [vmem:[#allocation5 + $0x80] sm:$0xff]
  %v524 = vld [vmem:[#allocation5 + $0x88] sm:$0xff]
  %v525 = vld [vmem:[#allocation5 + $0x90] sm:$0xff]
  %v526 = vld [vmem:[#allocation5 + $0x98] sm:$0xff]
  %v527 = vld [vmem:[#allocation5 + $0xa0] sm:$0xff]
  %v528 = vld [vmem:[#allocation5 + $0xa8] sm:$0xff]
  %v529 = vld [vmem:[#allocation5 + $0xb0] sm:$0xff]
  %v530 = vld [vmem:[#allocation5 + $0xb8] sm:$0xff]
  %v531 = vld [vmem:[#allocation5 + $0xc0] sm:$0xff]
  %v532 = vld [vmem:[#allocation5 + $0xc8] sm:$0xff]
  %v533 = vld [vmem:[#allocation5 + $0xd0] sm:$0xff]
  %v534 = vld [vmem:[#allocation5 + $0xd8] sm:$0xff]
  %v535 = vld [vmem:[#allocation5 + $0xe0] sm:$0xff]
  %v536 = vld [vmem:[#allocation5 + $0xe8] sm:$0xff]
  %v537 = vld [vmem:[#allocation5 + $0xf0] sm:$0xff]
  %v538 = vld [vmem:[#allocation5 + $0xf8] sm:$0xff]
  %v539 = vld [vmem:[#allocation5 + $0x100] sm:$0xff]
  %v540 = vld [vmem:[#allocation5 + $0x108] sm:$0xff]
  %v541 = vld [vmem:[#allocation5 + $0x110] sm:$0xff]
  %v542 = vld [vmem:[#allocation5 + $0x118] sm:$0xff]
  %v543 = vld [vmem:[%s2] sm:$0xff]
  %v544 = vld [vmem:[%s2 + $0x8] sm:$0xff]
  %v545 = vld [vmem:[%s2 + $0x10] sm:$0xff]
  %v546 = vld [vmem:[%s2 + $0x18] sm:$0xff]
  %548 = vset.pattern.permute.xlu0 0
  %549 = vperm.xlu0 %548, %v543
  %v550 = vpop.permute.xlu0 %549
  %553 = vset.pattern.permute.xlu0 0
  %554 = vperm.xlu0 %553, %v544
  %v555 = vpop.permute.xlu0 %554
  %558 = vset.pattern.permute.xlu0 0
  %559 = vperm.xlu0 %558, %v545
  %v560 = vpop.permute.xlu0 %559
  %563 = vset.pattern.permute.xlu0 0
  %564 = vperm.xlu0 %563, %v546
  %v565 = vpop.permute.xlu0 %564
  %vm567 = vcmask 588800
  %v569 = vsel %vm567, %v503, 0
  %v572 = vsel %vm567, %v504, 0
  %v575 = vsel %vm567, %v505, 0
  %v578 = vsel %vm567, %v506, 0
  %580 = vmatprep.subr.mxu0 %v508
  %581 = vmatpush1.msra.mxu0 %v507
  %582 = vmatprep.subr.mxu0 %v512
  %583 = vmatpush1.msra.mxu0 %v511
  %584 = vmatprep.subr.mxu0 %v516
  %585 = vmatpush1.msra.mxu0 %v515
  %586 = vmatprep.subr.mxu0 %v520
  %587 = vmatpush1.msra.mxu0 %v519
  %588 = vmatprep.subr.mxu0 %v524
  %589 = vmatpush1.msra.mxu0 %v523
  %590 = vmatprep.subr.mxu0 %v528
  %591 = vmatpush1.msra.mxu0 %v527
  %592 = vmatprep.subr.mxu0 %v532
  %593 = vmatpush1.msra.mxu0 %v531
  %594 = vmatprep.subr.mxu0 %v536
  %595 = vmatpush1.msra.mxu0 %v535
  %596 = vmatprep.subr.mxu0 %v540
  %597 = vmatpush1.msra.mxu0 %v539
  %598 = vmatprep.subr.mxu0 0.0
  %599 = vmatpush1.msra.mxu0 0.0
  %600 = vmatprep.subr.mxu0 0.0
  %601 = vmatpush1.msra.mxu0 0.0
  %602 = vmatprep.subr.mxu0 0.0
  %603 = vmatpush1.msra.mxu0 0.0
  %604 = vmatprep.subr.mxu0 0.0
  %605 = vmatpush1.msra.mxu0 0.0
  %606 = vmatprep.subr.mxu0 0.0
  %607 = vmatpush1.msra.mxu0 0.0
  %608 = vmatprep.subr.mxu0 0.0
  %609 = vmatpush1.msra.mxu0 0.0
  %610 = vmatprep.subr.mxu0 0.0
  %611 = vmatpush1.msra.mxu0 0.0
  %612 = vmatprep.subr.mxu0 0.0
  %613 = vmatpush1.msra.mxu0 0.0
  %614 = vmatprep.subr.mxu0 0.0
  %615 = vmatpush1.msra.mxu0 0.0
  %616 = vmatprep.subr.mxu0 0.0
  %617 = vmatpush1.msra.mxu0 0.0
  %618 = vmatprep.subr.mxu0 0.0
  %619 = vmatpush1.msra.mxu0 0.0
  %620 = vmatprep.subr.mxu0 0.0
  %621 = vmatpush1.msra.mxu0 0.0
  %622 = vmatprep.subr.mxu0 0.0
  %623 = vmatpush1.msra.mxu0 0.0
  %624 = vmatprep.subr.mxu0 0.0
  %625 = vmatpush1.msra.mxu0 0.0
  %626 = vmatprep.subr.mxu0 0.0
  %627 = vmatpush1.msra.mxu0 0.0
  %628 = vmatprep.subr.mxu0 0.0
  %629 = vmatpush1.msra.mxu0 0.0
  %630 = vmatprep.subr.mxu0 0.0
  %631 = vmatpush1.msra.mxu0 0.0
  %632 = vmatprep.subr.mxu0 0.0
  %633 = vmatpush1.msra.mxu0 0.0
  %634 = vmatprep.subr.mxu0 0.0
  %635 = vmatpush1.msra.mxu0 0.0
  %636 = vmatprep.subr.mxu0 0.0
  %637 = vmatpush1.msra.mxu0 0.0
  %638 = vmatprep.subr.mxu0 0.0
  %639 = vmatpush1.msra.mxu0 0.0
  %640 = vmatprep.subr.mxu0 0.0
  %641 = vmatpush1.msra.mxu0 0.0
  %642 = vmatprep.subr.mxu0 0.0
  %643 = vmatpush1.msra.mxu0 0.0
  %644 = vmatprep.mubr.f32.mxu0 0.0
  %645 = vmatmul.mubr.f32.gmra.mrb[0].mxu0 %v569
  %v646 = vpop.f32.mrb[0].mxu0
  %v647 = vadd.f32 %v550, %v646
  %v648 = vpop.f32.mrb[0].mxu0
  %v649 = vadd.f32 %v550, %v648
  %650 = vmatprep.mubr.f32.mxu0 0.0
  %651 = vmatmul.mubr.f32.gmra.mrb[0].mxu0 %v572
  %v652 = vpop.f32.mrb[0].mxu0
  %v653 = vadd.f32 %v555, %v652
  %v654 = vpop.f32.mrb[0].mxu0
  %v655 = vadd.f32 %v555, %v654
  %656 = vmatprep.mubr.f32.mxu0 0.0
  %657 = vmatmul.mubr.f32.gmra.mrb[0].mxu0 %v575
  %v658 = vpop.f32.mrb[0].mxu0
  %v659 = vadd.f32 %v560, %v658
  %v660 = vpop.f32.mrb[0].mxu0
  %v661 = vadd.f32 %v560, %v660
  %662 = vmatprep.mubr.f32.mxu0 0.0
  %663 = vmatmul.mubr.f32.gmra.mrb[0].mxu0 %v578
  %v664 = vpop.f32.mrb[0].mxu0
  %v665 = vadd.f32 %v565, %v664
  %v666 = vpop.f32.mrb[0].mxu0
  %v667 = vadd.f32 %v565, %v666
  %668 = vdwg.mxu0
  %669 = vmatprep.subr.mxu0 %v510
  %670 = vmatpush1.msra.mxu0 %v509
  %671 = vmatprep.subr.mxu0 %v514
  %672 = vmatpush1.msra.mxu0 %v513
  %673 = vmatprep.subr.mxu0 %v518
  %674 = vmatpush1.msra.mxu0 %v517
  %675 = vmatprep.subr.mxu0 %v522
  %676 = vmatpush1.msra.mxu0 %v521
  %677 = vmatprep.subr.mxu0 %v526
  %678 = vmatpush1.msra.mxu0 %v525
  %679 = vmatprep.subr.mxu0 %v530
  %680 = vmatpush1.msra.mxu0 %v529
  %681 = vmatprep.subr.mxu0 %v534
  %682 = vmatpush1.msra.mxu0 %v533
  %683 = vmatprep.subr.mxu0 %v538
  %684 = vmatpush1.msra.mxu0 %v537
  %685 = vmatprep.subr.mxu0 %v542
  %686 = vmatpush1.msra.mxu0 %v541
  %687 = vmatprep.subr.mxu0 0.0
  %688 = vmatpush1.msra.mxu0 0.0
  %689 = vmatprep.subr.mxu0 0.0
  %690 = vmatpush1.msra.mxu0 0.0
  %691 = vmatprep.subr.mxu0 0.0
  %692 = vmatpush1.msra.mxu0 0.0
  %693 = vmatprep.subr.mxu0 0.0
  %694 = vmatpush1.msra.mxu0 0.0
  %695 = vmatprep.subr.mxu0 0.0
  %696 = vmatpush1.msra.mxu0 0.0
  %697 = vmatprep.subr.mxu0 0.0
  %698 = vmatpush1.msra.mxu0 0.0
  %699 = vmatprep.subr.mxu0 0.0
  %700 = vmatpush1.msra.mxu0 0.0
  %701 = vmatprep.subr.mxu0 0.0
  %702 = vmatpush1.msra.mxu0 0.0
  %703 = vmatprep.subr.mxu0 0.0
  %704 = vmatpush1.msra.mxu0 0.0
  %705 = vmatprep.subr.mxu0 0.0
  %706 = vmatpush1.msra.mxu0 0.0
  %707 = vmatprep.subr.mxu0 0.0
  %708 = vmatpush1.msra.mxu0 0.0
  %709 = vmatprep.subr.mxu0 0.0
  %710 = vmatpush1.msra.mxu0 0.0
  %711 = vmatprep.subr.mxu0 0.0
  %712 = vmatpush1.msra.mxu0 0.0
  %713 = vmatprep.subr.mxu0 0.0
  %714 = vmatpush1.msra.mxu0 0.0
  %715 = vmatprep.subr.mxu0 0.0
  %716 = vmatpush1.msra.mxu0 0.0
  %717 = vmatprep.subr.mxu0 0.0
  %718 = vmatpush1.msra.mxu0 0.0
  %719 = vmatprep.subr.mxu0 0.0
  %720 = vmatpush1.msra.mxu0 0.0
  %721 = vmatprep.subr.mxu0 0.0
  %722 = vmatpush1.msra.mxu0 0.0
  %723 = vmatprep.subr.mxu0 0.0
  %724 = vmatpush1.msra.mxu0 0.0
  %725 = vmatprep.subr.mxu0 0.0
  %726 = vmatpush1.msra.mxu0 0.0
  %727 = vmatprep.subr.mxu0 0.0
  %728 = vmatpush1.msra.mxu0 0.0
  %729 = vmatprep.subr.mxu0 0.0
  %730 = vmatpush1.msra.mxu0 0.0
  %731 = vmatprep.subr.mxu0 0.0
  %732 = vmatpush1.msra.mxu0 0.0
  %733 = vmatprep.mubr.f32.mxu0 0.0
  %734 = vmatmul.mubr.f32.gmra.mrb[0].mxu0 %v569
  %v735 = vpop.f32.mrb[0].mxu0
  %v736 = vadd.f32 %v550, %v735
  %v737 = vpop.f32.mrb[0].mxu0
  %v738 = vadd.f32 %v550, %v737
  %739 = vmatprep.mubr.f32.mxu0 0.0
  %740 = vmatmul.mubr.f32.gmra.mrb[0].mxu0 %v572
  %v741 = vpop.f32.mrb[0].mxu0
  %v742 = vadd.f32 %v555, %v741
  %v743 = vpop.f32.mrb[0].mxu0
  %v744 = vadd.f32 %v555, %v743
  %745 = vmatprep.mubr.f32.mxu0 0.0
  %746 = vmatmul.mubr.f32.gmra.mrb[0].mxu0 %v575
  %v747 = vpop.f32.mrb[0].mxu0
  %v748 = vadd.f32 %v560, %v747
  %v749 = vpop.f32.mrb[0].mxu0
  %v750 = vadd.f32 %v560, %v749
  %751 = vmatprep.mubr.f32.mxu0 0.0
  %752 = vmatmul.mubr.f32.gmra.mrb[0].mxu0 %v578
  %v753 = vpop.f32.mrb[0].mxu0
  %v754 = vadd.f32 %v565, %v753
  %v755 = vpop.f32.mrb[0].mxu0
  %v756 = vadd.f32 %v565, %v755
  %757 = vdwg.mxu0
  %v758 = vmax.f32 %v647, 0.0
  %v759 = vmax.f32 %v649, 0.0
  %v760 = vmax.f32 %v736, 0.0
  %v761 = vmax.f32 %v738, 0.0
  %v762 = vmax.f32 %v653, 0.0
  %v763 = vmax.f32 %v655, 0.0
  %v764 = vmax.f32 %v742, 0.0
  %v765 = vmax.f32 %v744, 0.0
  %v766 = vmax.f32 %v659, 0.0
  %v767 = vmax.f32 %v661, 0.0
  %v768 = vmax.f32 %v748, 0.0
  %v769 = vmax.f32 %v750, 0.0
  %v770 = vmax.f32 %v665, 0.0
  %v771 = vmax.f32 %v667, 0.0
  %v772 = vmax.f32 %v754, 0.0
  %v773 = vmax.f32 %v756, 0.0
  %774 = vst [vmem:[%s11] sm:$0xff] %v758
  %775 = vst [vmem:[%s11 + $0x8] sm:$0xff] %v759
  %776 = vst [vmem:[%s11 + $0x10] sm:$0xff] %v760
  %777 = vst [vmem:[%s11 + $0x18] sm:$0xff] %v761
  %778 = vst [vmem:[%s11 + $0x20] sm:$0xff] %v762
  %779 = vst [vmem:[%s11 + $0x28] sm:$0xff] %v763
  %780 = vst [vmem:[%s11 + $0x30] sm:$0xff] %v764
  %781 = vst [vmem:[%s11 + $0x38] sm:$0xff] %v765
  %782 = vst [vmem:[%s11 + $0x40] sm:$0xff] %v766
  %783 = vst [vmem:[%s11 + $0x48] sm:$0xff] %v767
  %784 = vst [vmem:[%s11 + $0x50] sm:$0xff] %v768
  %785 = vst [vmem:[%s11 + $0x58] sm:$0xff] %v769
  %786 = vst [vmem:[%s11 + $0x60] sm:$0xff] %v770
  %787 = vst [vmem:[%s11 + $0x68] sm:$0xff] %v771
  %788 = vst [vmem:[%s11 + $0x70] sm:$0xff] %v772
  %789 = vst [vmem:[%s11 + $0x78] sm:$0xff] %v773
  %v790 = vld [vmem:[#allocation2] sm:$0xff]
  %v791 = vld [vmem:[#allocation2 + $0x8] sm:$0xff]
  %v792 = vld [vmem:[#allocation2 + $0x10] sm:$0xff]
  %v793 = vld [vmem:[#allocation2 + $0x18] sm:$0xff]
  %v794 = vld [vmem:[#allocation2 + $0x20] sm:$0xff]
  %v795 = vsel %vm103, 1, 0
  %v796 = vsel %vm104, 1, 0
  %v797 = vsel %vm105, 1, 0
  %v798 = vsel %vm106, 1, 0
  %vm799 = vcmp.eq.s32.totalorder %v795, 1
  %vm800 = vcmp.eq.s32.totalorder %v796, 1
  %vm801 = vcmp.eq.s32.totalorder %v797, 1
  %vm802 = vcmp.eq.s32.totalorder %v798, 1
  %808 = vrot.lane.b32.xlu0 %v790, 34
  %v809 = vpop.permute.xlu0 %808
  %810 = vrot.lane.b32.xlu0 %v791, 34
  %v811 = vpop.permute.xlu0 %810
  %812 = vrot.lane.b32.xlu0 %v792, 34
  %v813 = vpop.permute.xlu0 %812
  %814 = vrot.lane.b32.xlu0 %v793, 34
  %v815 = vpop.permute.xlu0 %814
  %816 = vrot.lane.b32.xlu0 %v794, 34
  %v817 = vpop.permute.xlu0 %816
  %vm818 = vcmask 277504
  %v819 = vsel %vm818, %v809, %v811
  %v820 = vsel %vm818, %v811, %v813
  %v821 = vsel %vm818, %v813, %v815
  %v822 = vsel %vm818, %v815, %v817
  %v827 = vsel %vm799, %v819, 0.0
  %v828 = vsel %vm800, %v820, 0.0
  %v829 = vsel %vm801, %v821, 0.0
  %v830 = vsel %vm802, %v822, 0.0
  %831 = vst [vmem:[#allocation5] sm:$0xff] %v827
  %832 = vst [vmem:[#allocation5 + $0x8] sm:$0xff] %v828
  %833 = vst [vmem:[#allocation5 + $0x10] sm:$0xff] %v829
  %834 = vst [vmem:[#allocation5 + $0x18] sm:$0xff] %v830
  %v835 = vld [vmem:[#allocation2] sm:$0xff]
  %v836 = vld [vmem:[#allocation2 + $0x8] sm:$0xff]
  %v837 = vld [vmem:[#allocation2 + $0x10] sm:$0xff]
  %v838 = vld [vmem:[#allocation2 + $0x18] sm:$0xff]
  %v839 = vld [vmem:[#allocation2 + $0x20] sm:$0xff]
  %v840 = vsel %vm71, 1, 0
  %v841 = vsel %vm72, 1, 0
  %v842 = vsel %vm73, 1, 0
  %v843 = vsel %vm74, 1, 0
  %vm844 = vcmp.eq.s32.totalorder %v840, 1
  %vm845 = vcmp.eq.s32.totalorder %v841, 1
  %vm846 = vcmp.eq.s32.totalorder %v842, 1
  %vm847 = vcmp.eq.s32.totalorder %v843, 1
  %853 = vrot.lane.b32.xlu0 %v835, 32
  %v854 = vpop.permute.xlu0 %853
  %855 = vrot.lane.b32.xlu0 %v836, 32
  %v856 = vpop.permute.xlu0 %855
  %857 = vrot.lane.b32.xlu0 %v837, 32
  %v858 = vpop.permute.xlu0 %857
  %859 = vrot.lane.b32.xlu0 %v838, 32
  %v860 = vpop.permute.xlu0 %859
  %861 = vrot.lane.b32.xlu0 %v839, 32
  %v862 = vpop.permute.xlu0 %861
  %vm863 = vcmask 261120
  %v864 = vsel %vm863, %v854, %v856
  %v865 = vsel %vm863, %v856, %v858
  %v866 = vsel %vm863, %v858, %v860
  %v867 = vsel %vm863, %v860, %v862
  %v872 = vsel %vm844, %v864, 0.0
  %v873 = vsel %vm845, %v865, 0.0
  %v874 = vsel %vm846, %v866, 0.0
  %v875 = vsel %vm847, %v867, 0.0
  %876 = vst [vmem:[#allocation5 + $0x20] sm:$0xff] %v872
  %877 = vst [vmem:[#allocation5 + $0x28] sm:$0xff] %v873
  %878 = vst [vmem:[#allocation5 + $0x30] sm:$0xff] %v874
  %879 = vst [vmem:[#allocation5 + $0x38] sm:$0xff] %v875
  %v880 = vld [vmem:[#allocation2] sm:$0xff]
  %v881 = vld [vmem:[#allocation2 + $0x8] sm:$0xff]
  %v882 = vld [vmem:[#allocation2 + $0x10] sm:$0xff]
  %v883 = vld [vmem:[#allocation2 + $0x18] sm:$0xff]
  %v884 = vld [vmem:[#allocation2 + $0x20] sm:$0xff]
  %v885 = vsel %vm107, 1, 0
  %v886 = vsel %vm108, 1, 0
  %v887 = vsel %vm109, 1, 0
  %v888 = vsel %vm110, 1, 0
  %vm889 = vcmp.eq.s32.totalorder %v885, 1
  %vm890 = vcmp.eq.s32.totalorder %v886, 1
  %vm891 = vcmp.eq.s32.totalorder %v887, 1
  %vm892 = vcmp.eq.s32.totalorder %v888, 1
  %898 = vrot.lane.b32.xlu0 %v880, 30
  %v899 = vpop.permute.xlu0 %898
  %900 = vrot.lane.b32.xlu0 %v881, 30
  %v901 = vpop.permute.xlu0 %900
  %902 = vrot.lane.b32.xlu0 %v882, 30
  %v903 = vpop.permute.xlu0 %902
  %904 = vrot.lane.b32.xlu0 %v883, 30
  %v905 = vpop.permute.xlu0 %904
  %906 = vrot.lane.b32.xlu0 %v884, 30
  %v907 = vpop.permute.xlu0 %906
  %vm908 = vcmask 244736
  %v909 = vsel %vm908, %v899, %v901
  %v910 = vsel %vm908, %v901, %v903
  %v911 = vsel %vm908, %v903, %v905
  %v912 = vsel %vm908, %v905, %v907
  %v917 = vsel %vm889, %v909, 0.0
  %v918 = vsel %vm890, %v910, 0.0
  %v919 = vsel %vm891, %v911, 0.0
  %v920 = vsel %vm892, %v912, 0.0
  %921 = vst [vmem:[#allocation5 + $0x40] sm:$0xff] %v917
  %922 = vst [vmem:[#allocation5 + $0x48] sm:$0xff] %v918
  %923 = vst [vmem:[#allocation5 + $0x50] sm:$0xff] %v919
  %924 = vst [vmem:[#allocation5 + $0x58] sm:$0xff] %v920
  %v925 = vld [vmem:[#allocation2] sm:$0xff]
  %v926 = vld [vmem:[#allocation2 + $0x8] sm:$0xff]
  %v927 = vld [vmem:[#allocation2 + $0x10] sm:$0xff]
  %v928 = vld [vmem:[#allocation2 + $0x18] sm:$0xff]
  %v929 = vld [vmem:[#allocation2 + $0x20] sm:$0xff]
  %v930 = vsel %vm79, 1, 0
  %v931 = vsel %vm80, 1, 0
  %v932 = vsel %vm81, 1, 0
  %v933 = vsel %vm82, 1, 0
  %vm934 = vcmp.eq.s32.totalorder %v930, 1
  %vm935 = vcmp.eq.s32.totalorder %v931, 1
  %vm936 = vcmp.eq.s32.totalorder %v932, 1
  %vm937 = vcmp.eq.s32.totalorder %v933, 1
  %943 = vrot.lane.b32.xlu0 %v925, 2
  %v944 = vpop.permute.xlu0 %943
  %945 = vrot.lane.b32.xlu0 %v926, 2
  %v946 = vpop.permute.xlu0 %945
  %947 = vrot.lane.b32.xlu0 %v927, 2
  %v948 = vpop.permute.xlu0 %947
  %949 = vrot.lane.b32.xlu0 %v928, 2
  %v950 = vpop.permute.xlu0 %949
  %951 = vrot.lane.b32.xlu0 %v929, 2
  %v952 = vpop.permute.xlu0 %951
  %vm953 = vcmask 15360
  %v954 = vsel %vm953, %v944, %v946
  %v955 = vsel %vm953, %v946, %v948
  %v956 = vsel %vm953, %v948, %v950
  %v957 = vsel %vm953, %v950, %v952
  %v962 = vsel %vm934, %v954, 0.0
  %v963 = vsel %vm935, %v955, 0.0
  %v964 = vsel %vm936, %v956, 0.0
  %v965 = vsel %vm937, %v957, 0.0
  %966 = vst [vmem:[#allocation5 + $0x60] sm:$0xff] %v962
  %967 = vst [vmem:[#allocation5 + $0x68] sm:$0xff] %v963
  %968 = vst [vmem:[#allocation5 + $0x70] sm:$0xff] %v964
  %969 = vst [vmem:[#allocation5 + $0x78] sm:$0xff] %v965
  %v970 = vld [vmem:[#allocation2 + $0x8] sm:$0xff]
  %v971 = vld [vmem:[#allocation2 + $0x10] sm:$0xff]
  %v972 = vld [vmem:[#allocation2 + $0x18] sm:$0xff]
  %v973 = vld [vmem:[#allocation2 + $0x20] sm:$0xff]
  %974 = vst [vmem:[#allocation5 + $0x80] sm:$0xff] %v970
  %975 = vst [vmem:[#allocation5 + $0x88] sm:$0xff] %v971
  %976 = vst [vmem:[#allocation5 + $0x90] sm:$0xff] %v972
  %977 = vst [vmem:[#allocation5 + $0x98] sm:$0xff] %v973
  %v978 = vld [vmem:[#allocation2 + $0x8] sm:$0xff]
  %v979 = vld [vmem:[#allocation2 + $0x10] sm:$0xff]
  %v980 = vld [vmem:[#allocation2 + $0x18] sm:$0xff]
  %v981 = vld [vmem:[#allocation2 + $0x20] sm:$0xff]
  %v982 = vld [vmem:[#allocation2 + $0x28] sm:$0xff]
  %v983 = vsel %vm83, 1, 0
  %v984 = vsel %vm84, 1, 0
  %v985 = vsel %vm85, 1, 0
  %v986 = vsel %vm86, 1, 0
  %vm987 = vcmp.eq.s32.totalorder %v983, 1
  %vm988 = vcmp.eq.s32.totalorder %v984, 1
  %vm989 = vcmp.eq.s32.totalorder %v985, 1
  %vm990 = vcmp.eq.s32.totalorder %v986, 1
  %996 = vrot.lane.b32.xlu0 %v978, 126
  %v997 = vpop.permute.xlu0 %996
  %998 = vrot.lane.b32.xlu0 %v979, 126
  %v999 = vpop.permute.xlu0 %998
  %1000 = vrot.lane.b32.xlu0 %v980, 126
  %v1001 = vpop.permute.xlu0 %1000
  %1002 = vrot.lane.b32.xlu0 %v981, 126
  %v1003 = vpop.permute.xlu0 %1002
  %1004 = vrot.lane.b32.xlu0 %v982, 126
  %v1005 = vpop.permute.xlu0 %1004
  %vm1006 = vcmask 1031168
  %v1007 = vsel %vm1006, %v997, %v999
  %v1008 = vsel %vm1006, %v999, %v1001
  %v1009 = vsel %vm1006, %v1001, %v1003
  %v1010 = vsel %vm1006, %v1003, %v1005
  %v1015 = vsel %vm987, %v1007, 0.0
  %v1016 = vsel %vm988, %v1008, 0.0
  %v1017 = vsel %vm989, %v1009, 0.0
  %v1018 = vsel %vm990, %v1010, 0.0
  %1019 = vst [vmem:[#allocation5 + $0xa0] sm:$0xff] %v1015
  %1020 = vst [vmem:[#allocation5 + $0xa8] sm:$0xff] %v1016
  %1021 = vst [vmem:[#allocation5 + $0xb0] sm:$0xff] %v1017
  %1022 = vst [vmem:[#allocation5 + $0xb8] sm:$0xff] %v1018
  %v1023 = vld [vmem:[#allocation2 + $0x8] sm:$0xff]
  %v1024 = vld [vmem:[#allocation2 + $0x10] sm:$0xff]
  %v1025 = vld [vmem:[#allocation2 + $0x18] sm:$0xff]
  %v1026 = vld [vmem:[#allocation2 + $0x20] sm:$0xff]
  %v1027 = vld [vmem:[#allocation2 + $0x28] sm:$0xff]
  %v1028 = vsel %vm111, 1, 0
  %v1029 = vsel %vm112, 1, 0
  %v1030 = vsel %vm113, 1, 0
  %v1031 = vsel %vm114, 1, 0
  %vm1032 = vcmp.eq.s32.totalorder %v1028, 1
  %vm1033 = vcmp.eq.s32.totalorder %v1029, 1
  %vm1034 = vcmp.eq.s32.totalorder %v1030, 1
  %vm1035 = vcmp.eq.s32.totalorder %v1031, 1
  %1041 = vrot.lane.b32.xlu0 %v1023, 98
  %v1042 = vpop.permute.xlu0 %1041
  %1043 = vrot.lane.b32.xlu0 %v1024, 98
  %v1044 = vpop.permute.xlu0 %1043
  %1045 = vrot.lane.b32.xlu0 %v1025, 98
  %v1046 = vpop.permute.xlu0 %1045
  %1047 = vrot.lane.b32.xlu0 %v1026, 98
  %v1048 = vpop.permute.xlu0 %1047
  %1049 = vrot.lane.b32.xlu0 %v1027, 98
  %v1050 = vpop.permute.xlu0 %1049
  %vm1051 = vcmask 801792
  %v1052 = vsel %vm1051, %v1042, %v1044
  %v1053 = vsel %vm1051, %v1044, %v1046
  %v1054 = vsel %vm1051, %v1046, %v1048
  %v1055 = vsel %vm1051, %v1048, %v1050
  %v1060 = vsel %vm1032, %v1052, 0.0
  %v1061 = vsel %vm1033, %v1053, 0.0
  %v1062 = vsel %vm1034, %v1054, 0.0
  %v1063 = vsel %vm1035, %v1055, 0.0
  %1064 = vst [vmem:[#allocation5 + $0xc0] sm:$0xff] %v1060
  %1065 = vst [vmem:[#allocation5 + $0xc8] sm:$0xff] %v1061
  %1066 = vst [vmem:[#allocation5 + $0xd0] sm:$0xff] %v1062
  %1067 = vst [vmem:[#allocation5 + $0xd8] sm:$0xff] %v1063
  %v1068 = vld [vmem:[#allocation2 + $0x8] sm:$0xff]
  %v1069 = vld [vmem:[#allocation2 + $0x10] sm:$0xff]
  %v1070 = vld [vmem:[#allocation2 + $0x18] sm:$0xff]
  %v1071 = vld [vmem:[#allocation2 + $0x20] sm:$0xff]
  %v1072 = vld [vmem:[#allocation2 + $0x28] sm:$0xff]
  %v1073 = vsel %vm75, 1, 0
  %v1074 = vsel %vm76, 1, 0
  %v1075 = vsel %vm77, 1, 0
  %v1076 = vsel %vm78, 1, 0
  %vm1077 = vcmp.eq.s32.totalorder %v1073, 1
  %vm1078 = vcmp.eq.s32.totalorder %v1074, 1
  %vm1079 = vcmp.eq.s32.totalorder %v1075, 1
  %vm1080 = vcmp.eq.s32.totalorder %v1076, 1
  %1086 = vrot.lane.b32.xlu0 %v1068, 96
  %v1087 = vpop.permute.xlu0 %1086
  %1088 = vrot.lane.b32.xlu0 %v1069, 96
  %v1089 = vpop.permute.xlu0 %1088
  %1090 = vrot.lane.b32.xlu0 %v1070, 96
  %v1091 = vpop.permute.xlu0 %1090
  %1092 = vrot.lane.b32.xlu0 %v1071, 96
  %v1093 = vpop.permute.xlu0 %1092
  %1094 = vrot.lane.b32.xlu0 %v1072, 96
  %v1095 = vpop.permute.xlu0 %1094
  %vm1096 = vcmask 785408
  %v1097 = vsel %vm1096, %v1087, %v1089
  %v1098 = vsel %vm1096, %v1089, %v1091
  %v1099 = vsel %vm1096, %v1091, %v1093
  %v1100 = vsel %vm1096, %v1093, %v1095
  %v1105 = vsel %vm1077, %v1097, 0.0
  %v1106 = vsel %vm1078, %v1098, 0.0
  %v1107 = vsel %vm1079, %v1099, 0.0
  %v1108 = vsel %vm1080, %v1100, 0.0
  %1109 = vst [vmem:[#allocation5 + $0xe0] sm:$0xff] %v1105
  %1110 = vst [vmem:[#allocation5 + $0xe8] sm:$0xff] %v1106
  %1111 = vst [vmem:[#allocation5 + $0xf0] sm:$0xff] %v1107
  %1112 = vst [vmem:[#allocation5 + $0xf8] sm:$0xff] %v1108
  %v1113 = vld [vmem:[#allocation2 + $0x8] sm:$0xff]
  %v1114 = vld [vmem:[#allocation2 + $0x10] sm:$0xff]
  %v1115 = vld [vmem:[#allocation2 + $0x18] sm:$0xff]
  %v1116 = vld [vmem:[#allocation2 + $0x20] sm:$0xff]
  %v1117 = vld [vmem:[#allocation2 + $0x28] sm:$0xff]
  %v1118 = vsel %vm115, 1, 0
  %v1119 = vsel %vm116, 1, 0
  %v1120 = vsel %vm117, 1, 0
  %v1121 = vsel %vm118, 1, 0
  %vm1122 = vcmp.eq.s32.totalorder %v1118, 1
  %vm1123 = vcmp.eq.s32.totalorder %v1119, 1
  %vm1124 = vcmp.eq.s32.totalorder %v1120, 1
  %vm1125 = vcmp.eq.s32.totalorder %v1121, 1
  %1131 = vrot.lane.b32.xlu0 %v1113, 94
  %v1132 = vpop.permute.xlu0 %1131
  %1133 = vrot.lane.b32.xlu0 %v1114, 94
  %v1134 = vpop.permute.xlu0 %1133
  %1135 = vrot.lane.b32.xlu0 %v1115, 94
  %v1136 = vpop.permute.xlu0 %1135
  %1137 = vrot.lane.b32.xlu0 %v1116, 94
  %v1138 = vpop.permute.xlu0 %1137
  %1139 = vrot.lane.b32.xlu0 %v1117, 94
  %v1140 = vpop.permute.xlu0 %1139
  %vm1141 = vcmask 769024
  %v1142 = vsel %vm1141, %v1132, %v1134
  %v1143 = vsel %vm1141, %v1134, %v1136
  %v1144 = vsel %vm1141, %v1136, %v1138
  %v1145 = vsel %vm1141, %v1138, %v1140
  %v1150 = vsel %vm1122, %v1142, 0.0
  %v1151 = vsel %vm1123, %v1143, 0.0
  %v1152 = vsel %vm1124, %v1144, 0.0
  %v1153 = vsel %vm1125, %v1145, 0.0
  %1154 = vst [vmem:[#allocation5 + $0x100] sm:$0xff] %v1150
  %1155 = vst [vmem:[#allocation5 + $0x108] sm:$0xff] %v1151
  %1156 = vst [vmem:[#allocation5 + $0x110] sm:$0xff] %v1152
  %1157 = vst [vmem:[#allocation5 + $0x118] sm:$0xff] %v1153
  %v1158 = vld [vmem:[%s3] sm:$0xff]
  %v1159 = vld [vmem:[%s3 + $0x8] sm:$0xff]
  %v1160 = vld [vmem:[#allocation5] sm:$0xff]
  %v1161 = vld [vmem:[#allocation5 + $0x8] sm:$0xff]
  %v1162 = vld [vmem:[#allocation5 + $0x10] sm:$0xff]
  %v1163 = vld [vmem:[#allocation5 + $0x18] sm:$0xff]
  %v1164 = vld [vmem:[#allocation5 + $0x20] sm:$0xff]
  %v1165 = vld [vmem:[#allocation5 + $0x28] sm:$0xff]
  %v1166 = vld [vmem:[#allocation5 + $0x30] sm:$0xff]
  %v1167 = vld [vmem:[#allocation5 + $0x38] sm:$0xff]
  %v1168 = vld [vmem:[#allocation5 + $0x40] sm:$0xff]
  %v1169 = vld [vmem:[#allocation5 + $0x48] sm:$0xff]
  %v1170 = vld [vmem:[#allocation5 + $0x50] sm:$0xff]
  %v1171 = vld [vmem:[#allocation5 + $0x58] sm:$0xff]
  %v1172 = vld [vmem:[#allocation5 + $0x60] sm:$0xff]
  %v1173 = vld [vmem:[#allocation5 + $0x68] sm:$0xff]
  %v1174 = vld [vmem:[#allocation5 + $0x70] sm:$0xff]
  %v1175 = vld [vmem:[#allocation5 + $0x78] sm:$0xff]
  %v1176 = vld [vmem:[#allocation5 + $0x80] sm:$0xff]
  %v1177 = vld [vmem:[#allocation5 + $0x88] sm:$0xff]
  %v1178 = vld [vmem:[#allocation5 + $0x90] sm:$0xff]
  %v1179 = vld [vmem:[#allocation5 + $0x98] sm:$0xff]
  %v1180 = vld [vmem:[#allocation5 + $0xa0] sm:$0xff]
  %v1181 = vld [vmem:[#allocation5 + $0xa8] sm:$0xff]
  %v1182 = vld [vmem:[#allocation5 + $0xb0] sm:$0xff]
  %v1183 = vld [vmem:[#allocation5 + $0xb8] sm:$0xff]
  %v1184 = vld [vmem:[#allocation5 + $0xc0] sm:$0xff]
  %v1185 = vld [vmem:[#allocation5 + $0xc8] sm:$0xff]
  %v1186 = vld [vmem:[#allocation5 + $0xd0] sm:$0xff]
  %v1187 = vld [vmem:[#allocation5 + $0xd8] sm:$0xff]
  %v1188 = vld [vmem:[#allocation5 + $0xe0] sm:$0xff]
  %v1189 = vld [vmem:[#allocation5 + $0xe8] sm:$0xff]
  %v1190 = vld [vmem:[#allocation5 + $0xf0] sm:$0xff]
  %v1191 = vld [vmem:[#allocation5 + $0xf8] sm:$0xff]
  %v1192 = vld [vmem:[#allocation5 + $0x100] sm:$0xff]
  %v1193 = vld [vmem:[#allocation5 + $0x108] sm:$0xff]
  %v1194 = vld [vmem:[#allocation5 + $0x110] sm:$0xff]
  %v1195 = vld [vmem:[#allocation5 + $0x118] sm:$0xff]
  %v1196 = vld [vmem:[%s4] sm:$0xff]
  %v1197 = vld [vmem:[%s4 + $0x8] sm:$0xff]
  %1199 = vset.pattern.permute.xlu0 0
  %1200 = vperm.xlu0 %1199, %v1196
  %v1201 = vpop.permute.xlu0 %1200
  %1204 = vset.pattern.permute.xlu0 0
  %1205 = vperm.xlu0 %1204, %v1197
  %v1206 = vpop.permute.xlu0 %1205
  %v1209 = vsel %vm567, %v1158, 0
  %v1212 = vsel %vm567, %v1159, 0
  %1214 = vmatprep.subr.mxu0 %v1161
  %1215 = vmatpush1.msra.mxu0 %v1160
  %1216 = vmatprep.subr.mxu0 %v1165
  %1217 = vmatpush1.msra.mxu0 %v1164
  %1218 = vmatprep.subr.mxu0 %v1169
  %1219 = vmatpush1.msra.mxu0 %v1168
  %1220 = vmatprep.subr.mxu0 %v1173
  %1221 = vmatpush1.msra.mxu0 %v1172
  %1222 = vmatprep.subr.mxu0 %v1177
  %1223 = vmatpush1.msra.mxu0 %v1176
  %1224 = vmatprep.subr.mxu0 %v1181
  %1225 = vmatpush1.msra.mxu0 %v1180
  %1226 = vmatprep.subr.mxu0 %v1185
  %1227 = vmatpush1.msra.mxu0 %v1184
  %1228 = vmatprep.subr.mxu0 %v1189
  %1229 = vmatpush1.msra.mxu0 %v1188
  %1230 = vmatprep.subr.mxu0 %v1193
  %1231 = vmatpush1.msra.mxu0 %v1192
  %1232 = vmatprep.subr.mxu0 0.0
  %1233 = vmatpush1.msra.mxu0 0.0
  %1234 = vmatprep.subr.mxu0 0.0
  %1235 = vmatpush1.msra.mxu0 0.0
  %1236 = vmatprep.subr.mxu0 0.0
  %1237 = vmatpush1.msra.mxu0 0.0
  %1238 = vmatprep.subr.mxu0 0.0
  %1239 = vmatpush1.msra.mxu0 0.0
  %1240 = vmatprep.subr.mxu0 0.0
  %1241 = vmatpush1.msra.mxu0 0.0
  %1242 = vmatprep.subr.mxu0 0.0
  %1243 = vmatpush1.msra.mxu0 0.0
  %1244 = vmatprep.subr.mxu0 0.0
  %1245 = vmatpush1.msra.mxu0 0.0
  %1246 = vmatprep.subr.mxu0 0.0
  %1247 = vmatpush1.msra.mxu0 0.0
  %1248 = vmatprep.subr.mxu0 0.0
  %1249 = vmatpush1.msra.mxu0 0.0
  %1250 = vmatprep.subr.mxu0 0.0
  %1251 = vmatpush1.msra.mxu0 0.0
  %1252 = vmatprep.subr.mxu0 0.0
  %1253 = vmatpush1.msra.mxu0 0.0
  %1254 = vmatprep.subr.mxu0 0.0
  %1255 = vmatpush1.msra.mxu0 0.0
  %1256 = vmatprep.subr.mxu0 0.0
  %1257 = vmatpush1.msra.mxu0 0.0
  %1258 = vmatprep.subr.mxu0 0.0
  %1259 = vmatpush1.msra.mxu0 0.0
  %1260 = vmatprep.subr.mxu0 0.0
  %1261 = vmatpush1.msra.mxu0 0.0
  %1262 = vmatprep.subr.mxu0 0.0
  %1263 = vmatpush1.msra.mxu0 0.0
  %1264 = vmatprep.subr.mxu0 0.0
  %1265 = vmatpush1.msra.mxu0 0.0
  %1266 = vmatprep.subr.mxu0 0.0
  %1267 = vmatpush1.msra.mxu0 0.0
  %1268 = vmatprep.subr.mxu0 0.0
  %1269 = vmatpush1.msra.mxu0 0.0
  %1270 = vmatprep.subr.mxu0 0.0
  %1271 = vmatpush1.msra.mxu0 0.0
  %1272 = vmatprep.subr.mxu0 0.0
  %1273 = vmatpush1.msra.mxu0 0.0
  %1274 = vmatprep.subr.mxu0 0.0
  %1275 = vmatpush1.msra.mxu0 0.0
  %1276 = vmatprep.subr.mxu0 0.0
  %1277 = vmatpush1.msra.mxu0 0.0
  %1278 = vmatprep.mubr.f32.mxu0 0.0
  %1279 = vmatmul.mubr.f32.gmra.mrb[0].mxu0 %v1209
  %v1280 = vpop.f32.mrb[0].mxu0
  %v1281 = vadd.f32 %v1201, %v1280
  %v1282 = vpop.f32.mrb[0].mxu0
  %v1283 = vadd.f32 %v1201, %v1282
  %1284 = vmatprep.mubr.f32.mxu0 0.0
  %1285 = vmatmul.mubr.f32.gmra.mrb[0].mxu0 %v1212
  %v1286 = vpop.f32.mrb[0].mxu0
  %v1287 = vadd.f32 %v1206, %v1286
  %v1288 = vpop.f32.mrb[0].mxu0
  %v1289 = vadd.f32 %v1206, %v1288
  %1290 = vdwg.mxu0
  %1291 = vmatprep.subr.mxu0 %v1163
  %1292 = vmatpush1.msra.mxu0 %v1162
  %1293 = vmatprep.subr.mxu0 %v1167
  %1294 = vmatpush1.msra.mxu0 %v1166
  %1295 = vmatprep.subr.mxu0 %v1171
  %1296 = vmatpush1.msra.mxu0 %v1170
  %1297 = vmatprep.subr.mxu0 %v1175
  %1298 = vmatpush1.msra.mxu0 %v1174
  %1299 = vmatprep.subr.mxu0 %v1179
  %1300 = vmatpush1.msra.mxu0 %v1178
  %1301 = vmatprep.subr.mxu0 %v1183
  %1302 = vmatpush1.msra.mxu0 %v1182
  %1303 = vmatprep.subr.mxu0 %v1187
  %1304 = vmatpush1.msra.mxu0 %v1186
  %1305 = vmatprep.subr.mxu0 %v1191
  %1306 = vmatpush1.msra.mxu0 %v1190
  %1307 = vmatprep.subr.mxu0 %v1195
  %1308 = vmatpush1.msra.mxu0 %v1194
  %1309 = vmatprep.subr.mxu0 0.0
  %1310 = vmatpush1.msra.mxu0 0.0
  %1311 = vmatprep.subr.mxu0 0.0
  %1312 = vmatpush1.msra.mxu0 0.0
  %1313 = vmatprep.subr.mxu0 0.0
  %1314 = vmatpush1.msra.mxu0 0.0
  %1315 = vmatprep.subr.mxu0 0.0
  %1316 = vmatpush1.msra.mxu0 0.0
  %1317 = vmatprep.subr.mxu0 0.0
  %1318 = vmatpush1.msra.mxu0 0.0
  %1319 = vmatprep.subr.mxu0 0.0
  %1320 = vmatpush1.msra.mxu0 0.0
  %1321 = vmatprep.subr.mxu0 0.0
  %1322 = vmatpush1.msra.mxu0 0.0
  %1323 = vmatprep.subr.mxu0 0.0
  %1324 = vmatpush1.msra.mxu0 0.0
  %1325 = vmatprep.subr.mxu0 0.0
  %1326 = vmatpush1.msra.mxu0 0.0
  %1327 = vmatprep.subr.mxu0 0.0
  %1328 = vmatpush1.msra.mxu0 0.0
  %1329 = vmatprep.subr.mxu0 0.0
  %1330 = vmatpush1.msra.mxu0 0.0
  %1331 = vmatprep.subr.mxu0 0.0
  %1332 = vmatpush1.msra.mxu0 0.0
  %1333 = vmatprep.subr.mxu0 0.0
  %1334 = vmatpush1.msra.mxu0 0.0
  %1335 = vmatprep.subr.mxu0 0.0
  %1336 = vmatpush1.msra.mxu0 0.0
  %1337 = vmatprep.subr.mxu0 0.0
  %1338 = vmatpush1.msra.mxu0 0.0
  %1339 = vmatprep.subr.mxu0 0.0
  %1340 = vmatpush1.msra.mxu0 0.0
  %1341 = vmatprep.subr.mxu0 0.0
  %1342 = vmatpush1.msra.mxu0 0.0
  %1343 = vmatprep.subr.mxu0 0.0
  %1344 = vmatpush1.msra.mxu0 0.0
  %1345 = vmatprep.subr.mxu0 0.0
  %1346 = vmatpush1.msra.mxu0 0.0
  %1347 = vmatprep.subr.mxu0 0.0
  %1348 = vmatpush1.msra.mxu0 0.0
  %1349 = vmatprep.subr.mxu0 0.0
  %1350 = vmatpush1.msra.mxu0 0.0
  %1351 = vmatprep.subr.mxu0 0.0
  %1352 = vmatpush1.msra.mxu0 0.0
  %1353 = vmatprep.subr.mxu0 0.0
  %1354 = vmatpush1.msra.mxu0 0.0
  %1355 = vmatprep.mubr.f32.mxu0 0.0
  %1356 = vmatmul.mubr.f32.gmra.mrb[0].mxu0 %v1209
  %v1357 = vpop.f32.mrb[0].mxu0
  %v1358 = vadd.f32 %v1201, %v1357
  %v1359 = vpop.f32.mrb[0].mxu0
  %v1360 = vadd.f32 %v1201, %v1359
  %1361 = vmatprep.mubr.f32.mxu0 0.0
  %1362 = vmatmul.mubr.f32.gmra.mrb[0].mxu0 %v1212
  %v1363 = vpop.f32.mrb[0].mxu0
  %v1364 = vadd.f32 %v1206, %v1363
  %v1365 = vpop.f32.mrb[0].mxu0
  %v1366 = vadd.f32 %v1206, %v1365
  %1367 = vdwg.mxu0
  %v1368 = vmax.f32 %v1281, 0.0
  %v1369 = vmax.f32 %v1283, 0.0
  %v1370 = vmax.f32 %v1358, 0.0
  %v1371 = vmax.f32 %v1360, 0.0
  %v1372 = vmax.f32 %v1287, 0.0
  %v1373 = vmax.f32 %v1289, 0.0
  %v1374 = vmax.f32 %v1364, 0.0
  %v1375 = vmax.f32 %v1366, 0.0
  %1376 = vst [vmem:[#allocation3 + $0x8] sm:$0xff] %v1368
  %1377 = vst [vmem:[#allocation3 + $0x10] sm:$0xff] %v1369
  %1378 = vst [vmem:[#allocation3 + $0x18] sm:$0xff] %v1370
  %1379 = vst [vmem:[#allocation3 + $0x20] sm:$0xff] %v1371
  %1380 = vst [vmem:[#allocation3 + $0x38] sm:$0xff] %v1372
  %1381 = vst [vmem:[#allocation3 + $0x40] sm:$0xff] %v1373
  %1382 = vst [vmem:[#allocation3 + $0x48] sm:$0xff] %v1374
  %1383 = vst [vmem:[#allocation3 + $0x50] sm:$0xff] %v1375
  %v1384 = vld [vmem:[#allocation3] sm:$0xff]
  %v1385 = vld [vmem:[#allocation3 + $0x8] sm:$0xff]
  %v1386 = vld [vmem:[#allocation3 + $0x10] sm:$0xff]
  %v1387 = vld [vmem:[#allocation3 + $0x18] sm:$0xff]
  %v1388 = vld [vmem:[#allocation3 + $0x20] sm:$0xff]
  %v1389 = vld [vmem:[#allocation3 + $0x30] sm:$0xff]
  %v1390 = vld [vmem:[#allocation3 + $0x38] sm:$0xff]
  %v1391 = vld [vmem:[#allocation3 + $0x40] sm:$0xff]
  %v1392 = vld [vmem:[#allocation3 + $0x48] sm:$0xff]
  %v1393 = vld [vmem:[#allocation3 + $0x50] sm:$0xff]
  %1404 = vrot.lane.b32.xlu0 %v1384, 17
  %v1405 = vpop.permute.xlu0 %1404
  %1406 = vrot.lane.b32.xlu0 %v1385, 17
  %v1407 = vpop.permute.xlu0 %1406
  %1408 = vrot.lane.b32.xlu0 %v1386, 17
  %v1409 = vpop.permute.xlu0 %1408
  %1410 = vrot.lane.b32.xlu0 %v1387, 17
  %v1411 = vpop.permute.xlu0 %1410
  %1412 = vrot.lane.b32.xlu0 %v1388, 17
  %v1413 = vpop.permute.xlu0 %1412
  %1414 = vrot.lane.b32.xlu0 %v1389, 17
  %v1415 = vpop.permute.xlu0 %1414
  %1416 = vrot.lane.b32.xlu0 %v1390, 17
  %v1417 = vpop.permute.xlu0 %1416
  %1418 = vrot.lane.b32.xlu0 %v1391, 17
  %v1419 = vpop.permute.xlu0 %1418
  %1420 = vrot.lane.b32.xlu0 %v1392, 17
  %v1421 = vpop.permute.xlu0 %1420
  %1422 = vrot.lane.b32.xlu0 %v1393, 17
  %v1423 = vpop.permute.xlu0 %1422
  %v1424 = vsel %vm163, %v1405, %v1407
  %v1425 = vsel %vm163, %v1407, %v1409
  %v1426 = vsel %vm163, %v1409, %v1411
  %v1427 = vsel %vm163, %v1411, %v1413
  %v1428 = vsel %vm163, %v1415, %v1417
  %v1429 = vsel %vm163, %v1417, %v1419
  %v1430 = vsel %vm163, %v1419, %v1421
  %v1431 = vsel %vm163, %v1421, %v1423
  %v1440 = vsel %vm144, %v1424, 0.0
  %v1441 = vsel %vm145, %v1425, 0.0
  %v1442 = vsel %vm146, %v1426, 0.0
  %v1443 = vsel %vm147, %v1427, 0.0
  %v1444 = vsel %vm144, %v1428, 0.0
  %v1445 = vsel %vm145, %v1429, 0.0
  %v1446 = vsel %vm146, %v1430, 0.0
  %v1447 = vsel %vm147, %v1431, 0.0
  %1448 = vst [vmem:[#allocation6] sm:$0xff] %v1440
  %1449 = vst [vmem:[#allocation6 + $0x8] sm:$0xff] %v1441
  %1450 = vst [vmem:[#allocation6 + $0x10] sm:$0xff] %v1442
  %1451 = vst [vmem:[#allocation6 + $0x18] sm:$0xff] %v1443
  %1452 = vst [vmem:[#allocation6 + $0x20] sm:$0xff] %v1444
  %1453 = vst [vmem:[#allocation6 + $0x28] sm:$0xff] %v1445
  %1454 = vst [vmem:[#allocation6 + $0x30] sm:$0xff] %v1446
  %1455 = vst [vmem:[#allocation6 + $0x38] sm:$0xff] %v1447
  %v1456 = vld [vmem:[#allocation3] sm:$0xff]
  %v1457 = vld [vmem:[#allocation3 + $0x8] sm:$0xff]
  %v1458 = vld [vmem:[#allocation3 + $0x10] sm:$0xff]
  %v1459 = vld [vmem:[#allocation3 + $0x18] sm:$0xff]
  %v1460 = vld [vmem:[#allocation3 + $0x20] sm:$0xff]
  %v1461 = vld [vmem:[#allocation3 + $0x30] sm:$0xff]
  %v1462 = vld [vmem:[#allocation3 + $0x38] sm:$0xff]
  %v1463 = vld [vmem:[#allocation3 + $0x40] sm:$0xff]
  %v1464 = vld [vmem:[#allocation3 + $0x48] sm:$0xff]
  %v1465 = vld [vmem:[#allocation3 + $0x50] sm:$0xff]
  %1476 = vrot.lane.b32.xlu0 %v1456, 16
  %v1477 = vpop.permute.xlu0 %1476
  %1478 = vrot.lane.b32.xlu0 %v1457, 16
  %v1479 = vpop.permute.xlu0 %1478
  %1480 = vrot.lane.b32.xlu0 %v1458, 16
  %v1481 = vpop.permute.xlu0 %1480
  %1482 = vrot.lane.b32.xlu0 %v1459, 16
  %v1483 = vpop.permute.xlu0 %1482
  %1484 = vrot.lane.b32.xlu0 %v1460, 16
  %v1485 = vpop.permute.xlu0 %1484
  %1486 = vrot.lane.b32.xlu0 %v1461, 16
  %v1487 = vpop.permute.xlu0 %1486
  %1488 = vrot.lane.b32.xlu0 %v1462, 16
  %v1489 = vpop.permute.xlu0 %1488
  %1490 = vrot.lane.b32.xlu0 %v1463, 16
  %v1491 = vpop.permute.xlu0 %1490
  %1492 = vrot.lane.b32.xlu0 %v1464, 16
  %v1493 = vpop.permute.xlu0 %1492
  %1494 = vrot.lane.b32.xlu0 %v1465, 16
  %v1495 = vpop.permute.xlu0 %1494
  %v1496 = vsel %vm208, %v1477, %v1479
  %v1497 = vsel %vm208, %v1479, %v1481
  %v1498 = vsel %vm208, %v1481, %v1483
  %v1499 = vsel %vm208, %v1483, %v1485
  %v1500 = vsel %vm208, %v1487, %v1489
  %v1501 = vsel %vm208, %v1489, %v1491
  %v1502 = vsel %vm208, %v1491, %v1493
  %v1503 = vsel %vm208, %v1493, %v1495
  %v1512 = vsel %vm189, %v1496, 0.0
  %v1513 = vsel %vm190, %v1497, 0.0
  %v1514 = vsel %vm191, %v1498, 0.0
  %v1515 = vsel %vm192, %v1499, 0.0
  %v1516 = vsel %vm189, %v1500, 0.0
  %v1517 = vsel %vm190, %v1501, 0.0
  %v1518 = vsel %vm191, %v1502, 0.0
  %v1519 = vsel %vm192, %v1503, 0.0
  %1520 = vst [vmem:[#allocation6 + $0x40] sm:$0xff] %v1512
  %1521 = vst [vmem:[#allocation6 + $0x48] sm:$0xff] %v1513
  %1522 = vst [vmem:[#allocation6 + $0x50] sm:$0xff] %v1514
  %1523 = vst [vmem:[#allocation6 + $0x58] sm:$0xff] %v1515
  %1524 = vst [vmem:[#allocation6 + $0x60] sm:$0xff] %v1516
  %1525 = vst [vmem:[#allocation6 + $0x68] sm:$0xff] %v1517
  %1526 = vst [vmem:[#allocation6 + $0x70] sm:$0xff] %v1518
  %1527 = vst [vmem:[#allocation6 + $0x78] sm:$0xff] %v1519
  %v1528 = vld [vmem:[#allocation3] sm:$0xff]
  %v1529 = vld [vmem:[#allocation3 + $0x8] sm:$0xff]
  %v1530 = vld [vmem:[#allocation3 + $0x10] sm:$0xff]
  %v1531 = vld [vmem:[#allocation3 + $0x18] sm:$0xff]
  %v1532 = vld [vmem:[#allocation3 + $0x20] sm:$0xff]
  %v1533 = vld [vmem:[#allocation3 + $0x30] sm:$0xff]
  %v1534 = vld [vmem:[#allocation3 + $0x38] sm:$0xff]
  %v1535 = vld [vmem:[#allocation3 + $0x40] sm:$0xff]
  %v1536 = vld [vmem:[#allocation3 + $0x48] sm:$0xff]
  %v1537 = vld [vmem:[#allocation3 + $0x50] sm:$0xff]
  %1548 = vrot.lane.b32.xlu0 %v1528, 15
  %v1549 = vpop.permute.xlu0 %1548
  %1550 = vrot.lane.b32.xlu0 %v1529, 15
  %v1551 = vpop.permute.xlu0 %1550
  %1552 = vrot.lane.b32.xlu0 %v1530, 15
  %v1553 = vpop.permute.xlu0 %1552
  %1554 = vrot.lane.b32.xlu0 %v1531, 15
  %v1555 = vpop.permute.xlu0 %1554
  %1556 = vrot.lane.b32.xlu0 %v1532, 15
  %v1557 = vpop.permute.xlu0 %1556
  %1558 = vrot.lane.b32.xlu0 %v1533, 15
  %v1559 = vpop.permute.xlu0 %1558
  %1560 = vrot.lane.b32.xlu0 %v1534, 15
  %v1561 = vpop.permute.xlu0 %1560
  %1562 = vrot.lane.b32.xlu0 %v1535, 15
  %v1563 = vpop.permute.xlu0 %1562
  %1564 = vrot.lane.b32.xlu0 %v1536, 15
  %v1565 = vpop.permute.xlu0 %1564
  %1566 = vrot.lane.b32.xlu0 %v1537, 15
  %v1567 = vpop.permute.xlu0 %1566
  %v1568 = vsel %vm253, %v1549, %v1551
  %v1569 = vsel %vm253, %v1551, %v1553
  %v1570 = vsel %vm253, %v1553, %v1555
  %v1571 = vsel %vm253, %v1555, %v1557
  %v1572 = vsel %vm253, %v1559, %v1561
  %v1573 = vsel %vm253, %v1561, %v1563
  %v1574 = vsel %vm253, %v1563, %v1565
  %v1575 = vsel %vm253, %v1565, %v1567
  %v1584 = vsel %vm234, %v1568, 0.0
  %v1585 = vsel %vm235, %v1569, 0.0
  %v1586 = vsel %vm236, %v1570, 0.0
  %v1587 = vsel %vm237, %v1571, 0.0
  %v1588 = vsel %vm234, %v1572, 0.0
  %v1589 = vsel %vm235, %v1573, 0.0
  %v1590 = vsel %vm236, %v1574, 0.0
  %v1591 = vsel %vm237, %v1575, 0.0
  %1592 = vst [vmem:[#allocation6 + $0x80] sm:$0xff] %v1584
  %1593 = vst [vmem:[#allocation6 + $0x88] sm:$0xff] %v1585
  %1594 = vst [vmem:[#allocation6 + $0x90] sm:$0xff] %v1586
  %1595 = vst [vmem:[#allocation6 + $0x98] sm:$0xff] %v1587
  %1596 = vst [vmem:[#allocation6 + $0xa0] sm:$0xff] %v1588
  %1597 = vst [vmem:[#allocation6 + $0xa8] sm:$0xff] %v1589
  %1598 = vst [vmem:[#allocation6 + $0xb0] sm:$0xff] %v1590
  %1599 = vst [vmem:[#allocation6 + $0xb8] sm:$0xff] %v1591
  %v1600 = vld [vmem:[#allocation3] sm:$0xff]
  %v1601 = vld [vmem:[#allocation3 + $0x8] sm:$0xff]
  %v1602 = vld [vmem:[#allocation3 + $0x10] sm:$0xff]
  %v1603 = vld [vmem:[#allocation3 + $0x18] sm:$0xff]
  %v1604 = vld [vmem:[#allocation3 + $0x20] sm:$0xff]
  %v1605 = vld [vmem:[#allocation3 + $0x30] sm:$0xff]
  %v1606 = vld [vmem:[#allocation3 + $0x38] sm:$0xff]
  %v1607 = vld [vmem:[#allocation3 + $0x40] sm:$0xff]
  %v1608 = vld [vmem:[#allocation3 + $0x48] sm:$0xff]
  %v1609 = vld [vmem:[#allocation3 + $0x50] sm:$0xff]
  %1620 = vrot.lane.b32.xlu0 %v1600, 1
  %v1621 = vpop.permute.xlu0 %1620
  %1622 = vrot.lane.b32.xlu0 %v1601, 1
  %v1623 = vpop.permute.xlu0 %1622
  %1624 = vrot.lane.b32.xlu0 %v1602, 1
  %v1625 = vpop.permute.xlu0 %1624
  %1626 = vrot.lane.b32.xlu0 %v1603, 1
  %v1627 = vpop.permute.xlu0 %1626
  %1628 = vrot.lane.b32.xlu0 %v1604, 1
  %v1629 = vpop.permute.xlu0 %1628
  %1630 = vrot.lane.b32.xlu0 %v1605, 1
  %v1631 = vpop.permute.xlu0 %1630
  %1632 = vrot.lane.b32.xlu0 %v1606, 1
  %v1633 = vpop.permute.xlu0 %1632
  %1634 = vrot.lane.b32.xlu0 %v1607, 1
  %v1635 = vpop.permute.xlu0 %1634
  %1636 = vrot.lane.b32.xlu0 %v1608, 1
  %v1637 = vpop.permute.xlu0 %1636
  %1638 = vrot.lane.b32.xlu0 %v1609, 1
  %v1639 = vpop.permute.xlu0 %1638
  %v1640 = vsel %vm298, %v1621, %v1623
  %v1641 = vsel %vm298, %v1623, %v1625
  %v1642 = vsel %vm298, %v1625, %v1627
  %v1643 = vsel %vm298, %v1627, %v1629
  %v1644 = vsel %vm298, %v1631, %v1633
  %v1645 = vsel %vm298, %v1633, %v1635
  %v1646 = vsel %vm298, %v1635, %v1637
  %v1647 = vsel %vm298, %v1637, %v1639
  %v1656 = vsel %vm279, %v1640, 0.0
  %v1657 = vsel %vm280, %v1641, 0.0
  %v1658 = vsel %vm281, %v1642, 0.0
  %v1659 = vsel %vm282, %v1643, 0.0
  %v1660 = vsel %vm279, %v1644, 0.0
  %v1661 = vsel %vm280, %v1645, 0.0
  %v1662 = vsel %vm281, %v1646, 0.0
  %v1663 = vsel %vm282, %v1647, 0.0
  %1664 = vst [vmem:[#allocation6 + $0xc0] sm:$0xff] %v1656
  %1665 = vst [vmem:[#allocation6 + $0xc8] sm:$0xff] %v1657
  %1666 = vst [vmem:[#allocation6 + $0xd0] sm:$0xff] %v1658
  %1667 = vst [vmem:[#allocation6 + $0xd8] sm:$0xff] %v1659
  %1668 = vst [vmem:[#allocation6 + $0xe0] sm:$0xff] %v1660
  %1669 = vst [vmem:[#allocation6 + $0xe8] sm:$0xff] %v1661
  %1670 = vst [vmem:[#allocation6 + $0xf0] sm:$0xff] %v1662
  %1671 = vst [vmem:[#allocation6 + $0xf8] sm:$0xff] %v1663
  %v1672 = vld [vmem:[#allocation3 + $0x8] sm:$0xff]
  %v1673 = vld [vmem:[#allocation3 + $0x10] sm:$0xff]
  %v1674 = vld [vmem:[#allocation3 + $0x18] sm:$0xff]
  %v1675 = vld [vmem:[#allocation3 + $0x20] sm:$0xff]
  %v1676 = vld [vmem:[#allocation3 + $0x38] sm:$0xff]
  %v1677 = vld [vmem:[#allocation3 + $0x40] sm:$0xff]
  %v1678 = vld [vmem:[#allocation3 + $0x48] sm:$0xff]
  %v1679 = vld [vmem:[#allocation3 + $0x50] sm:$0xff]
  %1680 = vst [vmem:[#allocation6 + $0x100] sm:$0xff] %v1672
  %1681 = vst [vmem:[#allocation6 + $0x108] sm:$0xff] %v1673
  %1682 = vst [vmem:[#allocation6 + $0x110] sm:$0xff] %v1674
  %1683 = vst [vmem:[#allocation6 + $0x118] sm:$0xff] %v1675
  %1684 = vst [vmem:[#allocation6 + $0x120] sm:$0xff] %v1676
  %1685 = vst [vmem:[#allocation6 + $0x128] sm:$0xff] %v1677
  %1686 = vst [vmem:[#allocation6 + $0x130] sm:$0xff] %v1678
  %1687 = vst [vmem:[#allocation6 + $0x138] sm:$0xff] %v1679
  %v1688 = vld [vmem:[#allocation3 + $0x8] sm:$0xff]
  %v1689 = vld [vmem:[#allocation3 + $0x10] sm:$0xff]
  %v1690 = vld [vmem:[#allocation3 + $0x18] sm:$0xff]
  %v1691 = vld [vmem:[#allocation3 + $0x20] sm:$0xff]
  %v1692 = vld [vmem:[#allocation3 + $0x28] sm:$0xff]
  %v1693 = vld [vmem:[#allocation3 + $0x38] sm:$0xff]
  %v1694 = vld [vmem:[#allocation3 + $0x40] sm:$0xff]
  %v1695 = vld [vmem:[#allocation3 + $0x48] sm:$0xff]
  %v1696 = vld [vmem:[#allocation3 + $0x50] sm:$0xff]
  %v1697 = vld [vmem:[#allocation3 + $0x58] sm:$0xff]
  %1708 = vrot.lane.b32.xlu0 %v1688, 127
  %v1709 = vpop.permute.xlu0 %1708
  %1710 = vrot.lane.b32.xlu0 %v1689, 127
  %v1711 = vpop.permute.xlu0 %1710
  %1712 = vrot.lane.b32.xlu0 %v1690, 127
  %v1713 = vpop.permute.xlu0 %1712
  %1714 = vrot.lane.b32.xlu0 %v1691, 127
  %v1715 = vpop.permute.xlu0 %1714
  %1716 = vrot.lane.b32.xlu0 %v1692, 127
  %v1717 = vpop.permute.xlu0 %1716
  %1718 = vrot.lane.b32.xlu0 %v1693, 127
  %v1719 = vpop.permute.xlu0 %1718
  %1720 = vrot.lane.b32.xlu0 %v1694, 127
  %v1721 = vpop.permute.xlu0 %1720
  %1722 = vrot.lane.b32.xlu0 %v1695, 127
  %v1723 = vpop.permute.xlu0 %1722
  %1724 = vrot.lane.b32.xlu0 %v1696, 127
  %v1725 = vpop.permute.xlu0 %1724
  %1726 = vrot.lane.b32.xlu0 %v1697, 127
  %v1727 = vpop.permute.xlu0 %1726
  %v1728 = vsel %vm351, %v1709, %v1711
  %v1729 = vsel %vm351, %v1711, %v1713
  %v1730 = vsel %vm351, %v1713, %v1715
  %v1731 = vsel %vm351, %v1715, %v1717
  %v1732 = vsel %vm351, %v1719, %v1721
  %v1733 = vsel %vm351, %v1721, %v1723
  %v1734 = vsel %vm351, %v1723, %v1725
  %v1735 = vsel %vm351, %v1725, %v1727
  %v1744 = vsel %vm332, %v1728, 0.0
  %v1745 = vsel %vm333, %v1729, 0.0
  %v1746 = vsel %vm334, %v1730, 0.0
  %v1747 = vsel %vm335, %v1731, 0.0
  %v1748 = vsel %vm332, %v1732, 0.0
  %v1749 = vsel %vm333, %v1733, 0.0
  %v1750 = vsel %vm334, %v1734, 0.0
  %v1751 = vsel %vm335, %v1735, 0.0
  %1752 = vst [vmem:[#allocation6 + $0x140] sm:$0xff] %v1744
  %1753 = vst [vmem:[#allocation6 + $0x148] sm:$0xff] %v1745
  %1754 = vst [vmem:[#allocation6 + $0x150] sm:$0xff] %v1746
  %1755 = vst [vmem:[#allocation6 + $0x158] sm:$0xff] %v1747
  %1756 = vst [vmem:[#allocation6 + $0x160] sm:$0xff] %v1748
  %1757 = vst [vmem:[#allocation6 + $0x168] sm:$0xff] %v1749
  %1758 = vst [vmem:[#allocation6 + $0x170] sm:$0xff] %v1750
  %1759 = vst [vmem:[#allocation6 + $0x178] sm:$0xff] %v1751
  %v1760 = vld [vmem:[#allocation3 + $0x8] sm:$0xff]
  %v1761 = vld [vmem:[#allocation3 + $0x10] sm:$0xff]
  %v1762 = vld [vmem:[#allocation3 + $0x18] sm:$0xff]
  %v1763 = vld [vmem:[#allocation3 + $0x20] sm:$0xff]
  %v1764 = vld [vmem:[#allocation3 + $0x28] sm:$0xff]
  %v1765 = vld [vmem:[#allocation3 + $0x38] sm:$0xff]
  %v1766 = vld [vmem:[#allocation3 + $0x40] sm:$0xff]
  %v1767 = vld [vmem:[#allocation3 + $0x48] sm:$0xff]
  %v1768 = vld [vmem:[#allocation3 + $0x50] sm:$0xff]
  %v1769 = vld [vmem:[#allocation3 + $0x58] sm:$0xff]
  %1780 = vrot.lane.b32.xlu0 %v1760, 113
  %v1781 = vpop.permute.xlu0 %1780
  %1782 = vrot.lane.b32.xlu0 %v1761, 113
  %v1783 = vpop.permute.xlu0 %1782
  %1784 = vrot.lane.b32.xlu0 %v1762, 113
  %v1785 = vpop.permute.xlu0 %1784
  %1786 = vrot.lane.b32.xlu0 %v1763, 113
  %v1787 = vpop.permute.xlu0 %1786
  %1788 = vrot.lane.b32.xlu0 %v1764, 113
  %v1789 = vpop.permute.xlu0 %1788
  %1790 = vrot.lane.b32.xlu0 %v1765, 113
  %v1791 = vpop.permute.xlu0 %1790
  %1792 = vrot.lane.b32.xlu0 %v1766, 113
  %v1793 = vpop.permute.xlu0 %1792
  %1794 = vrot.lane.b32.xlu0 %v1767, 113
  %v1795 = vpop.permute.xlu0 %1794
  %1796 = vrot.lane.b32.xlu0 %v1768, 113
  %v1797 = vpop.permute.xlu0 %1796
  %1798 = vrot.lane.b32.xlu0 %v1769, 113
  %v1799 = vpop.permute.xlu0 %1798
  %v1800 = vsel %vm396, %v1781, %v1783
  %v1801 = vsel %vm396, %v1783, %v1785
  %v1802 = vsel %vm396, %v1785, %v1787
  %v1803 = vsel %vm396, %v1787, %v1789
  %v1804 = vsel %vm396, %v1791, %v1793
  %v1805 = vsel %vm396, %v1793, %v1795
  %v1806 = vsel %vm396, %v1795, %v1797
  %v1807 = vsel %vm396, %v1797, %v1799
  %v1816 = vsel %vm377, %v1800, 0.0
  %v1817 = vsel %vm378, %v1801, 0.0
  %v1818 = vsel %vm379, %v1802, 0.0
  %v1819 = vsel %vm380, %v1803, 0.0
  %v1820 = vsel %vm377, %v1804, 0.0
  %v1821 = vsel %vm378, %v1805, 0.0
  %v1822 = vsel %vm379, %v1806, 0.0
  %v1823 = vsel %vm380, %v1807, 0.0
  %1824 = vst [vmem:[#allocation6 + $0x180] sm:$0xff] %v1816
  %1825 = vst [vmem:[#allocation6 + $0x188] sm:$0xff] %v1817
  %1826 = vst [vmem:[#allocation6 + $0x190] sm:$0xff] %v1818
  %1827 = vst [vmem:[#allocation6 + $0x198] sm:$0xff] %v1819
  %1828 = vst [vmem:[#allocation6 + $0x1a0] sm:$0xff] %v1820
  %1829 = vst [vmem:[#allocation6 + $0x1a8] sm:$0xff] %v1821
  %1830 = vst [vmem:[#allocation6 + $0x1b0] sm:$0xff] %v1822
  %1831 = vst [vmem:[#allocation6 + $0x1b8] sm:$0xff] %v1823
  %v1832 = vld [vmem:[#allocation3 + $0x8] sm:$0xff]
  %v1833 = vld [vmem:[#allocation3 + $0x10] sm:$0xff]
  %v1834 = vld [vmem:[#allocation3 + $0x18] sm:$0xff]
  %v1835 = vld [vmem:[#allocation3 + $0x20] sm:$0xff]
  %v1836 = vld [vmem:[#allocation3 + $0x28] sm:$0xff]
  %v1837 = vld [vmem:[#allocation3 + $0x38] sm:$0xff]
  %v1838 = vld [vmem:[#allocation3 + $0x40] sm:$0xff]
  %v1839 = vld [vmem:[#allocation3 + $0x48] sm:$0xff]
  %v1840 = vld [vmem:[#allocation3 + $0x50] sm:$0xff]
  %v1841 = vld [vmem:[#allocation3 + $0x58] sm:$0xff]
  %1852 = vrot.lane.b32.xlu0 %v1832, 112
  %v1853 = vpop.permute.xlu0 %1852
  %1854 = vrot.lane.b32.xlu0 %v1833, 112
  %v1855 = vpop.permute.xlu0 %1854
  %1856 = vrot.lane.b32.xlu0 %v1834, 112
  %v1857 = vpop.permute.xlu0 %1856
  %1858 = vrot.lane.b32.xlu0 %v1835, 112
  %v1859 = vpop.permute.xlu0 %1858
  %1860 = vrot.lane.b32.xlu0 %v1836, 112
  %v1861 = vpop.permute.xlu0 %1860
  %1862 = vrot.lane.b32.xlu0 %v1837, 112
  %v1863 = vpop.permute.xlu0 %1862
  %1864 = vrot.lane.b32.xlu0 %v1838, 112
  %v1865 = vpop.permute.xlu0 %1864
  %1866 = vrot.lane.b32.xlu0 %v1839, 112
  %v1867 = vpop.permute.xlu0 %1866
  %1868 = vrot.lane.b32.xlu0 %v1840, 112
  %v1869 = vpop.permute.xlu0 %1868
  %1870 = vrot.lane.b32.xlu0 %v1841, 112
  %v1871 = vpop.permute.xlu0 %1870
  %v1872 = vsel %vm441, %v1853, %v1855
  %v1873 = vsel %vm441, %v1855, %v1857
  %v1874 = vsel %vm441, %v1857, %v1859
  %v1875 = vsel %vm441, %v1859, %v1861
  %v1876 = vsel %vm441, %v1863, %v1865
  %v1877 = vsel %vm441, %v1865, %v1867
  %v1878 = vsel %vm441, %v1867, %v1869
  %v1879 = vsel %vm441, %v1869, %v1871
  %v1888 = vsel %vm422, %v1872, 0.0
  %v1889 = vsel %vm423, %v1873, 0.0
  %v1890 = vsel %vm424, %v1874, 0.0
  %v1891 = vsel %vm425, %v1875, 0.0
  %v1892 = vsel %vm422, %v1876, 0.0
  %v1893 = vsel %vm423, %v1877, 0.0
  %v1894 = vsel %vm424, %v1878, 0.0
  %v1895 = vsel %vm425, %v1879, 0.0
  %1896 = vst [vmem:[#allocation6 + $0x1c0] sm:$0xff] %v1888
  %1897 = vst [vmem:[#allocation6 + $0x1c8] sm:$0xff] %v1889
  %1898 = vst [vmem:[#allocation6 + $0x1d0] sm:$0xff] %v1890
  %1899 = vst [vmem:[#allocation6 + $0x1d8] sm:$0xff] %v1891
  %1900 = vst [vmem:[#allocation6 + $0x1e0] sm:$0xff] %v1892
  %1901 = vst [vmem:[#allocation6 + $0x1e8] sm:$0xff] %v1893
  %1902 = vst [vmem:[#allocation6 + $0x1f0] sm:$0xff] %v1894
  %1903 = vst [vmem:[#allocation6 + $0x1f8] sm:$0xff] %v1895
  %v1904 = vld [vmem:[#allocation3 + $0x8] sm:$0xff]
  %v1905 = vld [vmem:[#allocation3 + $0x10] sm:$0xff]
  %v1906 = vld [vmem:[#allocation3 + $0x18] sm:$0xff]
  %v1907 = vld [vmem:[#allocation3 + $0x20] sm:$0xff]
  %v1908 = vld [vmem:[#allocation3 + $0x28] sm:$0xff]
  %v1909 = vld [vmem:[#allocation3 + $0x38] sm:$0xff]
  %v1910 = vld [vmem:[#allocation3 + $0x40] sm:$0xff]
  %v1911 = vld [vmem:[#allocation3 + $0x48] sm:$0xff]
  %v1912 = vld [vmem:[#allocation3 + $0x50] sm:$0xff]
  %v1913 = vld [vmem:[#allocation3 + $0x58] sm:$0xff]
  %1924 = vrot.lane.b32.xlu0 %v1904, 111
  %v1925 = vpop.permute.xlu0 %1924
  %1926 = vrot.lane.b32.xlu0 %v1905, 111
  %v1927 = vpop.permute.xlu0 %1926
  %1928 = vrot.lane.b32.xlu0 %v1906, 111
  %v1929 = vpop.permute.xlu0 %1928
  %1930 = vrot.lane.b32.xlu0 %v1907, 111
  %v1931 = vpop.permute.xlu0 %1930
  %1932 = vrot.lane.b32.xlu0 %v1908, 111
  %v1933 = vpop.permute.xlu0 %1932
  %1934 = vrot.lane.b32.xlu0 %v1909, 111
  %v1935 = vpop.permute.xlu0 %1934
  %1936 = vrot.lane.b32.xlu0 %v1910, 111
  %v1937 = vpop.permute.xlu0 %1936
  %1938 = vrot.lane.b32.xlu0 %v1911, 111
  %v1939 = vpop.permute.xlu0 %1938
  %1940 = vrot.lane.b32.xlu0 %v1912, 111
  %v1941 = vpop.permute.xlu0 %1940
  %1942 = vrot.lane.b32.xlu0 %v1913, 111
  %v1943 = vpop.permute.xlu0 %1942
  %v1944 = vsel %vm486, %v1925, %v1927
  %v1945 = vsel %vm486, %v1927, %v1929
  %v1946 = vsel %vm486, %v1929, %v1931
  %v1947 = vsel %vm486, %v1931, %v1933
  %v1948 = vsel %vm486, %v1935, %v1937
  %v1949 = vsel %vm486, %v1937, %v1939
  %v1950 = vsel %vm486, %v1939, %v1941
  %v1951 = vsel %vm486, %v1941, %v1943
  %v1960 = vsel %vm467, %v1944, 0.0
  %v1961 = vsel %vm468, %v1945, 0.0
  %v1962 = vsel %vm469, %v1946, 0.0
  %v1963 = vsel %vm470, %v1947, 0.0
  %v1964 = vsel %vm467, %v1948, 0.0
  %v1965 = vsel %vm468, %v1949, 0.0
  %v1966 = vsel %vm469, %v1950, 0.0
  %v1967 = vsel %vm470, %v1951, 0.0
  %1968 = vst [vmem:[#allocation6 + $0x200] sm:$0xff] %v1960
  %1969 = vst [vmem:[#allocation6 + $0x208] sm:$0xff] %v1961
  %1970 = vst [vmem:[#allocation6 + $0x210] sm:$0xff] %v1962
  %1971 = vst [vmem:[#allocation6 + $0x218] sm:$0xff] %v1963
  %1972 = vst [vmem:[#allocation6 + $0x220] sm:$0xff] %v1964
  %1973 = vst [vmem:[#allocation6 + $0x228] sm:$0xff] %v1965
  %1974 = vst [vmem:[#allocation6 + $0x230] sm:$0xff] %v1966
  %1975 = vst [vmem:[#allocation6 + $0x238] sm:$0xff] %v1967
  %v1976 = vld [vmem:[%s5] sm:$0xff]
  %v1977 = vld [vmem:[%s5 + $0x8] sm:$0xff]
  %v1978 = vld [vmem:[%s5 + $0x10] sm:$0xff]
  %v1979 = vld [vmem:[%s5 + $0x18] sm:$0xff]
  %v1980 = vld [vmem:[#allocation6] sm:$0xff]
  %v1981 = vld [vmem:[#allocation6 + $0x8] sm:$0xff]
  %v1982 = vld [vmem:[#allocation6 + $0x10] sm:$0xff]
  %v1983 = vld [vmem:[#allocation6 + $0x18] sm:$0xff]
  %v1984 = vld [vmem:[#allocation6 + $0x20] sm:$0xff]
  %v1985 = vld [vmem:[#allocation6 + $0x28] sm:$0xff]
  %v1986 = vld [vmem:[#allocation6 + $0x30] sm:$0xff]
  %v1987 = vld [vmem:[#allocation6 + $0x38] sm:$0xff]
  %v1988 = vld [vmem:[#allocation6 + $0x40] sm:$0xff]
  %v1989 = vld [vmem:[#allocation6 + $0x48] sm:$0xff]
  %v1990 = vld [vmem:[#allocation6 + $0x50] sm:$0xff]
  %v1991 = vld [vmem:[#allocation6 + $0x58] sm:$0xff]
  %v1992 = vld [vmem:[#allocation6 + $0x60] sm:$0xff]
  %v1993 = vld [vmem:[#allocation6 + $0x68] sm:$0xff]
  %v1994 = vld [vmem:[#allocation6 + $0x70] sm:$0xff]
  %v1995 = vld [vmem:[#allocation6 + $0x78] sm:$0xff]
  %v1996 = vld [vmem:[#allocation6 + $0x80] sm:$0xff]
  %v1997 = vld [vmem:[#allocation6 + $0x88] sm:$0xff]
  %v1998 = vld [vmem:[#allocation6 + $0x90] sm:$0xff]
  %v1999 = vld [vmem:[#allocation6 + $0x98] sm:$0xff]
  %v2000 = vld [vmem:[#allocation6 + $0xa0] sm:$0xff]
  %v2001 = vld [vmem:[#allocation6 + $0xa8] sm:$0xff]
  %v2002 = vld [vmem:[#allocation6 + $0xb0] sm:$0xff]
  %v2003 = vld [vmem:[#allocation6 + $0xb8] sm:$0xff]
  %v2004 = vld [vmem:[#allocation6 + $0xc0] sm:$0xff]
  %v2005 = vld [vmem:[#allocation6 + $0xc8] sm:$0xff]
  %v2006 = vld [vmem:[#allocation6 + $0xd0] sm:$0xff]
  %v2007 = vld [vmem:[#allocation6 + $0xd8] sm:$0xff]
  %v2008 = vld [vmem:[#allocation6 + $0xe0] sm:$0xff]
  %v2009 = vld [vmem:[#allocation6 + $0xe8] sm:$0xff]
  %v2010 = vld [vmem:[#allocation6 + $0xf0] sm:$0xff]
  %v2011 = vld [vmem:[#allocation6 + $0xf8] sm:$0xff]
  %v2012 = vld [vmem:[#allocation6 + $0x100] sm:$0xff]
  %v2013 = vld [vmem:[#allocation6 + $0x108] sm:$0xff]
  %v2014 = vld [vmem:[#allocation6 + $0x110] sm:$0xff]
  %v2015 = vld [vmem:[#allocation6 + $0x118] sm:$0xff]
  %v2016 = vld [vmem:[#allocation6 + $0x120] sm:$0xff]
  %v2017 = vld [vmem:[#allocation6 + $0x128] sm:$0xff]
  %v2018 = vld [vmem:[#allocation6 + $0x130] sm:$0xff]
  %v2019 = vld [vmem:[#allocation6 + $0x138] sm:$0xff]
  %v2020 = vld [vmem:[#allocation6 + $0x140] sm:$0xff]
  %v2021 = vld [vmem:[#allocation6 + $0x148] sm:$0xff]
  %v2022 = vld [vmem:[#allocation6 + $0x150] sm:$0xff]
  %v2023 = vld [vmem:[#allocation6 + $0x158] sm:$0xff]
  %v2024 = vld [vmem:[#allocation6 + $0x160] sm:$0xff]
  %v2025 = vld [vmem:[#allocation6 + $0x168] sm:$0xff]
  %v2026 = vld [vmem:[#allocation6 + $0x170] sm:$0xff]
  %v2027 = vld [vmem:[#allocation6 + $0x178] sm:$0xff]
  %v2028 = vld [vmem:[#allocation6 + $0x180] sm:$0xff]
  %v2029 = vld [vmem:[#allocation6 + $0x188] sm:$0xff]
  %v2030 = vld [vmem:[#allocation6 + $0x190] sm:$0xff]
  %v2031 = vld [vmem:[#allocation6 + $0x198] sm:$0xff]
  %v2032 = vld [vmem:[#allocation6 + $0x1a0] sm:$0xff]
  %v2033 = vld [vmem:[#allocation6 + $0x1a8] sm:$0xff]
  %v2034 = vld [vmem:[#allocation6 + $0x1b0] sm:$0xff]
  %v2035 = vld [vmem:[#allocation6 + $0x1b8] sm:$0xff]
  %v2036 = vld [vmem:[#allocation6 + $0x1c0] sm:$0xff]
  %v2037 = vld [vmem:[#allocation6 + $0x1c8] sm:$0xff]
  %v2038 = vld [vmem:[#allocation6 + $0x1d0] sm:$0xff]
  %v2039 = vld [vmem:[#allocation6 + $0x1d8] sm:$0xff]
  %v2040 = vld [vmem:[#allocation6 + $0x1e0] sm:$0xff]
  %v2041 = vld [vmem:[#allocation6 + $0x1e8] sm:$0xff]
  %v2042 = vld [vmem:[#allocation6 + $0x1f0] sm:$0xff]
  %v2043 = vld [vmem:[#allocation6 + $0x1f8] sm:$0xff]
  %v2044 = vld [vmem:[#allocation6 + $0x200] sm:$0xff]
  %v2045 = vld [vmem:[#allocation6 + $0x208] sm:$0xff]
  %v2046 = vld [vmem:[#allocation6 + $0x210] sm:$0xff]
  %v2047 = vld [vmem:[#allocation6 + $0x218] sm:$0xff]
  %v2048 = vld [vmem:[#allocation6 + $0x220] sm:$0xff]
  %v2049 = vld [vmem:[#allocation6 + $0x228] sm:$0xff]
  %v2050 = vld [vmem:[#allocation6 + $0x230] sm:$0xff]
  %v2051 = vld [vmem:[#allocation6 + $0x238] sm:$0xff]
  %v2052 = vld [vmem:[%s6] sm:$0xff]
  %v2053 = vld [vmem:[%s6 + $0x8] sm:$0xff]
  %2055 = vset.pattern.permute.xlu0 0
  %2056 = vperm.xlu0 %2055, %v2052
  %v2057 = vpop.permute.xlu0 %2056
  %2060 = vset.pattern.permute.xlu0 0
  %2061 = vperm.xlu0 %2060, %v2053
  %v2062 = vpop.permute.xlu0 %2061
  %v2065 = vsel %vm208, %v1977, 0
  %v2068 = vsel %vm208, %v1979, 0
  %2070 = vmatprep.subr.mxu0 %v1981
  %2071 = vmatpush1.msra.mxu0 %v1980
  %2072 = vmatprep.subr.mxu0 %v1985
  %2073 = vmatpush1.msra.mxu0 %v1984
  %2074 = vmatprep.subr.mxu0 %v1989
  %2075 = vmatpush1.msra.mxu0 %v1988
  %2076 = vmatprep.subr.mxu0 %v1993
  %2077 = vmatpush1.msra.mxu0 %v1992
  %2078 = vmatprep.subr.mxu0 %v1997
  %2079 = vmatpush1.msra.mxu0 %v1996
  %2080 = vmatprep.subr.mxu0 %v2001
  %2081 = vmatpush1.msra.mxu0 %v2000
  %2082 = vmatprep.subr.mxu0 %v2005
  %2083 = vmatpush1.msra.mxu0 %v2004
  %2084 = vmatprep.subr.mxu0 %v2009
  %2085 = vmatpush1.msra.mxu0 %v2008
  %2086 = vmatprep.subr.mxu0 %v2013
  %2087 = vmatpush1.msra.mxu0 %v2012
  %2088 = vmatprep.subr.mxu0 %v2017
  %2089 = vmatpush1.msra.mxu0 %v2016
  %2090 = vmatprep.subr.mxu0 %v2021
  %2091 = vmatpush1.msra.mxu0 %v2020
  %2092 = vmatprep.subr.mxu0 %v2025
  %2093 = vmatpush1.msra.mxu0 %v2024
  %2094 = vmatprep.subr.mxu0 %v2029
  %2095 = vmatpush1.msra.mxu0 %v2028
  %2096 = vmatprep.subr.mxu0 %v2033
  %2097 = vmatpush1.msra.mxu0 %v2032
  %2098 = vmatprep.subr.mxu0 %v2037
  %2099 = vmatpush1.msra.mxu0 %v2036
  %2100 = vmatprep.subr.mxu0 %v2041
  %2101 = vmatpush1.msra.mxu0 %v2040
  %2102 = vmatprep.subr.mxu0 %v2045
  %2103 = vmatpush1.msra.mxu0 %v2044
  %2104 = vmatprep.subr.mxu0 %v2049
  %2105 = vmatpush1.msra.mxu0 %v2048
  %2106 = vmatprep.subr.mxu0 0.0
  %2107 = vmatpush1.msra.mxu0 0.0
  %2108 = vmatprep.subr.mxu0 0.0
  %2109 = vmatpush1.msra.mxu0 0.0
  %2110 = vmatprep.subr.mxu0 0.0
  %2111 = vmatpush1.msra.mxu0 0.0
  %2112 = vmatprep.subr.mxu0 0.0
  %2113 = vmatpush1.msra.mxu0 0.0
  %2114 = vmatprep.subr.mxu0 0.0
  %2115 = vmatpush1.msra.mxu0 0.0
  %2116 = vmatprep.subr.mxu0 0.0
  %2117 = vmatpush1.msra.mxu0 0.0
  %2118 = vmatprep.subr.mxu0 0.0
  %2119 = vmatpush1.msra.mxu0 0.0
  %2120 = vmatprep.subr.mxu0 0.0
  %2121 = vmatpush1.msra.mxu0 0.0
  %2122 = vmatprep.subr.mxu0 0.0
  %2123 = vmatpush1.msra.mxu0 0.0
  %2124 = vmatprep.subr.mxu0 0.0
  %2125 = vmatpush1.msra.mxu0 0.0
  %2126 = vmatprep.subr.mxu0 0.0
  %2127 = vmatpush1.msra.mxu0 0.0
  %2128 = vmatprep.subr.mxu0 0.0
  %2129 = vmatpush1.msra.mxu0 0.0
  %2130 = vmatprep.subr.mxu0 0.0
  %2131 = vmatpush1.msra.mxu0 0.0
  %2132 = vmatprep.subr.mxu0 0.0
  %2133 = vmatpush1.msra.mxu0 0.0
  %2134 = vmatprep.mubr.f32.mxu0 %v2065
  %2135 = vmatmul.mubr.f32.gmra.mrb[0].mxu0 %v1976
  %v2136 = vpop.f32.mrb[0].mxu0
  %v2137 = vadd.f32 %v2057, %v2136
  %v2138 = vpop.f32.mrb[0].mxu0
  %v2139 = vadd.f32 %v2057, %v2138
  %2140 = vmatprep.mubr.f32.mxu0 %v2068
  %2141 = vmatmul.mubr.f32.gmra.mrb[0].mxu0 %v1978
  %v2142 = vpop.f32.mrb[0].mxu0
  %v2143 = vadd.f32 %v2062, %v2142
  %v2144 = vpop.f32.mrb[0].mxu0
  %v2145 = vadd.f32 %v2062, %v2144
  %2146 = vdwg.mxu0
  %2147 = vmatprep.subr.mxu0 %v1983
  %2148 = vmatpush1.msra.mxu0 %v1982
  %2149 = vmatprep.subr.mxu0 %v1987
  %2150 = vmatpush1.msra.mxu0 %v1986
  %2151 = vmatprep.subr.mxu0 %v1991
  %2152 = vmatpush1.msra.mxu0 %v1990
  %2153 = vmatprep.subr.mxu0 %v1995
  %2154 = vmatpush1.msra.mxu0 %v1994
  %2155 = vmatprep.subr.mxu0 %v1999
  %2156 = vmatpush1.msra.mxu0 %v1998
  %2157 = vmatprep.subr.mxu0 %v2003
  %2158 = vmatpush1.msra.mxu0 %v2002
  %2159 = vmatprep.subr.mxu0 %v2007
  %2160 = vmatpush1.msra.mxu0 %v2006
  %2161 = vmatprep.subr.mxu0 %v2011
  %2162 = vmatpush1.msra.mxu0 %v2010
  %2163 = vmatprep.subr.mxu0 %v2015
  %2164 = vmatpush1.msra.mxu0 %v2014
  %2165 = vmatprep.subr.mxu0 %v2019
  %2166 = vmatpush1.msra.mxu0 %v2018
  %2167 = vmatprep.subr.mxu0 %v2023
  %2168 = vmatpush1.msra.mxu0 %v2022
  %2169 = vmatprep.subr.mxu0 %v2027
  %2170 = vmatpush1.msra.mxu0 %v2026
  %2171 = vmatprep.subr.mxu0 %v2031
  %2172 = vmatpush1.msra.mxu0 %v2030
  %2173 = vmatprep.subr.mxu0 %v2035
  %2174 = vmatpush1.msra.mxu0 %v2034
  %2175 = vmatprep.subr.mxu0 %v2039
  %2176 = vmatpush1.msra.mxu0 %v2038
  %2177 = vmatprep.subr.mxu0 %v2043
  %2178 = vmatpush1.msra.mxu0 %v2042
  %2179 = vmatprep.subr.mxu0 %v2047
  %2180 = vmatpush1.msra.mxu0 %v2046
  %2181 = vmatprep.subr.mxu0 %v2051
  %2182 = vmatpush1.msra.mxu0 %v2050
  %2183 = vmatprep.subr.mxu0 0.0
  %2184 = vmatpush1.msra.mxu0 0.0
  %2185 = vmatprep.subr.mxu0 0.0
  %2186 = vmatpush1.msra.mxu0 0.0
  %2187 = vmatprep.subr.mxu0 0.0
  %2188 = vmatpush1.msra.mxu0 0.0
  %2189 = vmatprep.subr.mxu0 0.0
  %2190 = vmatpush1.msra.mxu0 0.0
  %2191 = vmatprep.subr.mxu0 0.0
  %2192 = vmatpush1.msra.mxu0 0.0
  %2193 = vmatprep.subr.mxu0 0.0
  %2194 = vmatpush1.msra.mxu0 0.0
  %2195 = vmatprep.subr.mxu0 0.0
  %2196 = vmatpush1.msra.mxu0 0.0
  %2197 = vmatprep.subr.mxu0 0.0
  %2198 = vmatpush1.msra.mxu0 0.0
  %2199 = vmatprep.subr.mxu0 0.0
  %2200 = vmatpush1.msra.mxu0 0.0
  %2201 = vmatprep.subr.mxu0 0.0
  %2202 = vmatpush1.msra.mxu0 0.0
  %2203 = vmatprep.subr.mxu0 0.0
  %2204 = vmatpush1.msra.mxu0 0.0
  %2205 = vmatprep.subr.mxu0 0.0
  %2206 = vmatpush1.msra.mxu0 0.0
  %2207 = vmatprep.subr.mxu0 0.0
  %2208 = vmatpush1.msra.mxu0 0.0
  %2209 = vmatprep.subr.mxu0 0.0
  %2210 = vmatpush1.msra.mxu0 0.0
  %2211 = vmatprep.mubr.f32.mxu0 %v2065
  %2212 = vmatmul.mubr.f32.gmra.mrb[0].mxu0 %v1976
  %v2213 = vpop.f32.mrb[0].mxu0
  %v2214 = vadd.f32 %v2057, %v2213
  %v2215 = vpop.f32.mrb[0].mxu0
  %v2216 = vadd.f32 %v2057, %v2215
  %2217 = vmatprep.mubr.f32.mxu0 %v2068
  %2218 = vmatmul.mubr.f32.gmra.mrb[0].mxu0 %v1978
  %v2219 = vpop.f32.mrb[0].mxu0
  %v2220 = vadd.f32 %v2062, %v2219
  %v2221 = vpop.f32.mrb[0].mxu0
  %v2222 = vadd.f32 %v2062, %v2221
  %2223 = vdwg.mxu0
  %v2224 = vmax.f32 %v2137, 0.0
  %v2225 = vmax.f32 %v2139, 0.0
  %v2226 = vmax.f32 %v2214, 0.0
  %v2227 = vmax.f32 %v2216, 0.0
  %v2228 = vmax.f32 %v2143, 0.0
  %v2229 = vmax.f32 %v2145, 0.0
  %v2230 = vmax.f32 %v2220, 0.0
  %v2231 = vmax.f32 %v2222, 0.0
  %2232 = vst [vmem:[%s11 + $0x80] sm:$0xff] %v2224
  %2233 = vst [vmem:[%s11 + $0x88] sm:$0xff] %v2225
  %2234 = vst [vmem:[%s11 + $0x90] sm:$0xff] %v2226
  %2235 = vst [vmem:[%s11 + $0x98] sm:$0xff] %v2227
  %2236 = vst [vmem:[%s11 + $0xa0] sm:$0xff] %v2228
  %2237 = vst [vmem:[%s11 + $0xa8] sm:$0xff] %v2229
  %2238 = vst [vmem:[%s11 + $0xb0] sm:$0xff] %v2230
  %2239 = vst [vmem:[%s11 + $0xb8] sm:$0xff] %v2231
  %v2240 = vld [vmem:[#allocation3] sm:$0xff]
  %v2241 = vld [vmem:[#allocation3 + $0x8] sm:$0xff]
  %v2242 = vld [vmem:[#allocation3 + $0x10] sm:$0xff]
  %v2243 = vld [vmem:[#allocation3 + $0x18] sm:$0xff]
  %v2244 = vld [vmem:[#allocation3 + $0x20] sm:$0xff]
  %v2245 = vld [vmem:[#allocation3 + $0x30] sm:$0xff]
  %v2246 = vld [vmem:[#allocation3 + $0x38] sm:$0xff]
  %v2247 = vld [vmem:[#allocation3 + $0x40] sm:$0xff]
  %v2248 = vld [vmem:[#allocation3 + $0x48] sm:$0xff]
  %v2249 = vld [vmem:[#allocation3 + $0x50] sm:$0xff]
  %2260 = vrot.lane.b32.xlu0 %v2240, 34
  %v2261 = vpop.permute.xlu0 %2260
  %2262 = vrot.lane.b32.xlu0 %v2241, 34
  %v2263 = vpop.permute.xlu0 %2262
  %2264 = vrot.lane.b32.xlu0 %v2242, 34
  %v2265 = vpop.permute.xlu0 %2264
  %2266 = vrot.lane.b32.xlu0 %v2243, 34
  %v2267 = vpop.permute.xlu0 %2266
  %2268 = vrot.lane.b32.xlu0 %v2244, 34
  %v2269 = vpop.permute.xlu0 %2268
  %2270 = vrot.lane.b32.xlu0 %v2245, 34
  %v2271 = vpop.permute.xlu0 %2270
  %2272 = vrot.lane.b32.xlu0 %v2246, 34
  %v2273 = vpop.permute.xlu0 %2272
  %2274 = vrot.lane.b32.xlu0 %v2247, 34
  %v2275 = vpop.permute.xlu0 %2274
  %2276 = vrot.lane.b32.xlu0 %v2248, 34
  %v2277 = vpop.permute.xlu0 %2276
  %2278 = vrot.lane.b32.xlu0 %v2249, 34
  %v2279 = vpop.permute.xlu0 %2278
  %v2280 = vsel %vm818, %v2261, %v2263
  %v2281 = vsel %vm818, %v2263, %v2265
  %v2282 = vsel %vm818, %v2265, %v2267
  %v2283 = vsel %vm818, %v2267, %v2269
  %v2284 = vsel %vm818, %v2271, %v2273
  %v2285 = vsel %vm818, %v2273, %v2275
  %v2286 = vsel %vm818, %v2275, %v2277
  %v2287 = vsel %vm818, %v2277, %v2279
  %v2296 = vsel %vm799, %v2280, 0.0
  %v2297 = vsel %vm800, %v2281, 0.0
  %v2298 = vsel %vm801, %v2282, 0.0
  %v2299 = vsel %vm802, %v2283, 0.0
  %v2300 = vsel %vm799, %v2284, 0.0
  %v2301 = vsel %vm800, %v2285, 0.0
  %v2302 = vsel %vm801, %v2286, 0.0
  %v2303 = vsel %vm802, %v2287, 0.0
  %2304 = vst [vmem:[#allocation6] sm:$0xff] %v2296
  %2305 = vst [vmem:[#allocation6 + $0x8] sm:$0xff] %v2297
  %2306 = vst [vmem:[#allocation6 + $0x10] sm:$0xff] %v2298
  %2307 = vst [vmem:[#allocation6 + $0x18] sm:$0xff] %v2299
  %2308 = vst [vmem:[#allocation6 + $0x20] sm:$0xff] %v2300
  %2309 = vst [vmem:[#allocation6 + $0x28] sm:$0xff] %v2301
  %2310 = vst [vmem:[#allocation6 + $0x30] sm:$0xff] %v2302
  %2311 = vst [vmem:[#allocation6 + $0x38] sm:$0xff] %v2303
  %v2312 = vld [vmem:[#allocation3] sm:$0xff]
  %v2313 = vld [vmem:[#allocation3 + $0x8] sm:$0xff]
  %v2314 = vld [vmem:[#allocation3 + $0x10] sm:$0xff]
  %v2315 = vld [vmem:[#allocation3 + $0x18] sm:$0xff]
  %v2316 = vld [vmem:[#allocation3 + $0x20] sm:$0xff]
  %v2317 = vld [vmem:[#allocation3 + $0x30] sm:$0xff]
  %v2318 = vld [vmem:[#allocation3 + $0x38] sm:$0xff]
  %v2319 = vld [vmem:[#allocation3 + $0x40] sm:$0xff]
  %v2320 = vld [vmem:[#allocation3 + $0x48] sm:$0xff]
  %v2321 = vld [vmem:[#allocation3 + $0x50] sm:$0xff]
  %2332 = vrot.lane.b32.xlu0 %v2312, 32
  %v2333 = vpop.permute.xlu0 %2332
  %2334 = vrot.lane.b32.xlu0 %v2313, 32
  %v2335 = vpop.permute.xlu0 %2334
  %2336 = vrot.lane.b32.xlu0 %v2314, 32
  %v2337 = vpop.permute.xlu0 %2336
  %2338 = vrot.lane.b32.xlu0 %v2315, 32
  %v2339 = vpop.permute.xlu0 %2338
  %2340 = vrot.lane.b32.xlu0 %v2316, 32
  %v2341 = vpop.permute.xlu0 %2340
  %2342 = vrot.lane.b32.xlu0 %v2317, 32
  %v2343 = vpop.permute.xlu0 %2342
  %2344 = vrot.lane.b32.xlu0 %v2318, 32
  %v2345 = vpop.permute.xlu0 %2344
  %2346 = vrot.lane.b32.xlu0 %v2319, 32
  %v2347 = vpop.permute.xlu0 %2346
  %2348 = vrot.lane.b32.xlu0 %v2320, 32
  %v2349 = vpop.permute.xlu0 %2348
  %2350 = vrot.lane.b32.xlu0 %v2321, 32
  %v2351 = vpop.permute.xlu0 %2350
  %v2352 = vsel %vm863, %v2333, %v2335
  %v2353 = vsel %vm863, %v2335, %v2337
  %v2354 = vsel %vm863, %v2337, %v2339
  %v2355 = vsel %vm863, %v2339, %v2341
  %v2356 = vsel %vm863, %v2343, %v2345
  %v2357 = vsel %vm863, %v2345, %v2347
  %v2358 = vsel %vm863, %v2347, %v2349
  %v2359 = vsel %vm863, %v2349, %v2351
  %v2368 = vsel %vm844, %v2352, 0.0
  %v2369 = vsel %vm845, %v2353, 0.0
  %v2370 = vsel %vm846, %v2354, 0.0
  %v2371 = vsel %vm847, %v2355, 0.0
  %v2372 = vsel %vm844, %v2356, 0.0
  %v2373 = vsel %vm845, %v2357, 0.0
  %v2374 = vsel %vm846, %v2358, 0.0
  %v2375 = vsel %vm847, %v2359, 0.0
  %2376 = vst [vmem:[#allocation6 + $0x40] sm:$0xff] %v2368
  %2377 = vst [vmem:[#allocation6 + $0x48] sm:$0xff] %v2369
  %2378 = vst [vmem:[#allocation6 + $0x50] sm:$0xff] %v2370
  %2379 = vst [vmem:[#allocation6 + $0x58] sm:$0xff] %v2371
  %2380 = vst [vmem:[#allocation6 + $0x60] sm:$0xff] %v2372
  %2381 = vst [vmem:[#allocation6 + $0x68] sm:$0xff] %v2373
  %2382 = vst [vmem:[#allocation6 + $0x70] sm:$0xff] %v2374
  %2383 = vst [vmem:[#allocation6 + $0x78] sm:$0xff] %v2375
  %v2384 = vld [vmem:[#allocation3] sm:$0xff]
  %v2385 = vld [vmem:[#allocation3 + $0x8] sm:$0xff]
  %v2386 = vld [vmem:[#allocation3 + $0x10] sm:$0xff]
  %v2387 = vld [vmem:[#allocation3 + $0x18] sm:$0xff]
  %v2388 = vld [vmem:[#allocation3 + $0x20] sm:$0xff]
  %v2389 = vld [vmem:[#allocation3 + $0x30] sm:$0xff]
  %v2390 = vld [vmem:[#allocation3 + $0x38] sm:$0xff]
  %v2391 = vld [vmem:[#allocation3 + $0x40] sm:$0xff]
  %v2392 = vld [vmem:[#allocation3 + $0x48] sm:$0xff]
  %v2393 = vld [vmem:[#allocation3 + $0x50] sm:$0xff]
  %2404 = vrot.lane.b32.xlu0 %v2384, 30
  %v2405 = vpop.permute.xlu0 %2404
  %2406 = vrot.lane.b32.xlu0 %v2385, 30
  %v2407 = vpop.permute.xlu0 %2406
  %2408 = vrot.lane.b32.xlu0 %v2386, 30
  %v2409 = vpop.permute.xlu0 %2408
  %2410 = vrot.lane.b32.xlu0 %v2387, 30
  %v2411 = vpop.permute.xlu0 %2410
  %2412 = vrot.lane.b32.xlu0 %v2388, 30
  %v2413 = vpop.permute.xlu0 %2412
  %2414 = vrot.lane.b32.xlu0 %v2389, 30
  %v2415 = vpop.permute.xlu0 %2414
  %2416 = vrot.lane.b32.xlu0 %v2390, 30
  %v2417 = vpop.permute.xlu0 %2416
  %2418 = vrot.lane.b32.xlu0 %v2391, 30
  %v2419 = vpop.permute.xlu0 %2418
  %2420 = vrot.lane.b32.xlu0 %v2392, 30
  %v2421 = vpop.permute.xlu0 %2420
  %2422 = vrot.lane.b32.xlu0 %v2393, 30
  %v2423 = vpop.permute.xlu0 %2422
  %v2424 = vsel %vm908, %v2405, %v2407
  %v2425 = vsel %vm908, %v2407, %v2409
  %v2426 = vsel %vm908, %v2409, %v2411
  %v2427 = vsel %vm908, %v2411, %v2413
  %v2428 = vsel %vm908, %v2415, %v2417
  %v2429 = vsel %vm908, %v2417, %v2419
  %v2430 = vsel %vm908, %v2419, %v2421
  %v2431 = vsel %vm908, %v2421, %v2423
  %v2440 = vsel %vm889, %v2424, 0.0
  %v2441 = vsel %vm890, %v2425, 0.0
  %v2442 = vsel %vm891, %v2426, 0.0
  %v2443 = vsel %vm892, %v2427, 0.0
  %v2444 = vsel %vm889, %v2428, 0.0
  %v2445 = vsel %vm890, %v2429, 0.0
  %v2446 = vsel %vm891, %v2430, 0.0
  %v2447 = vsel %vm892, %v2431, 0.0
  %2448 = vst [vmem:[#allocation6 + $0x80] sm:$0xff] %v2440
  %2449 = vst [vmem:[#allocation6 + $0x88] sm:$0xff] %v2441
  %2450 = vst [vmem:[#allocation6 + $0x90] sm:$0xff] %v2442
  %2451 = vst [vmem:[#allocation6 + $0x98] sm:$0xff] %v2443
  %2452 = vst [vmem:[#allocation6 + $0xa0] sm:$0xff] %v2444
  %2453 = vst [vmem:[#allocation6 + $0xa8] sm:$0xff] %v2445
  %2454 = vst [vmem:[#allocation6 + $0xb0] sm:$0xff] %v2446
  %2455 = vst [vmem:[#allocation6 + $0xb8] sm:$0xff] %v2447
  %v2456 = vld [vmem:[#allocation3] sm:$0xff]
  %v2457 = vld [vmem:[#allocation3 + $0x8] sm:$0xff]
  %v2458 = vld [vmem:[#allocation3 + $0x10] sm:$0xff]
  %v2459 = vld [vmem:[#allocation3 + $0x18] sm:$0xff]
  %v2460 = vld [vmem:[#allocation3 + $0x20] sm:$0xff]
  %v2461 = vld [vmem:[#allocation3 + $0x30] sm:$0xff]
  %v2462 = vld [vmem:[#allocation3 + $0x38] sm:$0xff]
  %v2463 = vld [vmem:[#allocation3 + $0x40] sm:$0xff]
  %v2464 = vld [vmem:[#allocation3 + $0x48] sm:$0xff]
  %v2465 = vld [vmem:[#allocation3 + $0x50] sm:$0xff]
  %2476 = vrot.lane.b32.xlu0 %v2456, 2
  %v2477 = vpop.permute.xlu0 %2476
  %2478 = vrot.lane.b32.xlu0 %v2457, 2
  %v2479 = vpop.permute.xlu0 %2478
  %2480 = vrot.lane.b32.xlu0 %v2458, 2
  %v2481 = vpop.permute.xlu0 %2480
  %2482 = vrot.lane.b32.xlu0 %v2459, 2
  %v2483 = vpop.permute.xlu0 %2482
  %2484 = vrot.lane.b32.xlu0 %v2460, 2
  %v2485 = vpop.permute.xlu0 %2484
  %2486 = vrot.lane.b32.xlu0 %v2461, 2
  %v2487 = vpop.permute.xlu0 %2486
  %2488 = vrot.lane.b32.xlu0 %v2462, 2
  %v2489 = vpop.permute.xlu0 %2488
  %2490 = vrot.lane.b32.xlu0 %v2463, 2
  %v2491 = vpop.permute.xlu0 %2490
  %2492 = vrot.lane.b32.xlu0 %v2464, 2
  %v2493 = vpop.permute.xlu0 %2492
  %2494 = vrot.lane.b32.xlu0 %v2465, 2
  %v2495 = vpop.permute.xlu0 %2494
  %v2496 = vsel %vm953, %v2477, %v2479
  %v2497 = vsel %vm953, %v2479, %v2481
  %v2498 = vsel %vm953, %v2481, %v2483
  %v2499 = vsel %vm953, %v2483, %v2485
  %v2500 = vsel %vm953, %v2487, %v2489
  %v2501 = vsel %vm953, %v2489, %v2491
  %v2502 = vsel %vm953, %v2491, %v2493
  %v2503 = vsel %vm953, %v2493, %v2495
  %v2512 = vsel %vm934, %v2496, 0.0
  %v2513 = vsel %vm935, %v2497, 0.0
  %v2514 = vsel %vm936, %v2498, 0.0
  %v2515 = vsel %vm937, %v2499, 0.0
  %v2516 = vsel %vm934, %v2500, 0.0
  %v2517 = vsel %vm935, %v2501, 0.0
  %v2518 = vsel %vm936, %v2502, 0.0
  %v2519 = vsel %vm937, %v2503, 0.0
  %2520 = vst [vmem:[#allocation6 + $0xc0] sm:$0xff] %v2512
  %2521 = vst [vmem:[#allocation6 + $0xc8] sm:$0xff] %v2513
  %2522 = vst [vmem:[#allocation6 + $0xd0] sm:$0xff] %v2514
  %2523 = vst [vmem:[#allocation6 + $0xd8] sm:$0xff] %v2515
  %2524 = vst [vmem:[#allocation6 + $0xe0] sm:$0xff] %v2516
  %2525 = vst [vmem:[#allocation6 + $0xe8] sm:$0xff] %v2517
  %2526 = vst [vmem:[#allocation6 + $0xf0] sm:$0xff] %v2518
  %2527 = vst [vmem:[#allocation6 + $0xf8] sm:$0xff] %v2519
  %v2528 = vld [vmem:[#allocation3 + $0x8] sm:$0xff]
  %v2529 = vld [vmem:[#allocation3 + $0x10] sm:$0xff]
  %v2530 = vld [vmem:[#allocation3 + $0x18] sm:$0xff]
  %v2531 = vld [vmem:[#allocation3 + $0x20] sm:$0xff]
  %v2532 = vld [vmem:[#allocation3 + $0x38] sm:$0xff]
  %v2533 = vld [vmem:[#allocation3 + $0x40] sm:$0xff]
  %v2534 = vld [vmem:[#allocation3 + $0x48] sm:$0xff]
  %v2535 = vld [vmem:[#allocation3 + $0x50] sm:$0xff]
  %2536 = vst [vmem:[#allocation6 + $0x100] sm:$0xff] %v2528
  %2537 = vst [vmem:[#allocation6 + $0x108] sm:$0xff] %v2529
  %2538 = vst [vmem:[#allocation6 + $0x110] sm:$0xff] %v2530
  %2539 = vst [vmem:[#allocation6 + $0x118] sm:$0xff] %v2531
  %2540 = vst [vmem:[#allocation6 + $0x120] sm:$0xff] %v2532
  %2541 = vst [vmem:[#allocation6 + $0x128] sm:$0xff] %v2533
  %2542 = vst [vmem:[#allocation6 + $0x130] sm:$0xff] %v2534
  %2543 = vst [vmem:[#allocation6 + $0x138] sm:$0xff] %v2535
  %v2544 = vld [vmem:[#allocation3 + $0x8] sm:$0xff]
  %v2545 = vld [vmem:[#allocation3 + $0x10] sm:$0xff]
  %v2546 = vld [vmem:[#allocation3 + $0x18] sm:$0xff]
  %v2547 = vld [vmem:[#allocation3 + $0x20] sm:$0xff]
  %v2548 = vld [vmem:[#allocation3 + $0x28] sm:$0xff]
  %v2549 = vld [vmem:[#allocation3 + $0x38] sm:$0xff]
  %v2550 = vld [vmem:[#allocation3 + $0x40] sm:$0xff]
  %v2551 = vld [vmem:[#allocation3 + $0x48] sm:$0xff]
  %v2552 = vld [vmem:[#allocation3 + $0x50] sm:$0xff]
  %v2553 = vld [vmem:[#allocation3 + $0x58] sm:$0xff]
  %2564 = vrot.lane.b32.xlu0 %v2544, 126
  %v2565 = vpop.permute.xlu0 %2564
  %2566 = vrot.lane.b32.xlu0 %v2545, 126
  %v2567 = vpop.permute.xlu0 %2566
  %2568 = vrot.lane.b32.xlu0 %v2546, 126
  %v2569 = vpop.permute.xlu0 %2568
  %2570 = vrot.lane.b32.xlu0 %v2547, 126
  %v2571 = vpop.permute.xlu0 %2570
  %2572 = vrot.lane.b32.xlu0 %v2548, 126
  %v2573 = vpop.permute.xlu0 %2572
  %2574 = vrot.lane.b32.xlu0 %v2549, 126
  %v2575 = vpop.permute.xlu0 %2574
  %2576 = vrot.lane.b32.xlu0 %v2550, 126
  %v2577 = vpop.permute.xlu0 %2576
  %2578 = vrot.lane.b32.xlu0 %v2551, 126
  %v2579 = vpop.permute.xlu0 %2578
  %2580 = vrot.lane.b32.xlu0 %v2552, 126
  %v2581 = vpop.permute.xlu0 %2580
  %2582 = vrot.lane.b32.xlu0 %v2553, 126
  %v2583 = vpop.permute.xlu0 %2582
  %v2584 = vsel %vm1006, %v2565, %v2567
  %v2585 = vsel %vm1006, %v2567, %v2569
  %v2586 = vsel %vm1006, %v2569, %v2571
  %v2587 = vsel %vm1006, %v2571, %v2573
  %v2588 = vsel %vm1006, %v2575, %v2577
  %v2589 = vsel %vm1006, %v2577, %v2579
  %v2590 = vsel %vm1006, %v2579, %v2581
  %v2591 = vsel %vm1006, %v2581, %v2583
  %v2600 = vsel %vm987, %v2584, 0.0
  %v2601 = vsel %vm988, %v2585, 0.0
  %v2602 = vsel %vm989, %v2586, 0.0
  %v2603 = vsel %vm990, %v2587, 0.0
  %v2604 = vsel %vm987, %v2588, 0.0
  %v2605 = vsel %vm988, %v2589, 0.0
  %v2606 = vsel %vm989, %v2590, 0.0
  %v2607 = vsel %vm990, %v2591, 0.0
  %2608 = vst [vmem:[#allocation6 + $0x140] sm:$0xff] %v2600
  %2609 = vst [vmem:[#allocation6 + $0x148] sm:$0xff] %v2601
  %2610 = vst [vmem:[#allocation6 + $0x150] sm:$0xff] %v2602
  %2611 = vst [vmem:[#allocation6 + $0x158] sm:$0xff] %v2603
  %2612 = vst [vmem:[#allocation6 + $0x160] sm:$0xff] %v2604
  %2613 = vst [vmem:[#allocation6 + $0x168] sm:$0xff] %v2605
  %2614 = vst [vmem:[#allocation6 + $0x170] sm:$0xff] %v2606
  %2615 = vst [vmem:[#allocation6 + $0x178] sm:$0xff] %v2607
  %v2616 = vld [vmem:[#allocation3 + $0x8] sm:$0xff]
  %v2617 = vld [vmem:[#allocation3 + $0x10] sm:$0xff]
  %v2618 = vld [vmem:[#allocation3 + $0x18] sm:$0xff]
  %v2619 = vld [vmem:[#allocation3 + $0x20] sm:$0xff]
  %v2620 = vld [vmem:[#allocation3 + $0x28] sm:$0xff]
  %v2621 = vld [vmem:[#allocation3 + $0x38] sm:$0xff]
  %v2622 = vld [vmem:[#allocation3 + $0x40] sm:$0xff]
  %v2623 = vld [vmem:[#allocation3 + $0x48] sm:$0xff]
  %v2624 = vld [vmem:[#allocation3 + $0x50] sm:$0xff]
  %v2625 = vld [vmem:[#allocation3 + $0x58] sm:$0xff]
  %2636 = vrot.lane.b32.xlu0 %v2616, 98
  %v2637 = vpop.permute.xlu0 %2636
  %2638 = vrot.lane.b32.xlu0 %v2617, 98
  %v2639 = vpop.permute.xlu0 %2638
  %2640 = vrot.lane.b32.xlu0 %v2618, 98
  %v2641 = vpop.permute.xlu0 %2640
  %2642 = vrot.lane.b32.xlu0 %v2619, 98
  %v2643 = vpop.permute.xlu0 %2642
  %2644 = vrot.lane.b32.xlu0 %v2620, 98
  %v2645 = vpop.permute.xlu0 %2644
  %2646 = vrot.lane.b32.xlu0 %v2621, 98
  %v2647 = vpop.permute.xlu0 %2646
  %2648 = vrot.lane.b32.xlu0 %v2622, 98
  %v2649 = vpop.permute.xlu0 %2648
  %2650 = vrot.lane.b32.xlu0 %v2623, 98
  %v2651 = vpop.permute.xlu0 %2650
  %2652 = vrot.lane.b32.xlu0 %v2624, 98
  %v2653 = vpop.permute.xlu0 %2652
  %2654 = vrot.lane.b32.xlu0 %v2625, 98
  %v2655 = vpop.permute.xlu0 %2654
  %v2656 = vsel %vm1051, %v2637, %v2639
  %v2657 = vsel %vm1051, %v2639, %v2641
  %v2658 = vsel %vm1051, %v2641, %v2643
  %v2659 = vsel %vm1051, %v2643, %v2645
  %v2660 = vsel %vm1051, %v2647, %v2649
  %v2661 = vsel %vm1051, %v2649, %v2651
  %v2662 = vsel %vm1051, %v2651, %v2653
  %v2663 = vsel %vm1051, %v2653, %v2655
  %v2672 = vsel %vm1032, %v2656, 0.0
  %v2673 = vsel %vm1033, %v2657, 0.0
  %v2674 = vsel %vm1034, %v2658, 0.0
  %v2675 = vsel %vm1035, %v2659, 0.0
  %v2676 = vsel %vm1032, %v2660, 0.0
  %v2677 = vsel %vm1033, %v2661, 0.0
  %v2678 = vsel %vm1034, %v2662, 0.0
  %v2679 = vsel %vm1035, %v2663, 0.0
  %2680 = vst [vmem:[#allocation6 + $0x180] sm:$0xff] %v2672
  %2681 = vst [vmem:[#allocation6 + $0x188] sm:$0xff] %v2673
  %2682 = vst [vmem:[#allocation6 + $0x190] sm:$0xff] %v2674
  %2683 = vst [vmem:[#allocation6 + $0x198] sm:$0xff] %v2675
  %2684 = vst [vmem:[#allocation6 + $0x1a0] sm:$0xff] %v2676
  %2685 = vst [vmem:[#allocation6 + $0x1a8] sm:$0xff] %v2677
  %2686 = vst [vmem:[#allocation6 + $0x1b0] sm:$0xff] %v2678
  %2687 = vst [vmem:[#allocation6 + $0x1b8] sm:$0xff] %v2679
  %v2688 = vld [vmem:[#allocation3 + $0x8] sm:$0xff]
  %v2689 = vld [vmem:[#allocation3 + $0x10] sm:$0xff]
  %v2690 = vld [vmem:[#allocation3 + $0x18] sm:$0xff]
  %v2691 = vld [vmem:[#allocation3 + $0x20] sm:$0xff]
  %v2692 = vld [vmem:[#allocation3 + $0x28] sm:$0xff]
  %v2693 = vld [vmem:[#allocation3 + $0x38] sm:$0xff]
  %v2694 = vld [vmem:[#allocation3 + $0x40] sm:$0xff]
  %v2695 = vld [vmem:[#allocation3 + $0x48] sm:$0xff]
  %v2696 = vld [vmem:[#allocation3 + $0x50] sm:$0xff]
  %v2697 = vld [vmem:[#allocation3 + $0x58] sm:$0xff]
  %2708 = vrot.lane.b32.xlu0 %v2688, 96
  %v2709 = vpop.permute.xlu0 %2708
  %2710 = vrot.lane.b32.xlu0 %v2689, 96
  %v2711 = vpop.permute.xlu0 %2710
  %2712 = vrot.lane.b32.xlu0 %v2690, 96
  %v2713 = vpop.permute.xlu0 %2712
  %2714 = vrot.lane.b32.xlu0 %v2691, 96
  %v2715 = vpop.permute.xlu0 %2714
  %2716 = vrot.lane.b32.xlu0 %v2692, 96
  %v2717 = vpop.permute.xlu0 %2716
  %2718 = vrot.lane.b32.xlu0 %v2693, 96
  %v2719 = vpop.permute.xlu0 %2718
  %2720 = vrot.lane.b32.xlu0 %v2694, 96
  %v2721 = vpop.permute.xlu0 %2720
  %2722 = vrot.lane.b32.xlu0 %v2695, 96
  %v2723 = vpop.permute.xlu0 %2722
  %2724 = vrot.lane.b32.xlu0 %v2696, 96
  %v2725 = vpop.permute.xlu0 %2724
  %2726 = vrot.lane.b32.xlu0 %v2697, 96
  %v2727 = vpop.permute.xlu0 %2726
  %v2728 = vsel %vm1096, %v2709, %v2711
  %v2729 = vsel %vm1096, %v2711, %v2713
  %v2730 = vsel %vm1096, %v2713, %v2715
  %v2731 = vsel %vm1096, %v2715, %v2717
  %v2732 = vsel %vm1096, %v2719, %v2721
  %v2733 = vsel %vm1096, %v2721, %v2723
  %v2734 = vsel %vm1096, %v2723, %v2725
  %v2735 = vsel %vm1096, %v2725, %v2727
  %v2744 = vsel %vm1077, %v2728, 0.0
  %v2745 = vsel %vm1078, %v2729, 0.0
  %v2746 = vsel %vm1079, %v2730, 0.0
  %v2747 = vsel %vm1080, %v2731, 0.0
  %v2748 = vsel %vm1077, %v2732, 0.0
  %v2749 = vsel %vm1078, %v2733, 0.0
  %v2750 = vsel %vm1079, %v2734, 0.0
  %v2751 = vsel %vm1080, %v2735, 0.0
  %2752 = vst [vmem:[#allocation6 + $0x1c0] sm:$0xff] %v2744
  %2753 = vst [vmem:[#allocation6 + $0x1c8] sm:$0xff] %v2745
  %2754 = vst [vmem:[#allocation6 + $0x1d0] sm:$0xff] %v2746
  %2755 = vst [vmem:[#allocation6 + $0x1d8] sm:$0xff] %v2747
  %2756 = vst [vmem:[#allocation6 + $0x1e0] sm:$0xff] %v2748
  %2757 = vst [vmem:[#allocation6 + $0x1e8] sm:$0xff] %v2749
  %2758 = vst [vmem:[#allocation6 + $0x1f0] sm:$0xff] %v2750
  %2759 = vst [vmem:[#allocation6 + $0x1f8] sm:$0xff] %v2751
  %v2760 = vld [vmem:[#allocation3 + $0x8] sm:$0xff]
  %v2761 = vld [vmem:[#allocation3 + $0x10] sm:$0xff]
  %v2762 = vld [vmem:[#allocation3 + $0x18] sm:$0xff]
  %v2763 = vld [vmem:[#allocation3 + $0x20] sm:$0xff]
  %v2764 = vld [vmem:[#allocation3 + $0x28] sm:$0xff]
  %v2765 = vld [vmem:[#allocation3 + $0x38] sm:$0xff]
  %v2766 = vld [vmem:[#allocation3 + $0x40] sm:$0xff]
  %v2767 = vld [vmem:[#allocation3 + $0x48] sm:$0xff]
  %v2768 = vld [vmem:[#allocation3 + $0x50] sm:$0xff]
  %v2769 = vld [vmem:[#allocation3 + $0x58] sm:$0xff]
  %2780 = vrot.lane.b32.xlu0 %v2760, 94
  %v2781 = vpop.permute.xlu0 %2780
  %2782 = vrot.lane.b32.xlu0 %v2761, 94
  %v2783 = vpop.permute.xlu0 %2782
  %2784 = vrot.lane.b32.xlu0 %v2762, 94
  %v2785 = vpop.permute.xlu0 %2784
  %2786 = vrot.lane.b32.xlu0 %v2763, 94
  %v2787 = vpop.permute.xlu0 %2786
  %2788 = vrot.lane.b32.xlu0 %v2764, 94
  %v2789 = vpop.permute.xlu0 %2788
  %2790 = vrot.lane.b32.xlu0 %v2765, 94
  %v2791 = vpop.permute.xlu0 %2790
  %2792 = vrot.lane.b32.xlu0 %v2766, 94
  %v2793 = vpop.permute.xlu0 %2792
  %2794 = vrot.lane.b32.xlu0 %v2767, 94
  %v2795 = vpop.permute.xlu0 %2794
  %2796 = vrot.lane.b32.xlu0 %v2768, 94
  %v2797 = vpop.permute.xlu0 %2796
  %2798 = vrot.lane.b32.xlu0 %v2769, 94
  %v2799 = vpop.permute.xlu0 %2798
  %v2800 = vsel %vm1141, %v2781, %v2783
  %v2801 = vsel %vm1141, %v2783, %v2785
  %v2802 = vsel %vm1141, %v2785, %v2787
  %v2803 = vsel %vm1141, %v2787, %v2789
  %v2804 = vsel %vm1141, %v2791, %v2793
  %v2805 = vsel %vm1141, %v2793, %v2795
  %v2806 = vsel %vm1141, %v2795, %v2797
  %v2807 = vsel %vm1141, %v2797, %v2799
  %v2816 = vsel %vm1122, %v2800, 0.0
  %v2817 = vsel %vm1123, %v2801, 0.0
  %v2818 = vsel %vm1124, %v2802, 0.0
  %v2819 = vsel %vm1125, %v2803, 0.0
  %v2820 = vsel %vm1122, %v2804, 0.0
  %v2821 = vsel %vm1123, %v2805, 0.0
  %v2822 = vsel %vm1124, %v2806, 0.0
  %v2823 = vsel %vm1125, %v2807, 0.0
  %2824 = vst [vmem:[#allocation6 + $0x200] sm:$0xff] %v2816
  %2825 = vst [vmem:[#allocation6 + $0x208] sm:$0xff] %v2817
  %2826 = vst [vmem:[#allocation6 + $0x210] sm:$0xff] %v2818
  %2827 = vst [vmem:[#allocation6 + $0x218] sm:$0xff] %v2819
  %2828 = vst [vmem:[#allocation6 + $0x220] sm:$0xff] %v2820
  %2829 = vst [vmem:[#allocation6 + $0x228] sm:$0xff] %v2821
  %2830 = vst [vmem:[#allocation6 + $0x230] sm:$0xff] %v2822
  %2831 = vst [vmem:[#allocation6 + $0x238] sm:$0xff] %v2823
  %v2832 = vld [vmem:[%s7] sm:$0xff]
  %v2833 = vld [vmem:[%s7 + $0x8] sm:$0xff]
  %v2834 = vld [vmem:[%s7 + $0x10] sm:$0xff]
  %v2835 = vld [vmem:[%s7 + $0x18] sm:$0xff]
  %v2836 = vld [vmem:[#allocation6] sm:$0xff]
  %v2837 = vld [vmem:[#allocation6 + $0x8] sm:$0xff]
  %v2838 = vld [vmem:[#allocation6 + $0x10] sm:$0xff]
  %v2839 = vld [vmem:[#allocation6 + $0x18] sm:$0xff]
  %v2840 = vld [vmem:[#allocation6 + $0x20] sm:$0xff]
  %v2841 = vld [vmem:[#allocation6 + $0x28] sm:$0xff]
  %v2842 = vld [vmem:[#allocation6 + $0x30] sm:$0xff]
  %v2843 = vld [vmem:[#allocation6 + $0x38] sm:$0xff]
  %v2844 = vld [vmem:[#allocation6 + $0x40] sm:$0xff]
  %v2845 = vld [vmem:[#allocation6 + $0x48] sm:$0xff]
  %v2846 = vld [vmem:[#allocation6 + $0x50] sm:$0xff]
  %v2847 = vld [vmem:[#allocation6 + $0x58] sm:$0xff]
  %v2848 = vld [vmem:[#allocation6 + $0x60] sm:$0xff]
  %v2849 = vld [vmem:[#allocation6 + $0x68] sm:$0xff]
  %v2850 = vld [vmem:[#allocation6 + $0x70] sm:$0xff]
  %v2851 = vld [vmem:[#allocation6 + $0x78] sm:$0xff]
  %v2852 = vld [vmem:[#allocation6 + $0x80] sm:$0xff]
  %v2853 = vld [vmem:[#allocation6 + $0x88] sm:$0xff]
  %v2854 = vld [vmem:[#allocation6 + $0x90] sm:$0xff]
  %v2855 = vld [vmem:[#allocation6 + $0x98] sm:$0xff]
  %v2856 = vld [vmem:[#allocation6 + $0xa0] sm:$0xff]
  %v2857 = vld [vmem:[#allocation6 + $0xa8] sm:$0xff]
  %v2858 = vld [vmem:[#allocation6 + $0xb0] sm:$0xff]
  %v2859 = vld [vmem:[#allocation6 + $0xb8] sm:$0xff]
  %v2860 = vld [vmem:[#allocation6 + $0xc0] sm:$0xff]
  %v2861 = vld [vmem:[#allocation6 + $0xc8] sm:$0xff]
  %v2862 = vld [vmem:[#allocation6 + $0xd0] sm:$0xff]
  %v2863 = vld [vmem:[#allocation6 + $0xd8] sm:$0xff]
  %v2864 = vld [vmem:[#allocation6 + $0xe0] sm:$0xff]
  %v2865 = vld [vmem:[#allocation6 + $0xe8] sm:$0xff]
  %v2866 = vld [vmem:[#allocation6 + $0xf0] sm:$0xff]
  %v2867 = vld [vmem:[#allocation6 + $0xf8] sm:$0xff]
  %v2868 = vld [vmem:[#allocation6 + $0x100] sm:$0xff]
  %v2869 = vld [vmem:[#allocation6 + $0x108] sm:$0xff]
  %v2870 = vld [vmem:[#allocation6 + $0x110] sm:$0xff]
  %v2871 = vld [vmem:[#allocation6 + $0x118] sm:$0xff]
  %v2872 = vld [vmem:[#allocation6 + $0x120] sm:$0xff]
  %v2873 = vld [vmem:[#allocation6 + $0x128] sm:$0xff]
  %v2874 = vld [vmem:[#allocation6 + $0x130] sm:$0xff]
  %v2875 = vld [vmem:[#allocation6 + $0x138] sm:$0xff]
  %v2876 = vld [vmem:[#allocation6 + $0x140] sm:$0xff]
  %v2877 = vld [vmem:[#allocation6 + $0x148] sm:$0xff]
  %v2878 = vld [vmem:[#allocation6 + $0x150] sm:$0xff]
  %v2879 = vld [vmem:[#allocation6 + $0x158] sm:$0xff]
  %v2880 = vld [vmem:[#allocation6 + $0x160] sm:$0xff]
  %v2881 = vld [vmem:[#allocation6 + $0x168] sm:$0xff]
  %v2882 = vld [vmem:[#allocation6 + $0x170] sm:$0xff]
  %v2883 = vld [vmem:[#allocation6 + $0x178] sm:$0xff]
  %v2884 = vld [vmem:[#allocation6 + $0x180] sm:$0xff]
  %v2885 = vld [vmem:[#allocation6 + $0x188] sm:$0xff]
  %v2886 = vld [vmem:[#allocation6 + $0x190] sm:$0xff]
  %v2887 = vld [vmem:[#allocation6 + $0x198] sm:$0xff]
  %v2888 = vld [vmem:[#allocation6 + $0x1a0] sm:$0xff]
  %v2889 = vld [vmem:[#allocation6 + $0x1a8] sm:$0xff]
  %v2890 = vld [vmem:[#allocation6 + $0x1b0] sm:$0xff]
  %v2891 = vld [vmem:[#allocation6 + $0x1b8] sm:$0xff]
  %v2892 = vld [vmem:[#allocation6 + $0x1c0] sm:$0xff]
  %v2893 = vld [vmem:[#allocation6 + $0x1c8] sm:$0xff]
  %v2894 = vld [vmem:[#allocation6 + $0x1d0] sm:$0xff]
  %v2895 = vld [vmem:[#allocation6 + $0x1d8] sm:$0xff]
  %v2896 = vld [vmem:[#allocation6 + $0x1e0] sm:$0xff]
  %v2897 = vld [vmem:[#allocation6 + $0x1e8] sm:$0xff]
  %v2898 = vld [vmem:[#allocation6 + $0x1f0] sm:$0xff]
  %v2899 = vld [vmem:[#allocation6 + $0x1f8] sm:$0xff]
  %v2900 = vld [vmem:[#allocation6 + $0x200] sm:$0xff]
  %v2901 = vld [vmem:[#allocation6 + $0x208] sm:$0xff]
  %v2902 = vld [vmem:[#allocation6 + $0x210] sm:$0xff]
  %v2903 = vld [vmem:[#allocation6 + $0x218] sm:$0xff]
  %v2904 = vld [vmem:[#allocation6 + $0x220] sm:$0xff]
  %v2905 = vld [vmem:[#allocation6 + $0x228] sm:$0xff]
  %v2906 = vld [vmem:[#allocation6 + $0x230] sm:$0xff]
  %v2907 = vld [vmem:[#allocation6 + $0x238] sm:$0xff]
  %v2908 = vld [vmem:[%s8] sm:$0xff]
  %v2909 = vld [vmem:[%s8 + $0x8] sm:$0xff]
  %2911 = vset.pattern.permute.xlu0 0
  %2912 = vperm.xlu0 %2911, %v2908
  %v2913 = vpop.permute.xlu0 %2912
  %2916 = vset.pattern.permute.xlu0 0
  %2917 = vperm.xlu0 %2916, %v2909
  %v2918 = vpop.permute.xlu0 %2917
  %v2921 = vsel %vm208, %v2833, 0
  %v2924 = vsel %vm208, %v2835, 0
  %2926 = vmatprep.subr.mxu0 %v2837
  %2927 = vmatpush1.msra.mxu0 %v2836
  %2928 = vmatprep.subr.mxu0 %v2841
  %2929 = vmatpush1.msra.mxu0 %v2840
  %2930 = vmatprep.subr.mxu0 %v2845
  %2931 = vmatpush1.msra.mxu0 %v2844
  %2932 = vmatprep.subr.mxu0 %v2849
  %2933 = vmatpush1.msra.mxu0 %v2848
  %2934 = vmatprep.subr.mxu0 %v2853
  %2935 = vmatpush1.msra.mxu0 %v2852
  %2936 = vmatprep.subr.mxu0 %v2857
  %2937 = vmatpush1.msra.mxu0 %v2856
  %2938 = vmatprep.subr.mxu0 %v2861
  %2939 = vmatpush1.msra.mxu0 %v2860
  %2940 = vmatprep.subr.mxu0 %v2865
  %2941 = vmatpush1.msra.mxu0 %v2864
  %2942 = vmatprep.subr.mxu0 %v2869
  %2943 = vmatpush1.msra.mxu0 %v2868
  %2944 = vmatprep.subr.mxu0 %v2873
  %2945 = vmatpush1.msra.mxu0 %v2872
  %2946 = vmatprep.subr.mxu0 %v2877
  %2947 = vmatpush1.msra.mxu0 %v2876
  %2948 = vmatprep.subr.mxu0 %v2881
  %2949 = vmatpush1.msra.mxu0 %v2880
  %2950 = vmatprep.subr.mxu0 %v2885
  %2951 = vmatpush1.msra.mxu0 %v2884
  %2952 = vmatprep.subr.mxu0 %v2889
  %2953 = vmatpush1.msra.mxu0 %v2888
  %2954 = vmatprep.subr.mxu0 %v2893
  %2955 = vmatpush1.msra.mxu0 %v2892
  %2956 = vmatprep.subr.mxu0 %v2897
  %2957 = vmatpush1.msra.mxu0 %v2896
  %2958 = vmatprep.subr.mxu0 %v2901
  %2959 = vmatpush1.msra.mxu0 %v2900
  %2960 = vmatprep.subr.mxu0 %v2905
  %2961 = vmatpush1.msra.mxu0 %v2904
  %2962 = vmatprep.subr.mxu0 0.0
  %2963 = vmatpush1.msra.mxu0 0.0
  %2964 = vmatprep.subr.mxu0 0.0
  %2965 = vmatpush1.msra.mxu0 0.0
  %2966 = vmatprep.subr.mxu0 0.0
  %2967 = vmatpush1.msra.mxu0 0.0
  %2968 = vmatprep.subr.mxu0 0.0
  %2969 = vmatpush1.msra.mxu0 0.0
  %2970 = vmatprep.subr.mxu0 0.0
  %2971 = vmatpush1.msra.mxu0 0.0
  %2972 = vmatprep.subr.mxu0 0.0
  %2973 = vmatpush1.msra.mxu0 0.0
  %2974 = vmatprep.subr.mxu0 0.0
  %2975 = vmatpush1.msra.mxu0 0.0
  %2976 = vmatprep.subr.mxu0 0.0
  %2977 = vmatpush1.msra.mxu0 0.0
  %2978 = vmatprep.subr.mxu0 0.0
  %2979 = vmatpush1.msra.mxu0 0.0
  %2980 = vmatprep.subr.mxu0 0.0
  %2981 = vmatpush1.msra.mxu0 0.0
  %2982 = vmatprep.subr.mxu0 0.0
  %2983 = vmatpush1.msra.mxu0 0.0
  %2984 = vmatprep.subr.mxu0 0.0
  %2985 = vmatpush1.msra.mxu0 0.0
  %2986 = vmatprep.subr.mxu0 0.0
  %2987 = vmatpush1.msra.mxu0 0.0
  %2988 = vmatprep.subr.mxu0 0.0
  %2989 = vmatpush1.msra.mxu0 0.0
  %2990 = vmatprep.mubr.f32.mxu0 %v2921
  %2991 = vmatmul.mubr.f32.gmra.mrb[0].mxu0 %v2832
  %v2992 = vpop.f32.mrb[0].mxu0
  %v2993 = vadd.f32 %v2913, %v2992
  %v2994 = vpop.f32.mrb[0].mxu0
  %v2995 = vadd.f32 %v2913, %v2994
  %2996 = vmatprep.mubr.f32.mxu0 %v2924
  %2997 = vmatmul.mubr.f32.gmra.mrb[0].mxu0 %v2834
  %v2998 = vpop.f32.mrb[0].mxu0
  %v2999 = vadd.f32 %v2918, %v2998
  %v3000 = vpop.f32.mrb[0].mxu0
  %v3001 = vadd.f32 %v2918, %v3000
  %3002 = vdwg.mxu0
  %3003 = vmatprep.subr.mxu0 %v2839
  %3004 = vmatpush1.msra.mxu0 %v2838
  %3005 = vmatprep.subr.mxu0 %v2843
  %3006 = vmatpush1.msra.mxu0 %v2842
  %3007 = vmatprep.subr.mxu0 %v2847
  %3008 = vmatpush1.msra.mxu0 %v2846
  %3009 = vmatprep.subr.mxu0 %v2851
  %3010 = vmatpush1.msra.mxu0 %v2850
  %3011 = vmatprep.subr.mxu0 %v2855
  %3012 = vmatpush1.msra.mxu0 %v2854
  %3013 = vmatprep.subr.mxu0 %v2859
  %3014 = vmatpush1.msra.mxu0 %v2858
  %3015 = vmatprep.subr.mxu0 %v2863
  %3016 = vmatpush1.msra.mxu0 %v2862
  %3017 = vmatprep.subr.mxu0 %v2867
  %3018 = vmatpush1.msra.mxu0 %v2866
  %3019 = vmatprep.subr.mxu0 %v2871
  %3020 = vmatpush1.msra.mxu0 %v2870
  %3021 = vmatprep.subr.mxu0 %v2875
  %3022 = vmatpush1.msra.mxu0 %v2874
  %3023 = vmatprep.subr.mxu0 %v2879
  %3024 = vmatpush1.msra.mxu0 %v2878
  %3025 = vmatprep.subr.mxu0 %v2883
  %3026 = vmatpush1.msra.mxu0 %v2882
  %3027 = vmatprep.subr.mxu0 %v2887
  %3028 = vmatpush1.msra.mxu0 %v2886
  %3029 = vmatprep.subr.mxu0 %v2891
  %3030 = vmatpush1.msra.mxu0 %v2890
  %3031 = vmatprep.subr.mxu0 %v2895
  %3032 = vmatpush1.msra.mxu0 %v2894
  %3033 = vmatprep.subr.mxu0 %v2899
  %3034 = vmatpush1.msra.mxu0 %v2898
  %3035 = vmatprep.subr.mxu0 %v2903
  %3036 = vmatpush1.msra.mxu0 %v2902
  %3037 = vmatprep.subr.mxu0 %v2907
  %3038 = vmatpush1.msra.mxu0 %v2906
  %3039 = vmatprep.subr.mxu0 0.0
  %3040 = vmatpush1.msra.mxu0 0.0
  %3041 = vmatprep.subr.mxu0 0.0
  %3042 = vmatpush1.msra.mxu0 0.0
  %3043 = vmatprep.subr.mxu0 0.0
  %3044 = vmatpush1.msra.mxu0 0.0
  %3045 = vmatprep.subr.mxu0 0.0
  %3046 = vmatpush1.msra.mxu0 0.0
  %3047 = vmatprep.subr.mxu0 0.0
  %3048 = vmatpush1.msra.mxu0 0.0
  %3049 = vmatprep.subr.mxu0 0.0
  %3050 = vmatpush1.msra.mxu0 0.0
  %3051 = vmatprep.subr.mxu0 0.0
  %3052 = vmatpush1.msra.mxu0 0.0
  %3053 = vmatprep.subr.mxu0 0.0
  %3054 = vmatpush1.msra.mxu0 0.0
  %3055 = vmatprep.subr.mxu0 0.0
  %3056 = vmatpush1.msra.mxu0 0.0
  %3057 = vmatprep.subr.mxu0 0.0
  %3058 = vmatpush1.msra.mxu0 0.0
  %3059 = vmatprep.subr.mxu0 0.0
  %3060 = vmatpush1.msra.mxu0 0.0
  %3061 = vmatprep.subr.mxu0 0.0
  %3062 = vmatpush1.msra.mxu0 0.0
  %3063 = vmatprep.subr.mxu0 0.0
  %3064 = vmatpush1.msra.mxu0 0.0
  %3065 = vmatprep.subr.mxu0 0.0
  %3066 = vmatpush1.msra.mxu0 0.0
  %3067 = vmatprep.mubr.f32.mxu0 %v2921
  %3068 = vmatmul.mubr.f32.gmra.mrb[0].mxu0 %v2832
  %v3069 = vpop.f32.mrb[0].mxu0
  %v3070 = vadd.f32 %v2913, %v3069
  %v3071 = vpop.f32.mrb[0].mxu0
  %v3072 = vadd.f32 %v2913, %v3071
  %3073 = vmatprep.mubr.f32.mxu0 %v2924
  %3074 = vmatmul.mubr.f32.gmra.mrb[0].mxu0 %v2834
  %v3075 = vpop.f32.mrb[0].mxu0
  %v3076 = vadd.f32 %v2918, %v3075
  %v3077 = vpop.f32.mrb[0].mxu0
  %v3078 = vadd.f32 %v2918, %v3077
  %3079 = vdwg.mxu0
  %v3080 = vmax.f32 %v2993, 0.0
  %v3081 = vmax.f32 %v2995, 0.0
  %v3082 = vmax.f32 %v3070, 0.0
  %v3083 = vmax.f32 %v3072, 0.0
  %v3084 = vmax.f32 %v2999, 0.0
  %v3085 = vmax.f32 %v3001, 0.0
  %v3086 = vmax.f32 %v3076, 0.0
  %v3087 = vmax.f32 %v3078, 0.0
  %3088 = vst [vmem:[#allocation4 + $0x8] sm:$0xff] %v3080
  %3089 = vst [vmem:[#allocation4 + $0x10] sm:$0xff] %v3081
  %3090 = vst [vmem:[#allocation4 + $0x18] sm:$0xff] %v3082
  %3091 = vst [vmem:[#allocation4 + $0x20] sm:$0xff] %v3083
  %3092 = vst [vmem:[#allocation4 + $0x38] sm:$0xff] %v3084
  %3093 = vst [vmem:[#allocation4 + $0x40] sm:$0xff] %v3085
  %3094 = vst [vmem:[#allocation4 + $0x48] sm:$0xff] %v3086
  %3095 = vst [vmem:[#allocation4 + $0x50] sm:$0xff] %v3087
  %v3096 = vld [vmem:[#allocation4] sm:$0xff]
  %v3097 = vld [vmem:[#allocation4 + $0x8] sm:$0xff]
  %v3098 = vld [vmem:[#allocation4 + $0x10] sm:$0xff]
  %v3099 = vld [vmem:[#allocation4 + $0x18] sm:$0xff]
  %v3100 = vld [vmem:[#allocation4 + $0x20] sm:$0xff]
  %v3101 = vld [vmem:[#allocation4 + $0x30] sm:$0xff]
  %v3102 = vld [vmem:[#allocation4 + $0x38] sm:$0xff]
  %v3103 = vld [vmem:[#allocation4 + $0x40] sm:$0xff]
  %v3104 = vld [vmem:[#allocation4 + $0x48] sm:$0xff]
  %v3105 = vld [vmem:[#allocation4 + $0x50] sm:$0xff]
  %3116 = vrot.lane.b32.xlu0 %v3096, 17
  %v3117 = vpop.permute.xlu0 %3116
  %3118 = vrot.lane.b32.xlu0 %v3097, 17
  %v3119 = vpop.permute.xlu0 %3118
  %3120 = vrot.lane.b32.xlu0 %v3098, 17
  %v3121 = vpop.permute.xlu0 %3120
  %3122 = vrot.lane.b32.xlu0 %v3099, 17
  %v3123 = vpop.permute.xlu0 %3122
  %3124 = vrot.lane.b32.xlu0 %v3100, 17
  %v3125 = vpop.permute.xlu0 %3124
  %3126 = vrot.lane.b32.xlu0 %v3101, 17
  %v3127 = vpop.permute.xlu0 %3126
  %3128 = vrot.lane.b32.xlu0 %v3102, 17
  %v3129 = vpop.permute.xlu0 %3128
  %3130 = vrot.lane.b32.xlu0 %v3103, 17
  %v3131 = vpop.permute.xlu0 %3130
  %3132 = vrot.lane.b32.xlu0 %v3104, 17
  %v3133 = vpop.permute.xlu0 %3132
  %3134 = vrot.lane.b32.xlu0 %v3105, 17
  %v3135 = vpop.permute.xlu0 %3134
  %v3136 = vsel %vm163, %v3117, %v3119
  %v3137 = vsel %vm163, %v3119, %v3121
  %v3138 = vsel %vm163, %v3121, %v3123
  %v3139 = vsel %vm163, %v3123, %v3125
  %v3140 = vsel %vm163, %v3127, %v3129
  %v3141 = vsel %vm163, %v3129, %v3131
  %v3142 = vsel %vm163, %v3131, %v3133
  %v3143 = vsel %vm163, %v3133, %v3135
  %v3152 = vsel %vm144, %v3136, 0.0
  %v3153 = vsel %vm145, %v3137, 0.0
  %v3154 = vsel %vm146, %v3138, 0.0
  %v3155 = vsel %vm147, %v3139, 0.0
  %v3156 = vsel %vm144, %v3140, 0.0
  %v3157 = vsel %vm145, %v3141, 0.0
  %v3158 = vsel %vm146, %v3142, 0.0
  %v3159 = vsel %vm147, %v3143, 0.0
  %3160 = vst [vmem:[#allocation6] sm:$0xff] %v3152
  %3161 = vst [vmem:[#allocation6 + $0x8] sm:$0xff] %v3153
  %3162 = vst [vmem:[#allocation6 + $0x10] sm:$0xff] %v3154
  %3163 = vst [vmem:[#allocation6 + $0x18] sm:$0xff] %v3155
  %3164 = vst [vmem:[#allocation6 + $0x20] sm:$0xff] %v3156
  %3165 = vst [vmem:[#allocation6 + $0x28] sm:$0xff] %v3157
  %3166 = vst [vmem:[#allocation6 + $0x30] sm:$0xff] %v3158
  %3167 = vst [vmem:[#allocation6 + $0x38] sm:$0xff] %v3159
  %v3168 = vld [vmem:[#allocation4] sm:$0xff]
  %v3169 = vld [vmem:[#allocation4 + $0x8] sm:$0xff]
  %v3170 = vld [vmem:[#allocation4 + $0x10] sm:$0xff]
  %v3171 = vld [vmem:[#allocation4 + $0x18] sm:$0xff]
  %v3172 = vld [vmem:[#allocation4 + $0x20] sm:$0xff]
  %v3173 = vld [vmem:[#allocation4 + $0x30] sm:$0xff]
  %v3174 = vld [vmem:[#allocation4 + $0x38] sm:$0xff]
  %v3175 = vld [vmem:[#allocation4 + $0x40] sm:$0xff]
  %v3176 = vld [vmem:[#allocation4 + $0x48] sm:$0xff]
  %v3177 = vld [vmem:[#allocation4 + $0x50] sm:$0xff]
  %3188 = vrot.lane.b32.xlu0 %v3168, 16
  %v3189 = vpop.permute.xlu0 %3188
  %3190 = vrot.lane.b32.xlu0 %v3169, 16
  %v3191 = vpop.permute.xlu0 %3190
  %3192 = vrot.lane.b32.xlu0 %v3170, 16
  %v3193 = vpop.permute.xlu0 %3192
  %3194 = vrot.lane.b32.xlu0 %v3171, 16
  %v3195 = vpop.permute.xlu0 %3194
  %3196 = vrot.lane.b32.xlu0 %v3172, 16
  %v3197 = vpop.permute.xlu0 %3196
  %3198 = vrot.lane.b32.xlu0 %v3173, 16
  %v3199 = vpop.permute.xlu0 %3198
  %3200 = vrot.lane.b32.xlu0 %v3174, 16
  %v3201 = vpop.permute.xlu0 %3200
  %3202 = vrot.lane.b32.xlu0 %v3175, 16
  %v3203 = vpop.permute.xlu0 %3202
  %3204 = vrot.lane.b32.xlu0 %v3176, 16
  %v3205 = vpop.permute.xlu0 %3204
  %3206 = vrot.lane.b32.xlu0 %v3177, 16
  %v3207 = vpop.permute.xlu0 %3206
  %v3208 = vsel %vm208, %v3189, %v3191
  %v3209 = vsel %vm208, %v3191, %v3193
  %v3210 = vsel %vm208, %v3193, %v3195
  %v3211 = vsel %vm208, %v3195, %v3197
  %v3212 = vsel %vm208, %v3199, %v3201
  %v3213 = vsel %vm208, %v3201, %v3203
  %v3214 = vsel %vm208, %v3203, %v3205
  %v3215 = vsel %vm208, %v3205, %v3207
  %v3224 = vsel %vm189, %v3208, 0.0
  %v3225 = vsel %vm190, %v3209, 0.0
  %v3226 = vsel %vm191, %v3210, 0.0
  %v3227 = vsel %vm192, %v3211, 0.0
  %v3228 = vsel %vm189, %v3212, 0.0
  %v3229 = vsel %vm190, %v3213, 0.0
  %v3230 = vsel %vm191, %v3214, 0.0
  %v3231 = vsel %vm192, %v3215, 0.0
  %3232 = vst [vmem:[#allocation6 + $0x40] sm:$0xff] %v3224
  %3233 = vst [vmem:[#allocation6 + $0x48] sm:$0xff] %v3225
  %3234 = vst [vmem:[#allocation6 + $0x50] sm:$0xff] %v3226
  %3235 = vst [vmem:[#allocation6 + $0x58] sm:$0xff] %v3227
  %3236 = vst [vmem:[#allocation6 + $0x60] sm:$0xff] %v3228
  %3237 = vst [vmem:[#allocation6 + $0x68] sm:$0xff] %v3229
  %3238 = vst [vmem:[#allocation6 + $0x70] sm:$0xff] %v3230
  %3239 = vst [vmem:[#allocation6 + $0x78] sm:$0xff] %v3231
  %v3240 = vld [vmem:[#allocation4] sm:$0xff]
  %v3241 = vld [vmem:[#allocation4 + $0x8] sm:$0xff]
  %v3242 = vld [vmem:[#allocation4 + $0x10] sm:$0xff]
  %v3243 = vld [vmem:[#allocation4 + $0x18] sm:$0xff]
  %v3244 = vld [vmem:[#allocation4 + $0x20] sm:$0xff]
  %v3245 = vld [vmem:[#allocation4 + $0x30] sm:$0xff]
  %v3246 = vld [vmem:[#allocation4 + $0x38] sm:$0xff]
  %v3247 = vld [vmem:[#allocation4 + $0x40] sm:$0xff]
  %v3248 = vld [vmem:[#allocation4 + $0x48] sm:$0xff]
  %v3249 = vld [vmem:[#allocation4 + $0x50] sm:$0xff]
  %3260 = vrot.lane.b32.xlu0 %v3240, 15
  %v3261 = vpop.permute.xlu0 %3260
  %3262 = vrot.lane.b32.xlu0 %v3241, 15
  %v3263 = vpop.permute.xlu0 %3262
  %3264 = vrot.lane.b32.xlu0 %v3242, 15
  %v3265 = vpop.permute.xlu0 %3264
  %3266 = vrot.lane.b32.xlu0 %v3243, 15
  %v3267 = vpop.permute.xlu0 %3266
  %3268 = vrot.lane.b32.xlu0 %v3244, 15
  %v3269 = vpop.permute.xlu0 %3268
  %3270 = vrot.lane.b32.xlu0 %v3245, 15
  %v3271 = vpop.permute.xlu0 %3270
  %3272 = vrot.lane.b32.xlu0 %v3246, 15
  %v3273 = vpop.permute.xlu0 %3272
  %3274 = vrot.lane.b32.xlu0 %v3247, 15
  %v3275 = vpop.permute.xlu0 %3274
  %3276 = vrot.lane.b32.xlu0 %v3248, 15
  %v3277 = vpop.permute.xlu0 %3276
  %3278 = vrot.lane.b32.xlu0 %v3249, 15
  %v3279 = vpop.permute.xlu0 %3278
  %v3280 = vsel %vm253, %v3261, %v3263
  %v3281 = vsel %vm253, %v3263, %v3265
  %v3282 = vsel %vm253, %v3265, %v3267
  %v3283 = vsel %vm253, %v3267, %v3269
  %v3284 = vsel %vm253, %v3271, %v3273
  %v3285 = vsel %vm253, %v3273, %v3275
  %v3286 = vsel %vm253, %v3275, %v3277
  %v3287 = vsel %vm253, %v3277, %v3279
  %v3296 = vsel %vm234, %v3280, 0.0
  %v3297 = vsel %vm235, %v3281, 0.0
  %v3298 = vsel %vm236, %v3282, 0.0
  %v3299 = vsel %vm237, %v3283, 0.0
  %v3300 = vsel %vm234, %v3284, 0.0
  %v3301 = vsel %vm235, %v3285, 0.0
  %v3302 = vsel %vm236, %v3286, 0.0
  %v3303 = vsel %vm237, %v3287, 0.0
  %3304 = vst [vmem:[#allocation6 + $0x80] sm:$0xff] %v3296
  %3305 = vst [vmem:[#allocation6 + $0x88] sm:$0xff] %v3297
  %3306 = vst [vmem:[#allocation6 + $0x90] sm:$0xff] %v3298
  %3307 = vst [vmem:[#allocation6 + $0x98] sm:$0xff] %v3299
  %3308 = vst [vmem:[#allocation6 + $0xa0] sm:$0xff] %v3300
  %3309 = vst [vmem:[#allocation6 + $0xa8] sm:$0xff] %v3301
  %3310 = vst [vmem:[#allocation6 + $0xb0] sm:$0xff] %v3302
  %3311 = vst [vmem:[#allocation6 + $0xb8] sm:$0xff] %v3303
  %v3312 = vld [vmem:[#allocation4] sm:$0xff]
  %v3313 = vld [vmem:[#allocation4 + $0x8] sm:$0xff]
  %v3314 = vld [vmem:[#allocation4 + $0x10] sm:$0xff]
  %v3315 = vld [vmem:[#allocation4 + $0x18] sm:$0xff]
  %v3316 = vld [vmem:[#allocation4 + $0x20] sm:$0xff]
  %v3317 = vld [vmem:[#allocation4 + $0x30] sm:$0xff]
  %v3318 = vld [vmem:[#allocation4 + $0x38] sm:$0xff]
  %v3319 = vld [vmem:[#allocation4 + $0x40] sm:$0xff]
  %v3320 = vld [vmem:[#allocation4 + $0x48] sm:$0xff]
  %v3321 = vld [vmem:[#allocation4 + $0x50] sm:$0xff]
  %3332 = vrot.lane.b32.xlu0 %v3312, 1
  %v3333 = vpop.permute.xlu0 %3332
  %3334 = vrot.lane.b32.xlu0 %v3313, 1
  %v3335 = vpop.permute.xlu0 %3334
  %3336 = vrot.lane.b32.xlu0 %v3314, 1
  %v3337 = vpop.permute.xlu0 %3336
  %3338 = vrot.lane.b32.xlu0 %v3315, 1
  %v3339 = vpop.permute.xlu0 %3338
  %3340 = vrot.lane.b32.xlu0 %v3316, 1
  %v3341 = vpop.permute.xlu0 %3340
  %3342 = vrot.lane.b32.xlu0 %v3317, 1
  %v3343 = vpop.permute.xlu0 %3342
  %3344 = vrot.lane.b32.xlu0 %v3318, 1
  %v3345 = vpop.permute.xlu0 %3344
  %3346 = vrot.lane.b32.xlu0 %v3319, 1
  %v3347 = vpop.permute.xlu0 %3346
  %3348 = vrot.lane.b32.xlu0 %v3320, 1
  %v3349 = vpop.permute.xlu0 %3348
  %3350 = vrot.lane.b32.xlu0 %v3321, 1
  %v3351 = vpop.permute.xlu0 %3350
  %v3352 = vsel %vm298, %v3333, %v3335
  %v3353 = vsel %vm298, %v3335, %v3337
  %v3354 = vsel %vm298, %v3337, %v3339
  %v3355 = vsel %vm298, %v3339, %v3341
  %v3356 = vsel %vm298, %v3343, %v3345
  %v3357 = vsel %vm298, %v3345, %v3347
  %v3358 = vsel %vm298, %v3347, %v3349
  %v3359 = vsel %vm298, %v3349, %v3351
  %v3368 = vsel %vm279, %v3352, 0.0
  %v3369 = vsel %vm280, %v3353, 0.0
  %v3370 = vsel %vm281, %v3354, 0.0
  %v3371 = vsel %vm282, %v3355, 0.0
  %v3372 = vsel %vm279, %v3356, 0.0
  %v3373 = vsel %vm280, %v3357, 0.0
  %v3374 = vsel %vm281, %v3358, 0.0
  %v3375 = vsel %vm282, %v3359, 0.0
  %3376 = vst [vmem:[#allocation6 + $0xc0] sm:$0xff] %v3368
  %3377 = vst [vmem:[#allocation6 + $0xc8] sm:$0xff] %v3369
  %3378 = vst [vmem:[#allocation6 + $0xd0] sm:$0xff] %v3370
  %3379 = vst [vmem:[#allocation6 + $0xd8] sm:$0xff] %v3371
  %3380 = vst [vmem:[#allocation6 + $0xe0] sm:$0xff] %v3372
  %3381 = vst [vmem:[#allocation6 + $0xe8] sm:$0xff] %v3373
  %3382 = vst [vmem:[#allocation6 + $0xf0] sm:$0xff] %v3374
  %3383 = vst [vmem:[#allocation6 + $0xf8] sm:$0xff] %v3375
  %v3384 = vld [vmem:[#allocation4 + $0x8] sm:$0xff]
  %v3385 = vld [vmem:[#allocation4 + $0x10] sm:$0xff]
  %v3386 = vld [vmem:[#allocation4 + $0x18] sm:$0xff]
  %v3387 = vld [vmem:[#allocation4 + $0x20] sm:$0xff]
  %v3388 = vld [vmem:[#allocation4 + $0x38] sm:$0xff]
  %v3389 = vld [vmem:[#allocation4 + $0x40] sm:$0xff]
  %v3390 = vld [vmem:[#allocation4 + $0x48] sm:$0xff]
  %v3391 = vld [vmem:[#allocation4 + $0x50] sm:$0xff]
  %3392 = vst [vmem:[#allocation6 + $0x100] sm:$0xff] %v3384
  %3393 = vst [vmem:[#allocation6 + $0x108] sm:$0xff] %v3385
  %3394 = vst [vmem:[#allocation6 + $0x110] sm:$0xff] %v3386
  %3395 = vst [vmem:[#allocation6 + $0x118] sm:$0xff] %v3387
  %3396 = vst [vmem:[#allocation6 + $0x120] sm:$0xff] %v3388
  %3397 = vst [vmem:[#allocation6 + $0x128] sm:$0xff] %v3389
  %3398 = vst [vmem:[#allocation6 + $0x130] sm:$0xff] %v3390
  %3399 = vst [vmem:[#allocation6 + $0x138] sm:$0xff] %v3391
  %v3400 = vld [vmem:[#allocation4 + $0x8] sm:$0xff]
  %v3401 = vld [vmem:[#allocation4 + $0x10] sm:$0xff]
  %v3402 = vld [vmem:[#allocation4 + $0x18] sm:$0xff]
  %v3403 = vld [vmem:[#allocation4 + $0x20] sm:$0xff]
  %v3404 = vld [vmem:[#allocation4 + $0x28] sm:$0xff]
  %v3405 = vld [vmem:[#allocation4 + $0x38] sm:$0xff]
  %v3406 = vld [vmem:[#allocation4 + $0x40] sm:$0xff]
  %v3407 = vld [vmem:[#allocation4 + $0x48] sm:$0xff]
  %v3408 = vld [vmem:[#allocation4 + $0x50] sm:$0xff]
  %v3409 = vld [vmem:[#allocation4 + $0x58] sm:$0xff]
  %3420 = vrot.lane.b32.xlu0 %v3400, 127
  %v3421 = vpop.permute.xlu0 %3420
  %3422 = vrot.lane.b32.xlu0 %v3401, 127
  %v3423 = vpop.permute.xlu0 %3422
  %3424 = vrot.lane.b32.xlu0 %v3402, 127
  %v3425 = vpop.permute.xlu0 %3424
  %3426 = vrot.lane.b32.xlu0 %v3403, 127
  %v3427 = vpop.permute.xlu0 %3426
  %3428 = vrot.lane.b32.xlu0 %v3404, 127
  %v3429 = vpop.permute.xlu0 %3428
  %3430 = vrot.lane.b32.xlu0 %v3405, 127
  %v3431 = vpop.permute.xlu0 %3430
  %3432 = vrot.lane.b32.xlu0 %v3406, 127
  %v3433 = vpop.permute.xlu0 %3432
  %3434 = vrot.lane.b32.xlu0 %v3407, 127
  %v3435 = vpop.permute.xlu0 %3434
  %3436 = vrot.lane.b32.xlu0 %v3408, 127
  %v3437 = vpop.permute.xlu0 %3436
  %3438 = vrot.lane.b32.xlu0 %v3409, 127
  %v3439 = vpop.permute.xlu0 %3438
  %v3440 = vsel %vm351, %v3421, %v3423
  %v3441 = vsel %vm351, %v3423, %v3425
  %v3442 = vsel %vm351, %v3425, %v3427
  %v3443 = vsel %vm351, %v3427, %v3429
  %v3444 = vsel %vm351, %v3431, %v3433
  %v3445 = vsel %vm351, %v3433, %v3435
  %v3446 = vsel %vm351, %v3435, %v3437
  %v3447 = vsel %vm351, %v3437, %v3439
  %v3456 = vsel %vm332, %v3440, 0.0
  %v3457 = vsel %vm333, %v3441, 0.0
  %v3458 = vsel %vm334, %v3442, 0.0
  %v3459 = vsel %vm335, %v3443, 0.0
  %v3460 = vsel %vm332, %v3444, 0.0
  %v3461 = vsel %vm333, %v3445, 0.0
  %v3462 = vsel %vm334, %v3446, 0.0
  %v3463 = vsel %vm335, %v3447, 0.0
  %3464 = vst [vmem:[#allocation6 + $0x140] sm:$0xff] %v3456
  %3465 = vst [vmem:[#allocation6 + $0x148] sm:$0xff] %v3457
  %3466 = vst [vmem:[#allocation6 + $0x150] sm:$0xff] %v3458
  %3467 = vst [vmem:[#allocation6 + $0x158] sm:$0xff] %v3459
  %3468 = vst [vmem:[#allocation6 + $0x160] sm:$0xff] %v3460
  %3469 = vst [vmem:[#allocation6 + $0x168] sm:$0xff] %v3461
  %3470 = vst [vmem:[#allocation6 + $0x170] sm:$0xff] %v3462
  %3471 = vst [vmem:[#allocation6 + $0x178] sm:$0xff] %v3463
  %v3472 = vld [vmem:[#allocation4 + $0x8] sm:$0xff]
  %v3473 = vld [vmem:[#allocation4 + $0x10] sm:$0xff]
  %v3474 = vld [vmem:[#allocation4 + $0x18] sm:$0xff]
  %v3475 = vld [vmem:[#allocation4 + $0x20] sm:$0xff]
  %v3476 = vld [vmem:[#allocation4 + $0x28] sm:$0xff]
  %v3477 = vld [vmem:[#allocation4 + $0x38] sm:$0xff]
  %v3478 = vld [vmem:[#allocation4 + $0x40] sm:$0xff]
  %v3479 = vld [vmem:[#allocation4 + $0x48] sm:$0xff]
  %v3480 = vld [vmem:[#allocation4 + $0x50] sm:$0xff]
  %v3481 = vld [vmem:[#allocation4 + $0x58] sm:$0xff]
  %3492 = vrot.lane.b32.xlu0 %v3472, 113
  %v3493 = vpop.permute.xlu0 %3492
  %3494 = vrot.lane.b32.xlu0 %v3473, 113
  %v3495 = vpop.permute.xlu0 %3494
  %3496 = vrot.lane.b32.xlu0 %v3474, 113
  %v3497 = vpop.permute.xlu0 %3496
  %3498 = vrot.lane.b32.xlu0 %v3475, 113
  %v3499 = vpop.permute.xlu0 %3498
  %3500 = vrot.lane.b32.xlu0 %v3476, 113
  %v3501 = vpop.permute.xlu0 %3500
  %3502 = vrot.lane.b32.xlu0 %v3477, 113
  %v3503 = vpop.permute.xlu0 %3502
  %3504 = vrot.lane.b32.xlu0 %v3478, 113
  %v3505 = vpop.permute.xlu0 %3504
  %3506 = vrot.lane.b32.xlu0 %v3479, 113
  %v3507 = vpop.permute.xlu0 %3506
  %3508 = vrot.lane.b32.xlu0 %v3480, 113
  %v3509 = vpop.permute.xlu0 %3508
  %3510 = vrot.lane.b32.xlu0 %v3481, 113
  %v3511 = vpop.permute.xlu0 %3510
  %v3512 = vsel %vm396, %v3493, %v3495
  %v3513 = vsel %vm396, %v3495, %v3497
  %v3514 = vsel %vm396, %v3497, %v3499
  %v3515 = vsel %vm396, %v3499, %v3501
  %v3516 = vsel %vm396, %v3503, %v3505
  %v3517 = vsel %vm396, %v3505, %v3507
  %v3518 = vsel %vm396, %v3507, %v3509
  %v3519 = vsel %vm396, %v3509, %v3511
  %v3528 = vsel %vm377, %v3512, 0.0
  %v3529 = vsel %vm378, %v3513, 0.0
  %v3530 = vsel %vm379, %v3514, 0.0
  %v3531 = vsel %vm380, %v3515, 0.0
  %v3532 = vsel %vm377, %v3516, 0.0
  %v3533 = vsel %vm378, %v3517, 0.0
  %v3534 = vsel %vm379, %v3518, 0.0
  %v3535 = vsel %vm380, %v3519, 0.0
  %3536 = vst [vmem:[#allocation6 + $0x180] sm:$0xff] %v3528
  %3537 = vst [vmem:[#allocation6 + $0x188] sm:$0xff] %v3529
  %3538 = vst [vmem:[#allocation6 + $0x190] sm:$0xff] %v3530
  %3539 = vst [vmem:[#allocation6 + $0x198] sm:$0xff] %v3531
  %3540 = vst [vmem:[#allocation6 + $0x1a0] sm:$0xff] %v3532
  %3541 = vst [vmem:[#allocation6 + $0x1a8] sm:$0xff] %v3533
  %3542 = vst [vmem:[#allocation6 + $0x1b0] sm:$0xff] %v3534
  %3543 = vst [vmem:[#allocation6 + $0x1b8] sm:$0xff] %v3535
  %v3544 = vld [vmem:[#allocation4 + $0x8] sm:$0xff]
  %v3545 = vld [vmem:[#allocation4 + $0x10] sm:$0xff]
  %v3546 = vld [vmem:[#allocation4 + $0x18] sm:$0xff]
  %v3547 = vld [vmem:[#allocation4 + $0x20] sm:$0xff]
  %v3548 = vld [vmem:[#allocation4 + $0x28] sm:$0xff]
  %v3549 = vld [vmem:[#allocation4 + $0x38] sm:$0xff]
  %v3550 = vld [vmem:[#allocation4 + $0x40] sm:$0xff]
  %v3551 = vld [vmem:[#allocation4 + $0x48] sm:$0xff]
  %v3552 = vld [vmem:[#allocation4 + $0x50] sm:$0xff]
  %v3553 = vld [vmem:[#allocation4 + $0x58] sm:$0xff]
  %3564 = vrot.lane.b32.xlu0 %v3544, 112
  %v3565 = vpop.permute.xlu0 %3564
  %3566 = vrot.lane.b32.xlu0 %v3545, 112
  %v3567 = vpop.permute.xlu0 %3566
  %3568 = vrot.lane.b32.xlu0 %v3546, 112
  %v3569 = vpop.permute.xlu0 %3568
  %3570 = vrot.lane.b32.xlu0 %v3547, 112
  %v3571 = vpop.permute.xlu0 %3570
  %3572 = vrot.lane.b32.xlu0 %v3548, 112
  %v3573 = vpop.permute.xlu0 %3572
  %3574 = vrot.lane.b32.xlu0 %v3549, 112
  %v3575 = vpop.permute.xlu0 %3574
  %3576 = vrot.lane.b32.xlu0 %v3550, 112
  %v3577 = vpop.permute.xlu0 %3576
  %3578 = vrot.lane.b32.xlu0 %v3551, 112
  %v3579 = vpop.permute.xlu0 %3578
  %3580 = vrot.lane.b32.xlu0 %v3552, 112
  %v3581 = vpop.permute.xlu0 %3580
  %3582 = vrot.lane.b32.xlu0 %v3553, 112
  %v3583 = vpop.permute.xlu0 %3582
  %v3584 = vsel %vm441, %v3565, %v3567
  %v3585 = vsel %vm441, %v3567, %v3569
  %v3586 = vsel %vm441, %v3569, %v3571
  %v3587 = vsel %vm441, %v3571, %v3573
  %v3588 = vsel %vm441, %v3575, %v3577
  %v3589 = vsel %vm441, %v3577, %v3579
  %v3590 = vsel %vm441, %v3579, %v3581
  %v3591 = vsel %vm441, %v3581, %v3583
  %v3600 = vsel %vm422, %v3584, 0.0
  %v3601 = vsel %vm423, %v3585, 0.0
  %v3602 = vsel %vm424, %v3586, 0.0
  %v3603 = vsel %vm425, %v3587, 0.0
  %v3604 = vsel %vm422, %v3588, 0.0
  %v3605 = vsel %vm423, %v3589, 0.0
  %v3606 = vsel %vm424, %v3590, 0.0
  %v3607 = vsel %vm425, %v3591, 0.0
  %3608 = vst [vmem:[#allocation6 + $0x1c0] sm:$0xff] %v3600
  %3609 = vst [vmem:[#allocation6 + $0x1c8] sm:$0xff] %v3601
  %3610 = vst [vmem:[#allocation6 + $0x1d0] sm:$0xff] %v3602
  %3611 = vst [vmem:[#allocation6 + $0x1d8] sm:$0xff] %v3603
  %3612 = vst [vmem:[#allocation6 + $0x1e0] sm:$0xff] %v3604
  %3613 = vst [vmem:[#allocation6 + $0x1e8] sm:$0xff] %v3605
  %3614 = vst [vmem:[#allocation6 + $0x1f0] sm:$0xff] %v3606
  %3615 = vst [vmem:[#allocation6 + $0x1f8] sm:$0xff] %v3607
  %v3616 = vld [vmem:[#allocation4 + $0x8] sm:$0xff]
  %v3617 = vld [vmem:[#allocation4 + $0x10] sm:$0xff]
  %v3618 = vld [vmem:[#allocation4 + $0x18] sm:$0xff]
  %v3619 = vld [vmem:[#allocation4 + $0x20] sm:$0xff]
  %v3620 = vld [vmem:[#allocation4 + $0x28] sm:$0xff]
  %v3621 = vld [vmem:[#allocation4 + $0x38] sm:$0xff]
  %v3622 = vld [vmem:[#allocation4 + $0x40] sm:$0xff]
  %v3623 = vld [vmem:[#allocation4 + $0x48] sm:$0xff]
  %v3624 = vld [vmem:[#allocation4 + $0x50] sm:$0xff]
  %v3625 = vld [vmem:[#allocation4 + $0x58] sm:$0xff]
  %3636 = vrot.lane.b32.xlu0 %v3616, 111
  %v3637 = vpop.permute.xlu0 %3636
  %3638 = vrot.lane.b32.xlu0 %v3617, 111
  %v3639 = vpop.permute.xlu0 %3638
  %3640 = vrot.lane.b32.xlu0 %v3618, 111
  %v3641 = vpop.permute.xlu0 %3640
  %3642 = vrot.lane.b32.xlu0 %v3619, 111
  %v3643 = vpop.permute.xlu0 %3642
  %3644 = vrot.lane.b32.xlu0 %v3620, 111
  %v3645 = vpop.permute.xlu0 %3644
  %3646 = vrot.lane.b32.xlu0 %v3621, 111
  %v3647 = vpop.permute.xlu0 %3646
  %3648 = vrot.lane.b32.xlu0 %v3622, 111
  %v3649 = vpop.permute.xlu0 %3648
  %3650 = vrot.lane.b32.xlu0 %v3623, 111
  %v3651 = vpop.permute.xlu0 %3650
  %3652 = vrot.lane.b32.xlu0 %v3624, 111
  %v3653 = vpop.permute.xlu0 %3652
  %3654 = vrot.lane.b32.xlu0 %v3625, 111
  %v3655 = vpop.permute.xlu0 %3654
  %v3656 = vsel %vm486, %v3637, %v3639
  %v3657 = vsel %vm486, %v3639, %v3641
  %v3658 = vsel %vm486, %v3641, %v3643
  %v3659 = vsel %vm486, %v3643, %v3645
  %v3660 = vsel %vm486, %v3647, %v3649
  %v3661 = vsel %vm486, %v3649, %v3651
  %v3662 = vsel %vm486, %v3651, %v3653
  %v3663 = vsel %vm486, %v3653, %v3655
  %v3672 = vsel %vm467, %v3656, 0.0
  %v3673 = vsel %vm468, %v3657, 0.0
  %v3674 = vsel %vm469, %v3658, 0.0
  %v3675 = vsel %vm470, %v3659, 0.0
  %v3676 = vsel %vm467, %v3660, 0.0
  %v3677 = vsel %vm468, %v3661, 0.0
  %v3678 = vsel %vm469, %v3662, 0.0
  %v3679 = vsel %vm470, %v3663, 0.0
  %3680 = vst [vmem:[#allocation6 + $0x200] sm:$0xff] %v3672
  %3681 = vst [vmem:[#allocation6 + $0x208] sm:$0xff] %v3673
  %3682 = vst [vmem:[#allocation6 + $0x210] sm:$0xff] %v3674
  %3683 = vst [vmem:[#allocation6 + $0x218] sm:$0xff] %v3675
  %3684 = vst [vmem:[#allocation6 + $0x220] sm:$0xff] %v3676
  %3685 = vst [vmem:[#allocation6 + $0x228] sm:$0xff] %v3677
  %3686 = vst [vmem:[#allocation6 + $0x230] sm:$0xff] %v3678
  %3687 = vst [vmem:[#allocation6 + $0x238] sm:$0xff] %v3679
  %v3688 = vld [vmem:[%s9] sm:$0xff]
  %v3689 = vld [vmem:[%s9 + $0x8] sm:$0xff]
  %v3690 = vld [vmem:[%s9 + $0x10] sm:$0xff]
  %v3691 = vld [vmem:[%s9 + $0x18] sm:$0xff]
  %v3692 = vld [vmem:[#allocation6] sm:$0xff]
  %v3693 = vld [vmem:[#allocation6 + $0x8] sm:$0xff]
  %v3694 = vld [vmem:[#allocation6 + $0x10] sm:$0xff]
  %v3695 = vld [vmem:[#allocation6 + $0x18] sm:$0xff]
  %v3696 = vld [vmem:[#allocation6 + $0x20] sm:$0xff]
  %v3697 = vld [vmem:[#allocation6 + $0x28] sm:$0xff]
  %v3698 = vld [vmem:[#allocation6 + $0x30] sm:$0xff]
  %v3699 = vld [vmem:[#allocation6 + $0x38] sm:$0xff]
  %v3700 = vld [vmem:[#allocation6 + $0x40] sm:$0xff]
  %v3701 = vld [vmem:[#allocation6 + $0x48] sm:$0xff]
  %v3702 = vld [vmem:[#allocation6 + $0x50] sm:$0xff]
  %v3703 = vld [vmem:[#allocation6 + $0x58] sm:$0xff]
  %v3704 = vld [vmem:[#allocation6 + $0x60] sm:$0xff]
  %v3705 = vld [vmem:[#allocation6 + $0x68] sm:$0xff]
  %v3706 = vld [vmem:[#allocation6 + $0x70] sm:$0xff]
  %v3707 = vld [vmem:[#allocation6 + $0x78] sm:$0xff]
  %v3708 = vld [vmem:[#allocation6 + $0x80] sm:$0xff]
  %v3709 = vld [vmem:[#allocation6 + $0x88] sm:$0xff]
  %v3710 = vld [vmem:[#allocation6 + $0x90] sm:$0xff]
  %v3711 = vld [vmem:[#allocation6 + $0x98] sm:$0xff]
  %v3712 = vld [vmem:[#allocation6 + $0xa0] sm:$0xff]
  %v3713 = vld [vmem:[#allocation6 + $0xa8] sm:$0xff]
  %v3714 = vld [vmem:[#allocation6 + $0xb0] sm:$0xff]
  %v3715 = vld [vmem:[#allocation6 + $0xb8] sm:$0xff]
  %v3716 = vld [vmem:[#allocation6 + $0xc0] sm:$0xff]
  %v3717 = vld [vmem:[#allocation6 + $0xc8] sm:$0xff]
  %v3718 = vld [vmem:[#allocation6 + $0xd0] sm:$0xff]
  %v3719 = vld [vmem:[#allocation6 + $0xd8] sm:$0xff]
  %v3720 = vld [vmem:[#allocation6 + $0xe0] sm:$0xff]
  %v3721 = vld [vmem:[#allocation6 + $0xe8] sm:$0xff]
  %v3722 = vld [vmem:[#allocation6 + $0xf0] sm:$0xff]
  %v3723 = vld [vmem:[#allocation6 + $0xf8] sm:$0xff]
  %v3724 = vld [vmem:[#allocation6 + $0x100] sm:$0xff]
  %v3725 = vld [vmem:[#allocation6 + $0x108] sm:$0xff]
  %v3726 = vld [vmem:[#allocation6 + $0x110] sm:$0xff]
  %v3727 = vld [vmem:[#allocation6 + $0x118] sm:$0xff]
  %v3728 = vld [vmem:[#allocation6 + $0x120] sm:$0xff]
  %v3729 = vld [vmem:[#allocation6 + $0x128] sm:$0xff]
  %v3730 = vld [vmem:[#allocation6 + $0x130] sm:$0xff]
  %v3731 = vld [vmem:[#allocation6 + $0x138] sm:$0xff]
  %v3732 = vld [vmem:[#allocation6 + $0x140] sm:$0xff]
  %v3733 = vld [vmem:[#allocation6 + $0x148] sm:$0xff]
  %v3734 = vld [vmem:[#allocation6 + $0x150] sm:$0xff]
  %v3735 = vld [vmem:[#allocation6 + $0x158] sm:$0xff]
  %v3736 = vld [vmem:[#allocation6 + $0x160] sm:$0xff]
  %v3737 = vld [vmem:[#allocation6 + $0x168] sm:$0xff]
  %v3738 = vld [vmem:[#allocation6 + $0x170] sm:$0xff]
  %v3739 = vld [vmem:[#allocation6 + $0x178] sm:$0xff]
  %v3740 = vld [vmem:[#allocation6 + $0x180] sm:$0xff]
  %v3741 = vld [vmem:[#allocation6 + $0x188] sm:$0xff]
  %v3742 = vld [vmem:[#allocation6 + $0x190] sm:$0xff]
  %v3743 = vld [vmem:[#allocation6 + $0x198] sm:$0xff]
  %v3744 = vld [vmem:[#allocation6 + $0x1a0] sm:$0xff]
  %v3745 = vld [vmem:[#allocation6 + $0x1a8] sm:$0xff]
  %v3746 = vld [vmem:[#allocation6 + $0x1b0] sm:$0xff]
  %v3747 = vld [vmem:[#allocation6 + $0x1b8] sm:$0xff]
  %v3748 = vld [vmem:[#allocation6 + $0x1c0] sm:$0xff]
  %v3749 = vld [vmem:[#allocation6 + $0x1c8] sm:$0xff]
  %v3750 = vld [vmem:[#allocation6 + $0x1d0] sm:$0xff]
  %v3751 = vld [vmem:[#allocation6 + $0x1d8] sm:$0xff]
  %v3752 = vld [vmem:[#allocation6 + $0x1e0] sm:$0xff]
  %v3753 = vld [vmem:[#allocation6 + $0x1e8] sm:$0xff]
  %v3754 = vld [vmem:[#allocation6 + $0x1f0] sm:$0xff]
  %v3755 = vld [vmem:[#allocation6 + $0x1f8] sm:$0xff]
  %v3756 = vld [vmem:[#allocation6 + $0x200] sm:$0xff]
  %v3757 = vld [vmem:[#allocation6 + $0x208] sm:$0xff]
  %v3758 = vld [vmem:[#allocation6 + $0x210] sm:$0xff]
  %v3759 = vld [vmem:[#allocation6 + $0x218] sm:$0xff]
  %v3760 = vld [vmem:[#allocation6 + $0x220] sm:$0xff]
  %v3761 = vld [vmem:[#allocation6 + $0x228] sm:$0xff]
  %v3762 = vld [vmem:[#allocation6 + $0x230] sm:$0xff]
  %v3763 = vld [vmem:[#allocation6 + $0x238] sm:$0xff]
  %v3764 = vld [vmem:[%s10] sm:$0xff]
  %v3765 = vld [vmem:[%s10 + $0x8] sm:$0xff]
  %3767 = vset.pattern.permute.xlu0 0
  %3768 = vperm.xlu0 %3767, %v3764
  %v3769 = vpop.permute.xlu0 %3768
  %3772 = vset.pattern.permute.xlu0 0
  %3773 = vperm.xlu0 %3772, %v3765
  %v3774 = vpop.permute.xlu0 %3773
  %v3777 = vsel %vm208, %v3689, 0
  %v3780 = vsel %vm208, %v3691, 0
  %3782 = vmatprep.subr.mxu0 %v3693
  %3783 = vmatpush1.msra.mxu0 %v3692
  %3784 = vmatprep.subr.mxu0 %v3697
  %3785 = vmatpush1.msra.mxu0 %v3696
  %3786 = vmatprep.subr.mxu0 %v3701
  %3787 = vmatpush1.msra.mxu0 %v3700
  %3788 = vmatprep.subr.mxu0 %v3705
  %3789 = vmatpush1.msra.mxu0 %v3704
  %3790 = vmatprep.subr.mxu0 %v3709
  %3791 = vmatpush1.msra.mxu0 %v3708
  %3792 = vmatprep.subr.mxu0 %v3713
  %3793 = vmatpush1.msra.mxu0 %v3712
  %3794 = vmatprep.subr.mxu0 %v3717
  %3795 = vmatpush1.msra.mxu0 %v3716
  %3796 = vmatprep.subr.mxu0 %v3721
  %3797 = vmatpush1.msra.mxu0 %v3720
  %3798 = vmatprep.subr.mxu0 %v3725
  %3799 = vmatpush1.msra.mxu0 %v3724
  %3800 = vmatprep.subr.mxu0 %v3729
  %3801 = vmatpush1.msra.mxu0 %v3728
  %3802 = vmatprep.subr.mxu0 %v3733
  %3803 = vmatpush1.msra.mxu0 %v3732
  %3804 = vmatprep.subr.mxu0 %v3737
  %3805 = vmatpush1.msra.mxu0 %v3736
  %3806 = vmatprep.subr.mxu0 %v3741
  %3807 = vmatpush1.msra.mxu0 %v3740
  %3808 = vmatprep.subr.mxu0 %v3745
  %3809 = vmatpush1.msra.mxu0 %v3744
  %3810 = vmatprep.subr.mxu0 %v3749
  %3811 = vmatpush1.msra.mxu0 %v3748
  %3812 = vmatprep.subr.mxu0 %v3753
  %3813 = vmatpush1.msra.mxu0 %v3752
  %3814 = vmatprep.subr.mxu0 %v3757
  %3815 = vmatpush1.msra.mxu0 %v3756
  %3816 = vmatprep.subr.mxu0 %v3761
  %3817 = vmatpush1.msra.mxu0 %v3760
  %3818 = vmatprep.subr.mxu0 0.0
  %3819 = vmatpush1.msra.mxu0 0.0
  %3820 = vmatprep.subr.mxu0 0.0
  %3821 = vmatpush1.msra.mxu0 0.0
  %3822 = vmatprep.subr.mxu0 0.0
  %3823 = vmatpush1.msra.mxu0 0.0
  %3824 = vmatprep.subr.mxu0 0.0
  %3825 = vmatpush1.msra.mxu0 0.0
  %3826 = vmatprep.subr.mxu0 0.0
  %3827 = vmatpush1.msra.mxu0 0.0
  %3828 = vmatprep.subr.mxu0 0.0
  %3829 = vmatpush1.msra.mxu0 0.0
  %3830 = vmatprep.subr.mxu0 0.0
  %3831 = vmatpush1.msra.mxu0 0.0
  %3832 = vmatprep.subr.mxu0 0.0
  %3833 = vmatpush1.msra.mxu0 0.0
  %3834 = vmatprep.subr.mxu0 0.0
  %3835 = vmatpush1.msra.mxu0 0.0
  %3836 = vmatprep.subr.mxu0 0.0
  %3837 = vmatpush1.msra.mxu0 0.0
  %3838 = vmatprep.subr.mxu0 0.0
  %3839 = vmatpush1.msra.mxu0 0.0
  %3840 = vmatprep.subr.mxu0 0.0
  %3841 = vmatpush1.msra.mxu0 0.0
  %3842 = vmatprep.subr.mxu0 0.0
  %3843 = vmatpush1.msra.mxu0 0.0
  %3844 = vmatprep.subr.mxu0 0.0
  %3845 = vmatpush1.msra.mxu0 0.0
  %3846 = vmatprep.mubr.f32.mxu0 %v3777
  %3847 = vmatmul.mubr.f32.gmra.mrb[0].mxu0 %v3688
  %v3848 = vpop.f32.mrb[0].mxu0
  %v3849 = vadd.f32 %v3769, %v3848
  %v3850 = vpop.f32.mrb[0].mxu0
  %v3851 = vadd.f32 %v3769, %v3850
  %3852 = vmatprep.mubr.f32.mxu0 %v3780
  %3853 = vmatmul.mubr.f32.gmra.mrb[0].mxu0 %v3690
  %v3854 = vpop.f32.mrb[0].mxu0
  %v3855 = vadd.f32 %v3774, %v3854
  %v3856 = vpop.f32.mrb[0].mxu0
  %v3857 = vadd.f32 %v3774, %v3856
  %3858 = vdwg.mxu0
  %3859 = vmatprep.subr.mxu0 %v3695
  %3860 = vmatpush1.msra.mxu0 %v3694
  %3861 = vmatprep.subr.mxu0 %v3699
  %3862 = vmatpush1.msra.mxu0 %v3698
  %3863 = vmatprep.subr.mxu0 %v3703
  %3864 = vmatpush1.msra.mxu0 %v3702
  %3865 = vmatprep.subr.mxu0 %v3707
  %3866 = vmatpush1.msra.mxu0 %v3706
  %3867 = vmatprep.subr.mxu0 %v3711
  %3868 = vmatpush1.msra.mxu0 %v3710
  %3869 = vmatprep.subr.mxu0 %v3715
  %3870 = vmatpush1.msra.mxu0 %v3714
  %3871 = vmatprep.subr.mxu0 %v3719
  %3872 = vmatpush1.msra.mxu0 %v3718
  %3873 = vmatprep.subr.mxu0 %v3723
  %3874 = vmatpush1.msra.mxu0 %v3722
  %3875 = vmatprep.subr.mxu0 %v3727
  %3876 = vmatpush1.msra.mxu0 %v3726
  %3877 = vmatprep.subr.mxu0 %v3731
  %3878 = vmatpush1.msra.mxu0 %v3730
  %3879 = vmatprep.subr.mxu0 %v3735
  %3880 = vmatpush1.msra.mxu0 %v3734
  %3881 = vmatprep.subr.mxu0 %v3739
  %3882 = vmatpush1.msra.mxu0 %v3738
  %3883 = vmatprep.subr.mxu0 %v3743
  %3884 = vmatpush1.msra.mxu0 %v3742
  %3885 = vmatprep.subr.mxu0 %v3747
  %3886 = vmatpush1.msra.mxu0 %v3746
  %3887 = vmatprep.subr.mxu0 %v3751
  %3888 = vmatpush1.msra.mxu0 %v3750
  %3889 = vmatprep.subr.mxu0 %v3755
  %3890 = vmatpush1.msra.mxu0 %v3754
  %3891 = vmatprep.subr.mxu0 %v3759
  %3892 = vmatpush1.msra.mxu0 %v3758
  %3893 = vmatprep.subr.mxu0 %v3763
  %3894 = vmatpush1.msra.mxu0 %v3762
  %3895 = vmatprep.subr.mxu0 0.0
  %3896 = vmatpush1.msra.mxu0 0.0
  %3897 = vmatprep.subr.mxu0 0.0
  %3898 = vmatpush1.msra.mxu0 0.0
  %3899 = vmatprep.subr.mxu0 0.0
  %3900 = vmatpush1.msra.mxu0 0.0
  %3901 = vmatprep.subr.mxu0 0.0
  %3902 = vmatpush1.msra.mxu0 0.0
  %3903 = vmatprep.subr.mxu0 0.0
  %3904 = vmatpush1.msra.mxu0 0.0
  %3905 = vmatprep.subr.mxu0 0.0
  %3906 = vmatpush1.msra.mxu0 0.0
  %3907 = vmatprep.subr.mxu0 0.0
  %3908 = vmatpush1.msra.mxu0 0.0
  %3909 = vmatprep.subr.mxu0 0.0
  %3910 = vmatpush1.msra.mxu0 0.0
  %3911 = vmatprep.subr.mxu0 0.0
  %3912 = vmatpush1.msra.mxu0 0.0
  %3913 = vmatprep.subr.mxu0 0.0
  %3914 = vmatpush1.msra.mxu0 0.0
  %3915 = vmatprep.subr.mxu0 0.0
  %3916 = vmatpush1.msra.mxu0 0.0
  %3917 = vmatprep.subr.mxu0 0.0
  %3918 = vmatpush1.msra.mxu0 0.0
  %3919 = vmatprep.subr.mxu0 0.0
  %3920 = vmatpush1.msra.mxu0 0.0
  %3921 = vmatprep.subr.mxu0 0.0
  %3922 = vmatpush1.msra.mxu0 0.0
  %3923 = vmatprep.mubr.f32.mxu0 %v3777
  %3924 = vmatmul.mubr.f32.gmra.mrb[0].mxu0 %v3688
  %v3925 = vpop.f32.mrb[0].mxu0
  %v3926 = vadd.f32 %v3769, %v3925
  %v3927 = vpop.f32.mrb[0].mxu0
  %v3928 = vadd.f32 %v3769, %v3927
  %3929 = vmatprep.mubr.f32.mxu0 %v3780
  %3930 = vmatmul.mubr.f32.gmra.mrb[0].mxu0 %v3690
  %v3931 = vpop.f32.mrb[0].mxu0
  %v3932 = vadd.f32 %v3774, %v3931
  %v3933 = vpop.f32.mrb[0].mxu0
  %v3934 = vadd.f32 %v3774, %v3933
  %3935 = vdwg.mxu0
  %v3936 = vmax.f32 %v3849, 0.0
  %v3937 = vmax.f32 %v3851, 0.0
  %v3938 = vmax.f32 %v3926, 0.0
  %v3939 = vmax.f32 %v3928, 0.0
  %v3940 = vmax.f32 %v3855, 0.0
  %v3941 = vmax.f32 %v3857, 0.0
  %v3942 = vmax.f32 %v3932, 0.0
  %v3943 = vmax.f32 %v3934, 0.0
  %3944 = vst [vmem:[%s11 + $0xc0] sm:$0xff] %v3936
  %3945 = vst [vmem:[%s11 + $0xc8] sm:$0xff] %v3937
  %3946 = vst [vmem:[%s11 + $0xd0] sm:$0xff] %v3938
  %3947 = vst [vmem:[%s11 + $0xd8] sm:$0xff] %v3939
  %3948 = vst [vmem:[%s11 + $0xe0] sm:$0xff] %v3940
  %3949 = vst [vmem:[%s11 + $0xe8] sm:$0xff] %v3941
  %3950 = vst [vmem:[%s11 + $0xf0] sm:$0xff] %v3942
  %3951 = vst [vmem:[%s11 + $0xf8] sm:$0xff] %v3943
  // Predicated region
  $region46: #{ssh_context_forward.1} parent=0 // pred_check
    _
  $region47: #{ssh_context_forward.1} parent=0 // pred_check_branch
    %3953 = sbr.rel (0) target = $region49
  $region48: #{ssh_context_forward.1} parent=0 // pred_region
    _
  $region49: #{ssh_context_forward.1} parent=0 // pred_fallthru
    _
  // Predicated region
  $region50: #{ssh_context_forward.1} parent=0 // pred_check
    _
  $region51: #{ssh_context_forward.1} parent=0 // pred_check_branch
    %3955 = sbr.rel (0) target = $region53
  $region52: #{ssh_context_forward.1} parent=0 // pred_region
    _
  $region53: #{ssh_context_forward.1} parent=0 // pred_fallthru
    _

</llo_original>
